<compile_context>
chip_gen: v5e
topology: v5e:2x2
jax: 0.10.0
libtpu: 0.0.40
codegen_flags: <defaults>
</compile_context>

<pallas_src>
import functools

import jax
import jax.numpy as jnp
from jax.experimental import pallas as pl
from jax.experimental.pallas import tpu as pltpu

NUM_CLASSES = 5

# ----------------------------- Pallas GEMM kernels ------------------------------


def _gemm_kernel(a_ref, w_ref, b_ref, o_ref, acc_ref, *, apply_relu):
    @pl.when(pl.program_id(2) == 0)
    def _():
        acc_ref[...] = jnp.zeros_like(acc_ref)

    acc_ref[...] += jnp.dot(a_ref[...], w_ref[...], preferred_element_type=jnp.float32)

    @pl.when(pl.program_id(2) == pl.num_programs(2) - 1)
    def _():
        out = acc_ref[...] + b_ref[...]
        if apply_relu:
            out = jnp.maximum(out, 0.0)
        o_ref[...] = out.astype(o_ref.dtype)


def _gemm_skip_kernel(a_ref, w_ref, b_ref, s_ref, o_ref, acc_ref, *, apply_relu):
    @pl.when(pl.program_id(2) == 0)
    def _():
        acc_ref[...] = jnp.zeros_like(acc_ref)

    acc_ref[...] += jnp.dot(a_ref[...], w_ref[...], preferred_element_type=jnp.float32)

    @pl.when(pl.program_id(2) == pl.num_programs(2) - 1)
    def _():
        out = acc_ref[...] + b_ref[...] + s_ref[...]
        if apply_relu:
            out = jnp.maximum(out, 0.0)
        o_ref[...] = out.astype(o_ref.dtype)


# ----------------------------- GEMM wrapper ------------------------------


def _round_up(x, m):
    return ((x + m - 1) // m) * m


def _pad2(x, m0, m1):
    p0 = (-x.shape[0]) % m0
    p1 = (-x.shape[1]) % m1
    if p0 or p1:
        x = jnp.pad(x, ((0, p0), (0, p1)))
    return x


def _pick_tile(dim, max_tile, quantum=128):
    """Largest tile <= max_tile (multiple of quantum) that divides dim (dim % quantum == 0)."""
    if dim <= max_tile:
        return dim
    for t in range(max_tile, quantum - 1, -quantum):
        if dim % t == 0:
            return t
    return quantum


def gemm_bias_act(a, w_packed, b_packed, n_out, skip=None, apply_relu=False):
    """a: (M,K) f32/bf16, w_packed: (Kp,Np) bf16 pre-padded, b_packed: (1,Np) f32.

    Returns (M, n_out) f32 of relu(a @ w + b [+ skip]).
    """
    M, K = a.shape
    Kp, Np = w_packed.shape

    Mp0 = _round_up(M, 16)                    # 16-row quantum: bf16 sublane friendly
    tm = Mp0 if Mp0 <= 512 else 512
    Mp = _round_up(M, tm)
    tk = _pick_tile(Kp, 512)
    tn = _pick_tile(Np, 256)

    ap = jnp.pad(a.astype(jnp.bfloat16), ((0, Mp - M), (0, Kp - K)))

    in_specs = [
        pl.BlockSpec((tm, tk), lambda i, j, k: (i, k)),
        pl.BlockSpec((tk, tn), lambda i, j, k: (k, j)),
        pl.BlockSpec((1, tn), lambda i, j, k: (0, j)),
    ]
    args = [ap, w_packed, b_packed]
    if skip is not None:
        sp = jnp.pad(skip.astype(jnp.float32), ((0, Mp - M), (0, Np - n_out)))
        in_specs.append(pl.BlockSpec((tm, tn), lambda i, j, k: (i, j)))
        args.append(sp)
        kernel = functools.partial(_gemm_skip_kernel, apply_relu=apply_relu)
    else:
        kernel = functools.partial(_gemm_kernel, apply_relu=apply_relu)

    bytes_accessed = M * K * 2 + Kp * Np * 2 + M * n_out * 4
    if skip is not None:
        bytes_accessed += M * n_out * 4

    out = pl.pallas_call(
        kernel,
        grid=(Mp // tm, Np // tn, Kp // tk),
        in_specs=in_specs,
        out_specs=pl.BlockSpec((tm, tn), lambda i, j, k: (i, j)),
        out_shape=jax.ShapeDtypeStruct((Mp, Np), jnp.float32),
        scratch_shapes=[pltpu.VMEM((tm, tn), jnp.float32)],
        compiler_params=pltpu.CompilerParams(
            dimension_semantics=("parallel", "parallel", "arbitrary"),
            vmem_limit_bytes=32 * 1024 * 1024,
        ),
        cost_estimate=pl.CostEstimate(
            flops=2 * M * K * n_out, transcendentals=0, bytes_accessed=int(bytes_accessed)
        ),
    )(*args)
    return out[:M, :n_out]


# ----------------------------- conv lowering (JAX glue + Pallas GEMM) ------------------------------


def _im2col(x, kh, kw, stride, pad):
    """x: (B,H,W,C) -> (B*Ho*Wo, kh*kw*C) patches, ordering (i, j, c)."""
    B, H, W, C = x.shape
    xp = jnp.pad(x, ((0, 0), (pad, pad), (pad, pad), (0, 0)))
    Ho = (H + 2 * pad - kh) // stride + 1
    Wo = (W + 2 * pad - kw) // stride + 1
    patches = []
    for i in range(kh):
        for j in range(kw):
            patches.append(xp[:, i:i + Ho * stride:stride, j:j + Wo * stride:stride, :])
    cols = jnp.concatenate(patches, axis=-1)
    return cols.reshape(B * Ho * Wo, kh * kw * C), Ho, Wo


def conv2d_packed(x, pk, stride, pad, apply_relu, skip=None):
    """PyTorch-semantics Conv2d (NHWC activations) with packed weights; GEMM in Pallas."""
    B = x.shape[0]
    cols, Ho, Wo = _im2col(x, pk["kh"], pk["kw"], stride, pad)
    skip2 = None if skip is None else skip.reshape(B * Ho * Wo, pk["n"])
    out = gemm_bias_act(cols, pk["w"], pk["b"], pk["n"], skip=skip2, apply_relu=apply_relu)
    return out.reshape(B, Ho, Wo, pk["n"])


def conv_transpose2d_packed(x, pk, out_h, out_w, apply_relu, skip=None):
    """ConvTranspose2d (k=3, s=2, p=1, output_padding=1) via 4 sub-pixel phase GEMMs."""
    B, H, W, Cin = x.shape
    Cout = pk["n"]
    xp = jnp.pad(x, ((0, 0), (0, 1), (0, 1), (0, 0)))
    x00 = x                               # x[m, n]
    xr = xp[:, :H, 1:W + 1, :]            # x[m, n+1]
    xd = xp[:, 1:H + 1, :W, :]            # x[m+1, n]
    xdr = xp[:, 1:H + 1, 1:W + 1, :]      # x[m+1, n+1]

    # phase (row parity, col parity): (0,0), (0,1), (1,0), (1,1)
    phase_inputs = [(x00,), (xr, x00), (xd, x00), (xdr, xd, xr, x00)]

    if skip is not None:
        sp = jnp.zeros((B, 2 * H, 2 * W, Cout), jnp.float32)
        sp = sp.at[:, :skip.shape[1], :skip.shape[2], :].set(skip)
        skip_phases = [sp[:, r::2, s::2, :].reshape(B * H * W, Cout)
                       for (r, s) in ((0, 0), (0, 1), (1, 0), (1, 1))]
    else:
        skip_phases = [None] * 4

    M = B * H * W
    outs = []
    for ph, inputs, sk in zip(pk["phases"], phase_inputs, skip_phases):
        a = inputs[0] if len(inputs) == 1 else jnp.concatenate(inputs, axis=-1)
        a = a.reshape(M, ph["k"])
        o = gemm_bias_act(a, ph["w"], pk["b"], Cout, skip=sk, apply_relu=apply_relu)
        outs.append(o.reshape(B, H, W, Cout))

    ee, eo, oe, oo = outs
    row_e = jnp.stack([ee, eo], axis=3).reshape(B, H, 2 * W, Cout)
    row_o = jnp.stack([oe, oo], axis=3).reshape(B, H, 2 * W, Cout)
    out = jnp.stack([row_e, row_o], axis=2).reshape(B, 2 * H, 2 * W, Cout)
    return out[:, :out_h, :out_w, :]


# ----------------------------- parameters & packing ------------------------------


def init_params(key):
    def conv_w(k, cout, cin, ksz):
        fan_in = cin * ksz * ksz
        return jax.random.normal(k, (cout, cin, ksz, ksz), jnp.float32) * jnp.sqrt(2.0 / fan_in)

    def convT_w(k, cin, cout, ksz):
        fan_in = cin * ksz * ksz
        return jax.random.normal(k, (cin, cout, ksz, ksz), jnp.float32) * jnp.sqrt(2.0 / fan_in)

    ks = jax.random.split(key, 8)
    return {
        "conv1_w": conv_w(ks[0], 16, 3, 3), "conv1_b": jnp.zeros((16,), jnp.float32),
        "conv2_w": conv_w(ks[1], 32, 16, 3), "conv2_b": jnp.zeros((32,), jnp.float32),
        "res_a_w": conv_w(ks[2], 32, 32, 3), "res_a_b": jnp.zeros((32,), jnp.float32),
        "res_b_w": conv_w(ks[3], 32, 32, 3), "res_b_b": jnp.zeros((32,), jnp.float32),
        "up1_w": convT_w(ks[4], 32, 16, 3), "up1_b": jnp.zeros((16,), jnp.float32),
        "up2_w": convT_w(ks[5], 16, 16, 3), "up2_b": jnp.zeros((16,), jnp.float32),
        "seg_w": conv_w(ks[6], NUM_CLASSES, 16, 1), "seg_b": jnp.zeros((NUM_CLASSES,), jnp.float32),
        "depth_w": conv_w(ks[7], 1, 16, 1), "depth_b": jnp.zeros((1,), jnp.float32),
        "mean": jnp.array([0.485, 0.456, 0.406], jnp.float32),
        "std": jnp.array([0.229, 0.224, 0.225], jnp.float32),
    }


def _pack_conv(w_oihw, b):
    Cout, Cin, kh, kw = w_oihw.shape
    wmat = jnp.transpose(w_oihw, (2, 3, 1, 0)).reshape(kh * kw * Cin, Cout)
    return {
        "w": _pad2(wmat, 128, 128).astype(jnp.bfloat16),
        "b": _pad2(b.reshape(1, -1).astype(jnp.float32), 1, 128),
        "k": kh * kw * Cin, "n": Cout, "kh": kh, "kw": kw,
    }


def _pack_upconv(w_iohw, b):
    Cin, Cout, _, _ = w_iohw.shape
    W = w_iohw

    def mk(ij_list):
        mat = jnp.concatenate([W[:, :, i, j] for (i, j) in ij_list], axis=0)  # (m*Cin, Cout)
        return {"w": _pad2(mat, 128, 128).astype(jnp.bfloat16), "k": mat.shape[0]}

    phases = [
        mk([(1, 1)]),                              # out[2m,   2n  ]
        mk([(1, 0), (1, 2)]),                      # out[2m,   2n+1] <- x[m,n+1], x[m,n]
        mk([(0, 1), (2, 1)]),                      # out[2m+1, 2n  ] <- x[m+1,n], x[m,n]
        mk([(0, 0), (0, 2), (2, 0), (2, 2)]),      # out[2m+1, 2n+1]
    ]
    return {"phases": phases,
            "b": _pad2(b.reshape(1, -1).astype(jnp.float32), 1, 128),
            "n": Cout}


def pack_params(p):
    mean, std = p["mean"], p["std"]
    # fold input normalization (x - mean) / std into conv1
    w1 = p["conv1_w"] / std[None, :, None, None]
    b1 = p["conv1_b"] - jnp.sum(p["conv1_w"] * (mean / std)[None, :, None, None], axis=(1, 2, 3))
    heads_w = jnp.concatenate([p["seg_w"], p["depth_w"]], axis=0)      # (NUM_CLASSES+1, 16, 1, 1)
    heads_b = jnp.concatenate([p["seg_b"], p["depth_b"]], axis=0)
    return {
        "conv1": _pack_conv(w1, b1),
        "conv2": _pack_conv(p["conv2_w"], p["conv2_b"]),
        "res_a": _pack_conv(p["res_a_w"], p["res_a_b"]),
        "res_b": _pack_conv(p["res_b_w"], p["res_b_b"]),
        "up1": _pack_upconv(p["up1_w"], p["up1_b"]),
        "up2": _pack_upconv(p["up2_w"], p["up2_b"]),
        "heads": _pack_conv(heads_w, heads_b),
    }


# ----------------------------- forward ------------------------------


def fcn_mt_forward(packed, x_nchw):
    B, _, H, W = x_nchw.shape
    x = jnp.transpose(x_nchw, (0, 2, 3, 1)).astype(jnp.float32)   # NCHW -> NHWC
    # (input normalization is folded into conv1's packed weights)

    # encoder
    d1 = conv2d_packed(x, packed["conv1"], stride=2, pad=1, apply_relu=True)    # (B,ceil(H/2),ceil(W/2),16)
    d2 = conv2d_packed(d1, packed["conv2"], stride=2, pad=1, apply_relu=True)   # (B,ceil(H/4),ceil(W/4),32)

    # residual block (second conv fuses the residual add + ReLU into the GEMM epilogue)
    r = conv2d_packed(d2, packed["res_a"], stride=1, pad=1, apply_relu=True)
    d2 = conv2d_packed(r, packed["res_b"], stride=1, pad=1, apply_relu=True, skip=d2)

    # decoder: sub-pixel up-convolutions; up1 fuses the skip add (+ReLU) with d1
    u1 = conv_transpose2d_packed(d2, packed["up1"], d1.shape[1], d1.shape[2],
                                 apply_relu=True, skip=d1)
    u2 = conv_transpose2d_packed(u1, packed["up2"], H, W, apply_relu=True)      # z = z[:, :, :H, :W]

    # fused 1x1 heads (seg + depth in one GEMM), split afterwards
    heads = conv2d_packed(u2, packed["heads"], stride=1, pad=0, apply_relu=False)
    seg = heads[..., :NUM_CLASSES]
    depth = heads[..., NUM_CLASSES:NUM_CLASSES + 1]

    return jnp.transpose(seg, (0, 3, 1, 2)), jnp.transpose(depth, (0, 3, 1, 2))  # NHWC -> NCHW


# ----------------------------- main ------------------------------

if __name__ == "__main__":
    key = jax.random.PRNGKey(0)
    k_param, k_x = jax.random.split(key)
    params = init_params(k_param)
    packed = pack_params(params)

    B, C_in, H, W = 2, 3, 16, 16
    x = jax.random.uniform(k_x, (B, C_in, H, W), jnp.float32)

    fwd = jax.jit(functools.partial(fcn_mt_forward, packed))
    seg, depth = fwd(x)
    seg = jax.block_until_ready(seg)
    depth = jax.block_until_ready(depth)

    assert seg.shape == (B, NUM_CLASSES, H, W), seg.shape
    assert depth.shape == (B, 1, H, W), depth.shape
    assert seg.dtype == jnp.float32 and depth.dtype == jnp.float32
    assert bool(jnp.all(jnp.isfinite(seg))) and bool(jnp.all(jnp.isfinite(depth)))
    print("KERNEL_OK")
</pallas_src>

<mosaic_0001>
module attributes {stable_mosaic.version = 11 : i64} {
  func.func @_gemm_kernel(%arg0: i32, %arg1: i32, %arg2: i32, %arg3: memref<128x128xbf16, #tpu.memory_space<vmem>>, %arg4: memref<128x128xbf16, #tpu.memory_space<vmem>>, %arg5: memref<1x128xf32, #tpu.memory_space<vmem>>, %arg6: memref<128x128xf32, #tpu.memory_space<vmem>>, %arg7: memref<128x128xf32, #tpu.memory_space<vmem>>) attributes {dimension_semantics = [#tpu.dimension_semantics<parallel>, #tpu.dimension_semantics<parallel>, #tpu.dimension_semantics<arbitrary>], iteration_bounds = array<i64: 1, 1, 1>, scalar_prefetch = 0 : i64, scratch_operands = 1 : i64, tpu.core_type = #tpu.core_type<tc>, window_params = [{transform_indices = @transform_0, window_bounds = array<i64: 128, 128>}, {transform_indices = @transform_1, window_bounds = array<i64: 128, 128>}, {transform_indices = @transform_2, window_bounds = array<i64: 1, 128>}, {transform_indices = @transform_3, window_bounds = array<i64: 128, 128>}]} {
    %c0_i32 = arith.constant 0 : i32
    %0 = arith.cmpi eq, %arg2, %c0_i32 : i32
    %1 = arith.extui %0 : i1 to i32
    %c0_i32_0 = arith.constant 0 : i32
    %2 = arith.cmpi ne, %1, %c0_i32_0 : i32
    scf.if %2 {
      %cst_10 = arith.constant 0.000000e+00 : f32
      %12 = vector.broadcast %cst_10 : f32 to vector<128x128xf32>
      %c0_11 = arith.constant 0 : index
      %c0_12 = arith.constant 0 : index
      %13 = vector.load %arg7[%c0_11, %c0_12] : memref<128x128xf32, #tpu.memory_space<vmem>>, vector<128x128xf32>
      tpu.vector_store %arg7[%c0_11, %c0_12], %12 {strides = array<i32>} : memref<128x128xf32, #tpu.memory_space<vmem>>, vector<128x128xf32>,
    } else {
    }
    %c0 = arith.constant 0 : index
    %c0_1 = arith.constant 0 : index
    %3 = vector.load %arg7[%c0, %c0_1] : memref<128x128xf32, #tpu.memory_space<vmem>>, vector<128x128xf32>
    %c0_2 = arith.constant 0 : index
    %c0_3 = arith.constant 0 : index
    %4 = vector.load %arg3[%c0_2, %c0_3] : memref<128x128xbf16, #tpu.memory_space<vmem>>, vector<128x128xbf16>
    %c0_4 = arith.constant 0 : index
    %c0_5 = arith.constant 0 : index
    %5 = vector.load %arg4[%c0_4, %c0_5] : memref<128x128xbf16, #tpu.memory_space<vmem>>, vector<128x128xbf16>
    %cst = arith.constant dense<0.000000e+00> : vector<128x128xf32>
    %6 = tpu.matmul %4, %5, %cst {dimension_numbers = #tpu.dot_dimension_numbers<[1], [0], [0], [1], [0, 0, 1, 1], [], []>} : vector<128x128xbf16>, vector<128x128xbf16>, vector<128x128xf32> -> vector<128x128xf32>
    %7 = arith.addf %3, %6 : vector<128x128xf32>
    %c0_6 = arith.constant 0 : index
    %c0_7 = arith.constant 0 : index
    %8 = vector.load %arg7[%c0_6, %c0_7] : memref<128x128xf32, #tpu.memory_space<vmem>>, vector<128x128xf32>
    tpu.vector_store %arg7[%c0_6, %c0_7], %7 {strides = array<i32>} : memref<128x128xf32, #tpu.memory_space<vmem>>, vector<128x128xf32>,
    %c0_i32_8 = arith.constant 0 : i32
    %9 = arith.cmpi eq, %arg2, %c0_i32_8 : i32
    %10 = arith.extui %9 : i1 to i32
    %c0_i32_9 = arith.constant 0 : i32
    %11 = arith.cmpi ne, %10, %c0_i32_9 : i32
    scf.if %11 {
      %c0_10 = arith.constant 0 : index
      %c0_11 = arith.constant 0 : index
      %12 = vector.load %arg7[%c0_10, %c0_11] : memref<128x128xf32, #tpu.memory_space<vmem>>, vector<128x128xf32>
      %c0_12 = arith.constant 0 : index
      %c0_13 = arith.constant 0 : index
      %13 = vector.load %arg5[%c0_12, %c0_13] : memref<1x128xf32, #tpu.memory_space<vmem>>, vector<1x128xf32>
      %14 = vector.broadcast %13 : vector<1x128xf32> to vector<128x128xf32>
      %15 = arith.addf %12, %14 : vector<128x128xf32>
      %cst_14 = arith.constant 0.000000e+00 : f32
      %16 = vector.broadcast %cst_14 : f32 to vector<128x128xf32>
      %17 = arith.maximumf %15, %16 : vector<128x128xf32>
      %c0_15 = arith.constant 0 : index
      %c0_16 = arith.constant 0 : index
      %18 = vector.load %arg6[%c0_15, %c0_16] : memref<128x128xf32, #tpu.memory_space<vmem>>, vector<128x128xf32>
      tpu.vector_store %arg6[%c0_15, %c0_16], %17 {strides = array<i32>} : memref<128x128xf32, #tpu.memory_space<vmem>>, vector<128x128xf32>,
    } else {
    }
    return
  }
  func.func @transform_0(%arg0: i32, %arg1: i32, %arg2: i32) -> (i32, i32) {
    %c0_i32 = arith.constant 0 : i32
    return %arg0, %arg2 : i32, i32
  }
  func.func @transform_1(%arg0: i32, %arg1: i32, %arg2: i32) -> (i32, i32) {
    %c0_i32 = arith.constant 0 : i32
    return %arg2, %arg1 : i32, i32
  }
  func.func @transform_2(%arg0: i32, %arg1: i32, %arg2: i32) -> (i32, i32) {
    %c0_i32 = arith.constant 0 : i32
    %c0_i32_0 = arith.constant 0 : i32
    return %c0_i32, %arg1 : i32, i32
  }
  func.func @transform_3(%arg0: i32, %arg1: i32, %arg2: i32) -> (i32, i32) {
    %c0_i32 = arith.constant 0 : i32
    return %arg0, %arg1 : i32, i32
  }
}

module attributes {stable_mosaic.version = 11 : i64} {
  func.func @_gemm_kernel(%arg0: i32, %arg1: i32, %arg2: i32, %arg3: memref<32x256xbf16, #tpu.memory_space<vmem>>, %arg4: memref<256x128xbf16, #tpu.memory_space<vmem>>, %arg5: memref<1x128xf32, #tpu.memory_space<vmem>>, %arg6: memref<32x128xf32, #tpu.memory_space<vmem>>, %arg7: memref<32x128xf32, #tpu.memory_space<vmem>>) attributes {dimension_semantics = [#tpu.dimension_semantics<parallel>, #tpu.dimension_semantics<parallel>, #tpu.dimension_semantics<arbitrary>], iteration_bounds = array<i64: 1, 1, 1>, scalar_prefetch = 0 : i64, scratch_operands = 1 : i64, tpu.core_type = #tpu.core_type<tc>, window_params = [{transform_indices = @transform_0, window_bounds = array<i64: 32, 256>}, {transform_indices = @transform_1, window_bounds = array<i64: 256, 128>}, {transform_indices = @transform_2, window_bounds = array<i64: 1, 128>}, {transform_indices = @transform_3, window_bounds = array<i64: 32, 128>}]} {
    %c0_i32 = arith.constant 0 : i32
    %0 = arith.cmpi eq, %arg2, %c0_i32 : i32
    %1 = arith.extui %0 : i1 to i32
    %c0_i32_0 = arith.constant 0 : i32
    %2 = arith.cmpi ne, %1, %c0_i32_0 : i32
    scf.if %2 {
      %cst_10 = arith.constant 0.000000e+00 : f32
      %12 = vector.broadcast %cst_10 : f32 to vector<32x128xf32>
      %c0_11 = arith.constant 0 : index
      %c0_12 = arith.constant 0 : index
      %13 = vector.load %arg7[%c0_11, %c0_12] : memref<32x128xf32, #tpu.memory_space<vmem>>, vector<32x128xf32>
      tpu.vector_store %arg7[%c0_11, %c0_12], %12 {strides = array<i32>} : memref<32x128xf32, #tpu.memory_space<vmem>>, vector<32x128xf32>,
    } else {
    }
    %c0 = arith.constant 0 : index
    %c0_1 = arith.constant 0 : index
    %3 = vector.load %arg7[%c0, %c0_1] : memref<32x128xf32, #tpu.memory_space<vmem>>, vector<32x128xf32>
    %c0_2 = arith.constant 0 : index
    %c0_3 = arith.constant 0 : index
    %4 = vector.load %arg3[%c0_2, %c0_3] : memref<32x256xbf16, #tpu.memory_space<vmem>>, vector<32x256xbf16>
    %c0_4 = arith.constant 0 : index
    %c0_5 = arith.constant 0 : index
    %5 = vector.load %arg4[%c0_4, %c0_5] : memref<256x128xbf16, #tpu.memory_space<vmem>>, vector<256x128xbf16>
    %cst = arith.constant dense<0.000000e+00> : vector<32x128xf32>
    %6 = tpu.matmul %4, %5, %cst {dimension_numbers = #tpu.dot_dimension_numbers<[1], [0], [0], [1], [0, 0, 1, 1], [], []>} : vector<32x256xbf16>, vector<256x128xbf16>, vector<32x128xf32> -> vector<32x128xf32>
    %7 = arith.addf %3, %6 : vector<32x128xf32>
    %c0_6 = arith.constant 0 : index
    %c0_7 = arith.constant 0 : index
    %8 = vector.load %arg7[%c0_6, %c0_7] : memref<32x128xf32, #tpu.memory_space<vmem>>, vector<32x128xf32>
    tpu.vector_store %arg7[%c0_6, %c0_7], %7 {strides = array<i32>} : memref<32x128xf32, #tpu.memory_space<vmem>>, vector<32x128xf32>,
    %c0_i32_8 = arith.constant 0 : i32
    %9 = arith.cmpi eq, %arg2, %c0_i32_8 : i32
    %10 = arith.extui %9 : i1 to i32
    %c0_i32_9 = arith.constant 0 : i32
    %11 = arith.cmpi ne, %10, %c0_i32_9 : i32
    scf.if %11 {
      %c0_10 = arith.constant 0 : index
      %c0_11 = arith.constant 0 : index
      %12 = vector.load %arg7[%c0_10, %c0_11] : memref<32x128xf32, #tpu.memory_space<vmem>>, vector<32x128xf32>
      %c0_12 = arith.constant 0 : index
      %c0_13 = arith.constant 0 : index
      %13 = vector.load %arg5[%c0_12, %c0_13] : memref<1x128xf32, #tpu.memory_space<vmem>>, vector<1x128xf32>
      %14 = vector.broadcast %13 : vector<1x128xf32> to vector<32x128xf32>
      %15 = arith.addf %12, %14 : vector<32x128xf32>
      %cst_14 = arith.constant 0.000000e+00 : f32
      %16 = vector.broadcast %cst_14 : f32 to vector<32x128xf32>
      %17 = arith.maximumf %15, %16 : vector<32x128xf32>
      %c0_15 = arith.constant 0 : index
      %c0_16 = arith.constant 0 : index
      %18 = vector.load %arg6[%c0_15, %c0_16] : memref<32x128xf32, #tpu.memory_space<vmem>>, vector<32x128xf32>
      tpu.vector_store %arg6[%c0_15, %c0_16], %17 {strides = array<i32>} : memref<32x128xf32, #tpu.memory_space<vmem>>, vector<32x128xf32>,
    } else {
    }
    return
  }
  func.func @transform_0(%arg0: i32, %arg1: i32, %arg2: i32) -> (i32, i32) {
    %c0_i32 = arith.constant 0 : i32
    return %arg0, %arg2 : i32, i32
  }
  func.func @transform_1(%arg0: i32, %arg1: i32, %arg2: i32) -> (i32, i32) {
    %c0_i32 = arith.constant 0 : i32
    return %arg2, %arg1 : i32, i32
  }
  func.func @transform_2(%arg0: i32, %arg1: i32, %arg2: i32) -> (i32, i32) {
    %c0_i32 = arith.constant 0 : i32
    %c0_i32_0 = arith.constant 0 : i32
    return %c0_i32, %arg1 : i32, i32
  }
  func.func @transform_3(%arg0: i32, %arg1: i32, %arg2: i32) -> (i32, i32) {
    %c0_i32 = arith.constant 0 : i32
    return %arg0, %arg1 : i32, i32
  }
}

module attributes {stable_mosaic.version = 11 : i64} {
  func.func @_gemm_kernel(%arg0: i32, %arg1: i32, %arg2: i32, %arg3: memref<32x384xbf16, #tpu.memory_space<vmem>>, %arg4: memref<384x128xbf16, #tpu.memory_space<vmem>>, %arg5: memref<1x128xf32, #tpu.memory_space<vmem>>, %arg6: memref<32x128xf32, #tpu.memory_space<vmem>>, %arg7: memref<32x128xf32, #tpu.memory_space<vmem>>) attributes {dimension_semantics = [#tpu.dimension_semantics<parallel>, #tpu.dimension_semantics<parallel>, #tpu.dimension_semantics<arbitrary>], iteration_bounds = array<i64: 1, 1, 1>, scalar_prefetch = 0 : i64, scratch_operands = 1 : i64, tpu.core_type = #tpu.core_type<tc>, window_params = [{transform_indices = @transform_0, window_bounds = array<i64: 32, 384>}, {transform_indices = @transform_1, window_bounds = array<i64: 384, 128>}, {transform_indices = @transform_2, window_bounds = array<i64: 1, 128>}, {transform_indices = @transform_3, window_bounds = array<i64: 32, 128>}]} {
    %c0_i32 = arith.constant 0 : i32
    %0 = arith.cmpi eq, %arg2, %c0_i32 : i32
    %1 = arith.extui %0 : i1 to i32
    %c0_i32_0 = arith.constant 0 : i32
    %2 = arith.cmpi ne, %1, %c0_i32_0 : i32
    scf.if %2 {
      %cst_10 = arith.constant 0.000000e+00 : f32
      %12 = vector.broadcast %cst_10 : f32 to vector<32x128xf32>
      %c0_11 = arith.constant 0 : index
      %c0_12 = arith.constant 0 : index
      %13 = vector.load %arg7[%c0_11, %c0_12] : memref<32x128xf32, #tpu.memory_space<vmem>>, vector<32x128xf32>
      tpu.vector_store %arg7[%c0_11, %c0_12], %12 {strides = array<i32>} : memref<32x128xf32, #tpu.memory_space<vmem>>, vector<32x128xf32>,
    } else {
    }
    %c0 = arith.constant 0 : index
    %c0_1 = arith.constant 0 : index
    %3 = vector.load %arg7[%c0, %c0_1] : memref<32x128xf32, #tpu.memory_space<vmem>>, vector<32x128xf32>
    %c0_2 = arith.constant 0 : index
    %c0_3 = arith.constant 0 : index
    %4 = vector.load %arg3[%c0_2, %c0_3] : memref<32x384xbf16, #tpu.memory_space<vmem>>, vector<32x384xbf16>
    %c0_4 = arith.constant 0 : index
    %c0_5 = arith.constant 0 : index
    %5 = vector.load %arg4[%c0_4, %c0_5] : memref<384x128xbf16, #tpu.memory_space<vmem>>, vector<384x128xbf16>
    %cst = arith.constant dense<0.000000e+00> : vector<32x128xf32>
    %6 = tpu.matmul %4, %5, %cst {dimension_numbers = #tpu.dot_dimension_numbers<[1], [0], [0], [1], [0, 0, 1, 1], [], []>} : vector<32x384xbf16>, vector<384x128xbf16>, vector<32x128xf32> -> vector<32x128xf32>
    %7 = arith.addf %3, %6 : vector<32x128xf32>
    %c0_6 = arith.constant 0 : index
    %c0_7 = arith.constant 0 : index
    %8 = vector.load %arg7[%c0_6, %c0_7] : memref<32x128xf32, #tpu.memory_space<vmem>>, vector<32x128xf32>
    tpu.vector_store %arg7[%c0_6, %c0_7], %7 {strides = array<i32>} : memref<32x128xf32, #tpu.memory_space<vmem>>, vector<32x128xf32>,
    %c0_i32_8 = arith.constant 0 : i32
    %9 = arith.cmpi eq, %arg2, %c0_i32_8 : i32
    %10 = arith.extui %9 : i1 to i32
    %c0_i32_9 = arith.constant 0 : i32
    %11 = arith.cmpi ne, %10, %c0_i32_9 : i32
    scf.if %11 {
      %c0_10 = arith.constant 0 : index
      %c0_11 = arith.constant 0 : index
      %12 = vector.load %arg7[%c0_10, %c0_11] : memref<32x128xf32, #tpu.memory_space<vmem>>, vector<32x128xf32>
      %c0_12 = arith.constant 0 : index
      %c0_13 = arith.constant 0 : index
      %13 = vector.load %arg5[%c0_12, %c0_13] : memref<1x128xf32, #tpu.memory_space<vmem>>, vector<1x128xf32>
      %14 = vector.broadcast %13 : vector<1x128xf32> to vector<32x128xf32>
      %15 = arith.addf %12, %14 : vector<32x128xf32>
      %cst_14 = arith.constant 0.000000e+00 : f32
      %16 = vector.broadcast %cst_14 : f32 to vector<32x128xf32>
      %17 = arith.maximumf %15, %16 : vector<32x128xf32>
      %c0_15 = arith.constant 0 : index
      %c0_16 = arith.constant 0 : index
      %18 = vector.load %arg6[%c0_15, %c0_16] : memref<32x128xf32, #tpu.memory_space<vmem>>, vector<32x128xf32>
      tpu.vector_store %arg6[%c0_15, %c0_16], %17 {strides = array<i32>} : memref<32x128xf32, #tpu.memory_space<vmem>>, vector<32x128xf32>,
    } else {
    }
    return
  }
  func.func @transform_0(%arg0: i32, %arg1: i32, %arg2: i32) -> (i32, i32) {
    %c0_i32 = arith.constant 0 : i32
    return %arg0, %arg2 : i32, i32
  }
  func.func @transform_1(%arg0: i32, %arg1: i32, %arg2: i32) -> (i32, i32) {
    %c0_i32 = arith.constant 0 : i32
    return %arg2, %arg1 : i32, i32
  }
  func.func @transform_2(%arg0: i32, %arg1: i32, %arg2: i32) -> (i32, i32) {
    %c0_i32 = arith.constant 0 : i32
    %c0_i32_0 = arith.constant 0 : i32
    return %c0_i32, %arg1 : i32, i32
  }
  func.func @transform_3(%arg0: i32, %arg1: i32, %arg2: i32) -> (i32, i32) {
    %c0_i32 = arith.constant 0 : i32
    return %arg0, %arg1 : i32, i32
  }
}

module attributes {stable_mosaic.version = 11 : i64} {
  func.func @_gemm_skip_kernel(%arg0: i32, %arg1: i32, %arg2: i32, %arg3: memref<32x384xbf16, #tpu.memory_space<vmem>>, %arg4: memref<384x128xbf16, #tpu.memory_space<vmem>>, %arg5: memref<1x128xf32, #tpu.memory_space<vmem>>, %arg6: memref<32x128xf32, #tpu.memory_space<vmem>>, %arg7: memref<32x128xf32, #tpu.memory_space<vmem>>, %arg8: memref<32x128xf32, #tpu.memory_space<vmem>>) attributes {dimension_semantics = [#tpu.dimension_semantics<parallel>, #tpu.dimension_semantics<parallel>, #tpu.dimension_semantics<arbitrary>], iteration_bounds = array<i64: 1, 1, 1>, scalar_prefetch = 0 : i64, scratch_operands = 1 : i64, tpu.core_type = #tpu.core_type<tc>, window_params = [{transform_indices = @transform_0, window_bounds = array<i64: 32, 384>}, {transform_indices = @transform_1, window_bounds = array<i64: 384, 128>}, {transform_indices = @transform_2, window_bounds = array<i64: 1, 128>}, {transform_indices = @transform_3, window_bounds = array<i64: 32, 128>}, {transform_indices = @transform_4, window_bounds = array<i64: 32, 128>}]} {
    %c0_i32 = arith.constant 0 : i32
    %0 = arith.cmpi eq, %arg2, %c0_i32 : i32
    %1 = arith.extui %0 : i1 to i32
    %c0_i32_0 = arith.constant 0 : i32
    %2 = arith.cmpi ne, %1, %c0_i32_0 : i32
    scf.if %2 {
      %cst_10 = arith.constant 0.000000e+00 : f32
      %12 = vector.broadcast %cst_10 : f32 to vector<32x128xf32>
      %c0_11 = arith.constant 0 : index
      %c0_12 = arith.constant 0 : index
      %13 = vector.load %arg8[%c0_11, %c0_12] : memref<32x128xf32, #tpu.memory_space<vmem>>, vector<32x128xf32>
      tpu.vector_store %arg8[%c0_11, %c0_12], %12 {strides = array<i32>} : memref<32x128xf32, #tpu.memory_space<vmem>>, vector<32x128xf32>,
    } else {
    }
    %c0 = arith.constant 0 : index
    %c0_1 = arith.constant 0 : index
    %3 = vector.load %arg8[%c0, %c0_1] : memref<32x128xf32, #tpu.memory_space<vmem>>, vector<32x128xf32>
    %c0_2 = arith.constant 0 : index
    %c0_3 = arith.constant 0 : index
    %4 = vector.load %arg3[%c0_2, %c0_3] : memref<32x384xbf16, #tpu.memory_space<vmem>>, vector<32x384xbf16>
    %c0_4 = arith.constant 0 : index
    %c0_5 = arith.constant 0 : index
    %5 = vector.load %arg4[%c0_4, %c0_5] : memref<384x128xbf16, #tpu.memory_space<vmem>>, vector<384x128xbf16>
    %cst = arith.constant dense<0.000000e+00> : vector<32x128xf32>
    %6 = tpu.matmul %4, %5, %cst {dimension_numbers = #tpu.dot_dimension_numbers<[1], [0], [0], [1], [0, 0, 1, 1], [], []>} : vector<32x384xbf16>, vector<384x128xbf16>, vector<32x128xf32> -> vector<32x128xf32>
    %7 = arith.addf %3, %6 : vector<32x128xf32>
    %c0_6 = arith.constant 0 : index
    %c0_7 = arith.constant 0 : index
    %8 = vector.load %arg8[%c0_6, %c0_7] : memref<32x128xf32, #tpu.memory_space<vmem>>, vector<32x128xf32>
    tpu.vector_store %arg8[%c0_6, %c0_7], %7 {strides = array<i32>} : memref<32x128xf32, #tpu.memory_space<vmem>>, vector<32x128xf32>,
    %c0_i32_8 = arith.constant 0 : i32
    %9 = arith.cmpi eq, %arg2, %c0_i32_8 : i32
    %10 = arith.extui %9 : i1 to i32
    %c0_i32_9 = arith.constant 0 : i32
    %11 = arith.cmpi ne, %10, %c0_i32_9 : i32
    scf.if %11 {
      %c0_10 = arith.constant 0 : index
      %c0_11 = arith.constant 0 : index
      %12 = vector.load %arg8[%c0_10, %c0_11] : memref<32x128xf32, #tpu.memory_space<vmem>>, vector<32x128xf32>
      %c0_12 = arith.constant 0 : index
      %c0_13 = arith.constant 0 : index
      %13 = vector.load %arg5[%c0_12, %c0_13] : memref<1x128xf32, #tpu.memory_space<vmem>>, vector<1x128xf32>
      %14 = vector.broadcast %13 : vector<1x128xf32> to vector<32x128xf32>
      %15 = arith.addf %12, %14 : vector<32x128xf32>
      %c0_14 = arith.constant 0 : index
      %c0_15 = arith.constant 0 : index
      %16 = vector.load %arg6[%c0_14, %c0_15] : memref<32x128xf32, #tpu.memory_space<vmem>>, vector<32x128xf32>
      %17 = arith.addf %15, %16 : vector<32x128xf32>
      %cst_16 = arith.constant 0.000000e+00 : f32
      %18 = vector.broadcast %cst_16 : f32 to vector<32x128xf32>
      %19 = arith.maximumf %17, %18 : vector<32x128xf32>
      %c0_17 = arith.constant 0 : index
      %c0_18 = arith.constant 0 : index
      %20 = vector.load %arg7[%c0_17, %c0_18] : memref<32x128xf32, #tpu.memory_space<vmem>>, vector<32x128xf32>
      tpu.vector_store %arg7[%c0_17, %c0_18], %19 {strides = array<i32>} : memref<32x128xf32, #tpu.memory_space<vmem>>, vector<32x128xf32>,
    } else {
    }
    return
  }
  func.func @transform_0(%arg0: i32, %arg1: i32, %arg2: i32) -> (i32, i32) {
    %c0_i32 = arith.constant 0 : i32
    return %arg0, %arg2 : i32, i32
  }
  func.func @transform_1(%arg0: i32, %arg1: i32, %arg2: i32) -> (i32, i32) {
    %c0_i32 = arith.constant 0 : i32
    return %arg2, %arg1 : i32, i32
  }
  func.func @transform_2(%arg0: i32, %arg1: i32, %arg2: i32) -> (i32, i32) {
    %c0_i32 = arith.constant 0 : i32
    %c0_i32_0 = arith.constant 0 : i32
    return %c0_i32, %arg1 : i32, i32
  }
  func.func @transform_3(%arg0: i32, %arg1: i32, %arg2: i32) -> (i32, i32) {
    %c0_i32 = arith.constant 0 : i32
    return %arg0, %arg1 : i32, i32
  }
  func.func @transform_4(%arg0: i32, %arg1: i32, %arg2: i32) -> (i32, i32) {
    %c0_i32 = arith.constant 0 : i32
    return %arg0, %arg1 : i32, i32
  }
}

module attributes {stable_mosaic.version = 11 : i64} {
  func.func @_gemm_skip_kernel(%arg0: i32, %arg1: i32, %arg2: i32, %arg3: memref<32x128xbf16, #tpu.memory_space<vmem>>, %arg4: memref<128x128xbf16, #tpu.memory_space<vmem>>, %arg5: memref<1x128xf32, #tpu.memory_space<vmem>>, %arg6: memref<32x128xf32, #tpu.memory_space<vmem>>, %arg7: memref<32x128xf32, #tpu.memory_space<vmem>>, %arg8: memref<32x128xf32, #tpu.memory_space<vmem>>) attributes {dimension_semantics = [#tpu.dimension_semantics<parallel>, #tpu.dimension_semantics<parallel>, #tpu.dimension_semantics<arbitrary>], iteration_bounds = array<i64: 1, 1, 1>, scalar_prefetch = 0 : i64, scratch_operands = 1 : i64, tpu.core_type = #tpu.core_type<tc>, window_params = [{transform_indices = @transform_0, window_bounds = array<i64: 32, 128>}, {transform_indices = @transform_1, window_bounds = array<i64: 128, 128>}, {transform_indices = @transform_2, window_bounds = array<i64: 1, 128>}, {transform_indices = @transform_3, window_bounds = array<i64: 32, 128>}, {transform_indices = @transform_4, window_bounds = array<i64: 32, 128>}]} {
    %c0_i32 = arith.constant 0 : i32
    %0 = arith.cmpi eq, %arg2, %c0_i32 : i32
    %1 = arith.extui %0 : i1 to i32
    %c0_i32_0 = arith.constant 0 : i32
    %2 = arith.cmpi ne, %1, %c0_i32_0 : i32
    scf.if %2 {
      %cst_10 = arith.constant 0.000000e+00 : f32
      %12 = vector.broadcast %cst_10 : f32 to vector<32x128xf32>
      %c0_11 = arith.constant 0 : index
      %c0_12 = arith.constant 0 : index
      %13 = vector.load %arg8[%c0_11, %c0_12] : memref<32x128xf32, #tpu.memory_space<vmem>>, vector<32x128xf32>
      tpu.vector_store %arg8[%c0_11, %c0_12], %12 {strides = array<i32>} : memref<32x128xf32, #tpu.memory_space<vmem>>, vector<32x128xf32>,
    } else {
    }
    %c0 = arith.constant 0 : index
    %c0_1 = arith.constant 0 : index
    %3 = vector.load %arg8[%c0, %c0_1] : memref<32x128xf32, #tpu.memory_space<vmem>>, vector<32x128xf32>
    %c0_2 = arith.constant 0 : index
    %c0_3 = arith.constant 0 : index
    %4 = vector.load %arg3[%c0_2, %c0_3] : memref<32x128xbf16, #tpu.memory_space<vmem>>, vector<32x128xbf16>
    %c0_4 = arith.constant 0 : index
    %c0_5 = arith.constant 0 : index
    %5 = vector.load %arg4[%c0_4, %c0_5] : memref<128x128xbf16, #tpu.memory_space<vmem>>, vector<128x128xbf16>
    %cst = arith.constant dense<0.000000e+00> : vector<32x128xf32>
    %6 = tpu.matmul %4, %5, %cst {dimension_numbers = #tpu.dot_dimension_numbers<[1], [0], [0], [1], [0, 0, 1, 1], [], []>} : vector<32x128xbf16>, vector<128x128xbf16>, vector<32x128xf32> -> vector<32x128xf32>
    %7 = arith.addf %3, %6 : vector<32x128xf32>
    %c0_6 = arith.constant 0 : index
    %c0_7 = arith.constant 0 : index
    %8 = vector.load %arg8[%c0_6, %c0_7] : memref<32x128xf32, #tpu.memory_space<vmem>>, vector<32x128xf32>
    tpu.vector_store %arg8[%c0_6, %c0_7], %7 {strides = array<i32>} : memref<32x128xf32, #tpu.memory_space<vmem>>, vector<32x128xf32>,
    %c0_i32_8 = arith.constant 0 : i32
    %9 = arith.cmpi eq, %arg2, %c0_i32_8 : i32
    %10 = arith.extui %9 : i1 to i32
    %c0_i32_9 = arith.constant 0 : i32
    %11 = arith.cmpi ne, %10, %c0_i32_9 : i32
    scf.if %11 {
      %c0_10 = arith.constant 0 : index
      %c0_11 = arith.constant 0 : index
      %12 = vector.load %arg8[%c0_10, %c0_11] : memref<32x128xf32, #tpu.memory_space<vmem>>, vector<32x128xf32>
      %c0_12 = arith.constant 0 : index
      %c0_13 = arith.constant 0 : index
      %13 = vector.load %arg5[%c0_12, %c0_13] : memref<1x128xf32, #tpu.memory_space<vmem>>, vector<1x128xf32>
      %14 = vector.broadcast %13 : vector<1x128xf32> to vector<32x128xf32>
      %15 = arith.addf %12, %14 : vector<32x128xf32>
      %c0_14 = arith.constant 0 : index
      %c0_15 = arith.constant 0 : index
      %16 = vector.load %arg6[%c0_14, %c0_15] : memref<32x128xf32, #tpu.memory_space<vmem>>, vector<32x128xf32>
      %17 = arith.addf %15, %16 : vector<32x128xf32>
      %cst_16 = arith.constant 0.000000e+00 : f32
      %18 = vector.broadcast %cst_16 : f32 to vector<32x128xf32>
      %19 = arith.maximumf %17, %18 : vector<32x128xf32>
      %c0_17 = arith.constant 0 : index
      %c0_18 = arith.constant 0 : index
      %20 = vector.load %arg7[%c0_17, %c0_18] : memref<32x128xf32, #tpu.memory_space<vmem>>, vector<32x128xf32>
      tpu.vector_store %arg7[%c0_17, %c0_18], %19 {strides = array<i32>} : memref<32x128xf32, #tpu.memory_space<vmem>>, vector<32x128xf32>,
    } else {
    }
    return
  }
  func.func @transform_0(%arg0: i32, %arg1: i32, %arg2: i32) -> (i32, i32) {
    %c0_i32 = arith.constant 0 : i32
    return %arg0, %arg2 : i32, i32
  }
  func.func @transform_1(%arg0: i32, %arg1: i32, %arg2: i32) -> (i32, i32) {
    %c0_i32 = arith.constant 0 : i32
    return %arg2, %arg1 : i32, i32
  }
  func.func @transform_2(%arg0: i32, %arg1: i32, %arg2: i32) -> (i32, i32) {
    %c0_i32 = arith.constant 0 : i32
    %c0_i32_0 = arith.constant 0 : i32
    return %c0_i32, %arg1 : i32, i32
  }
  func.func @transform_3(%arg0: i32, %arg1: i32, %arg2: i32) -> (i32, i32) {
    %c0_i32 = arith.constant 0 : i32
    return %arg0, %arg1 : i32, i32
  }
  func.func @transform_4(%arg0: i32, %arg1: i32, %arg2: i32) -> (i32, i32) {
    %c0_i32 = arith.constant 0 : i32
    return %arg0, %arg1 : i32, i32
  }
}

module attributes {stable_mosaic.version = 11 : i64} {
  func.func @_gemm_skip_kernel(%arg0: i32, %arg1: i32, %arg2: i32, %arg3: memref<32x128xbf16, #tpu.memory_space<vmem>>, %arg4: memref<128x128xbf16, #tpu.memory_space<vmem>>, %arg5: memref<1x128xf32, #tpu.memory_space<vmem>>, %arg6: memref<32x128xf32, #tpu.memory_space<vmem>>, %arg7: memref<32x128xf32, #tpu.memory_space<vmem>>, %arg8: memref<32x128xf32, #tpu.memory_space<vmem>>) attributes {dimension_semantics = [#tpu.dimension_semantics<parallel>, #tpu.dimension_semantics<parallel>, #tpu.dimension_semantics<arbitrary>], iteration_bounds = array<i64: 1, 1, 1>, scalar_prefetch = 0 : i64, scratch_operands = 1 : i64, tpu.core_type = #tpu.core_type<tc>, window_params = [{transform_indices = @transform_0, window_bounds = array<i64: 32, 128>}, {transform_indices = @transform_1, window_bounds = array<i64: 128, 128>}, {transform_indices = @transform_2, window_bounds = array<i64: 1, 128>}, {transform_indices = @transform_3, window_bounds = array<i64: 32, 128>}, {transform_indices = @transform_4, window_bounds = array<i64: 32, 128>}]} {
    %c0_i32 = arith.constant 0 : i32
    %0 = arith.cmpi eq, %arg2, %c0_i32 : i32
    %1 = arith.extui %0 : i1 to i32
    %c0_i32_0 = arith.constant 0 : i32
    %2 = arith.cmpi ne, %1, %c0_i32_0 : i32
    scf.if %2 {
      %cst_10 = arith.constant 0.000000e+00 : f32
      %12 = vector.broadcast %cst_10 : f32 to vector<32x128xf32>
      %c0_11 = arith.constant 0 : index
      %c0_12 = arith.constant 0 : index
      %13 = vector.load %arg8[%c0_11, %c0_12] : memref<32x128xf32, #tpu.memory_space<vmem>>, vector<32x128xf32>
      tpu.vector_store %arg8[%c0_11, %c0_12], %12 {strides = array<i32>} : memref<32x128xf32, #tpu.memory_space<vmem>>, vector<32x128xf32>,
    } else {
    }
    %c0 = arith.constant 0 : index
    %c0_1 = arith.constant 0 : index
    %3 = vector.load %arg8[%c0, %c0_1] : memref<32x128xf32, #tpu.memory_space<vmem>>, vector<32x128xf32>
    %c0_2 = arith.constant 0 : index
    %c0_3 = arith.constant 0 : index
    %4 = vector.load %arg3[%c0_2, %c0_3] : memref<32x128xbf16, #tpu.memory_space<vmem>>, vector<32x128xbf16>
    %c0_4 = arith.constant 0 : index
    %c0_5 = arith.constant 0 : index
    %5 = vector.load %arg4[%c0_4, %c0_5] : memref<128x128xbf16, #tpu.memory_space<vmem>>, vector<128x128xbf16>
    %cst = arith.constant dense<0.000000e+00> : vector<32x128xf32>
    %6 = tpu.matmul %4, %5, %cst {dimension_numbers = #tpu.dot_dimension_numbers<[1], [0], [0], [1], [0, 0, 1, 1], [], []>} : vector<32x128xbf16>, vector<128x128xbf16>, vector<32x128xf32> -> vector<32x128xf32>
    %7 = arith.addf %3, %6 : vector<32x128xf32>
    %c0_6 = arith.constant 0 : index
    %c0_7 = arith.constant 0 : index
    %8 = vector.load %arg8[%c0_6, %c0_7] : memref<32x128xf32, #tpu.memory_space<vmem>>, vector<32x128xf32>
    tpu.vector_store %arg8[%c0_6, %c0_7], %7 {strides = array<i32>} : memref<32x128xf32, #tpu.memory_space<vmem>>, vector<32x128xf32>,
    %c0_i32_8 = arith.constant 0 : i32
    %9 = arith.cmpi eq, %arg2, %c0_i32_8 : i32
    %10 = arith.extui %9 : i1 to i32
    %c0_i32_9 = arith.constant 0 : i32
    %11 = arith.cmpi ne, %10, %c0_i32_9 : i32
    scf.if %11 {
      %c0_10 = arith.constant 0 : index
      %c0_11 = arith.constant 0 : index
      %12 = vector.load %arg8[%c0_10, %c0_11] : memref<32x128xf32, #tpu.memory_space<vmem>>, vector<32x128xf32>
      %c0_12 = arith.constant 0 : index
      %c0_13 = arith.constant 0 : index
      %13 = vector.load %arg5[%c0_12, %c0_13] : memref<1x128xf32, #tpu.memory_space<vmem>>, vector<1x128xf32>
      %14 = vector.broadcast %13 : vector<1x128xf32> to vector<32x128xf32>
      %15 = arith.addf %12, %14 : vector<32x128xf32>
      %c0_14 = arith.constant 0 : index
      %c0_15 = arith.constant 0 : index
      %16 = vector.load %arg6[%c0_14, %c0_15] : memref<32x128xf32, #tpu.memory_space<vmem>>, vector<32x128xf32>
      %17 = arith.addf %15, %16 : vector<32x128xf32>
      %cst_16 = arith.constant 0.000000e+00 : f32
      %18 = vector.broadcast %cst_16 : f32 to vector<32x128xf32>
      %19 = arith.maximumf %17, %18 : vector<32x128xf32>
      %c0_17 = arith.constant 0 : index
      %c0_18 = arith.constant 0 : index
      %20 = vector.load %arg7[%c0_17, %c0_18] : memref<32x128xf32, #tpu.memory_space<vmem>>, vector<32x128xf32>
      tpu.vector_store %arg7[%c0_17, %c0_18], %19 {strides = array<i32>} : memref<32x128xf32, #tpu.memory_space<vmem>>, vector<32x128xf32>,
    } else {
    }
    return
  }
  func.func @transform_0(%arg0: i32, %arg1: i32, %arg2: i32) -> (i32, i32) {
    %c0_i32 = arith.constant 0 : i32
    return %arg0, %arg2 : i32, i32
  }
  func.func @transform_1(%arg0: i32, %arg1: i32, %arg2: i32) -> (i32, i32) {
    %c0_i32 = arith.constant 0 : i32
    return %arg2, %arg1 : i32, i32
  }
  func.func @transform_2(%arg0: i32, %arg1: i32, %arg2: i32) -> (i32, i32) {
    %c0_i32 = arith.constant 0 : i32
    %c0_i32_0 = arith.constant 0 : i32
    return %c0_i32, %arg1 : i32, i32
  }
  func.func @transform_3(%arg0: i32, %arg1: i32, %arg2: i32) -> (i32, i32) {
    %c0_i32 = arith.constant 0 : i32
    return %arg0, %arg1 : i32, i32
  }
  func.func @transform_4(%arg0: i32, %arg1: i32, %arg2: i32) -> (i32, i32) {
    %c0_i32 = arith.constant 0 : i32
    return %arg0, %arg1 : i32, i32
  }
}

module attributes {stable_mosaic.version = 11 : i64} {
  func.func @_gemm_skip_kernel(%arg0: i32, %arg1: i32, %arg2: i32, %arg3: memref<32x128xbf16, #tpu.memory_space<vmem>>, %arg4: memref<128x128xbf16, #tpu.memory_space<vmem>>, %arg5: memref<1x128xf32, #tpu.memory_space<vmem>>, %arg6: memref<32x128xf32, #tpu.memory_space<vmem>>, %arg7: memref<32x128xf32, #tpu.memory_space<vmem>>, %arg8: memref<32x128xf32, #tpu.memory_space<vmem>>) attributes {dimension_semantics = [#tpu.dimension_semantics<parallel>, #tpu.dimension_semantics<parallel>, #tpu.dimension_semantics<arbitrary>], iteration_bounds = array<i64: 1, 1, 1>, scalar_prefetch = 0 : i64, scratch_operands = 1 : i64, tpu.core_type = #tpu.core_type<tc>, window_params = [{transform_indices = @transform_0, window_bounds = array<i64: 32, 128>}, {transform_indices = @transform_1, window_bounds = array<i64: 128, 128>}, {transform_indices = @transform_2, window_bounds = array<i64: 1, 128>}, {transform_indices = @transform_3, window_bounds = array<i64: 32, 128>}, {transform_indices = @transform_4, window_bounds = array<i64: 32, 128>}]} {
    %c0_i32 = arith.constant 0 : i32
    %0 = arith.cmpi eq, %arg2, %c0_i32 : i32
    %1 = arith.extui %0 : i1 to i32
    %c0_i32_0 = arith.constant 0 : i32
    %2 = arith.cmpi ne, %1, %c0_i32_0 : i32
    scf.if %2 {
      %cst_10 = arith.constant 0.000000e+00 : f32
      %12 = vector.broadcast %cst_10 : f32 to vector<32x128xf32>
      %c0_11 = arith.constant 0 : index
      %c0_12 = arith.constant 0 : index
      %13 = vector.load %arg8[%c0_11, %c0_12] : memref<32x128xf32, #tpu.memory_space<vmem>>, vector<32x128xf32>
      tpu.vector_store %arg8[%c0_11, %c0_12], %12 {strides = array<i32>} : memref<32x128xf32, #tpu.memory_space<vmem>>, vector<32x128xf32>,
    } else {
    }
    %c0 = arith.constant 0 : index
    %c0_1 = arith.constant 0 : index
    %3 = vector.load %arg8[%c0, %c0_1] : memref<32x128xf32, #tpu.memory_space<vmem>>, vector<32x128xf32>
    %c0_2 = arith.constant 0 : index
    %c0_3 = arith.constant 0 : index
    %4 = vector.load %arg3[%c0_2, %c0_3] : memref<32x128xbf16, #tpu.memory_space<vmem>>, vector<32x128xbf16>
    %c0_4 = arith.constant 0 : index
    %c0_5 = arith.constant 0 : index
    %5 = vector.load %arg4[%c0_4, %c0_5] : memref<128x128xbf16, #tpu.memory_space<vmem>>, vector<128x128xbf16>
    %cst = arith.constant dense<0.000000e+00> : vector<32x128xf32>
    %6 = tpu.matmul %4, %5, %cst {dimension_numbers = #tpu.dot_dimension_numbers<[1], [0], [0], [1], [0, 0, 1, 1], [], []>} : vector<32x128xbf16>, vector<128x128xbf16>, vector<32x128xf32> -> vector<32x128xf32>
    %7 = arith.addf %3, %6 : vector<32x128xf32>
    %c0_6 = arith.constant 0 : index
    %c0_7 = arith.constant 0 : index
    %8 = vector.load %arg8[%c0_6, %c0_7] : memref<32x128xf32, #tpu.memory_space<vmem>>, vector<32x128xf32>
    tpu.vector_store %arg8[%c0_6, %c0_7], %7 {strides = array<i32>} : memref<32x128xf32, #tpu.memory_space<vmem>>, vector<32x128xf32>,
    %c0_i32_8 = arith.constant 0 : i32
    %9 = arith.cmpi eq, %arg2, %c0_i32_8 : i32
    %10 = arith.extui %9 : i1 to i32
    %c0_i32_9 = arith.constant 0 : i32
    %11 = arith.cmpi ne, %10, %c0_i32_9 : i32
    scf.if %11 {
      %c0_10 = arith.constant 0 : index
      %c0_11 = arith.constant 0 : index
      %12 = vector.load %arg8[%c0_10, %c0_11] : memref<32x128xf32, #tpu.memory_space<vmem>>, vector<32x128xf32>
      %c0_12 = arith.constant 0 : index
      %c0_13 = arith.constant 0 : index
      %13 = vector.load %arg5[%c0_12, %c0_13] : memref<1x128xf32, #tpu.memory_space<vmem>>, vector<1x128xf32>
      %14 = vector.broadcast %13 : vector<1x128xf32> to vector<32x128xf32>
      %15 = arith.addf %12, %14 : vector<32x128xf32>
      %c0_14 = arith.constant 0 : index
      %c0_15 = arith.constant 0 : index
      %16 = vector.load %arg6[%c0_14, %c0_15] : memref<32x128xf32, #tpu.memory_space<vmem>>, vector<32x128xf32>
      %17 = arith.addf %15, %16 : vector<32x128xf32>
      %cst_16 = arith.constant 0.000000e+00 : f32
      %18 = vector.broadcast %cst_16 : f32 to vector<32x128xf32>
      %19 = arith.maximumf %17, %18 : vector<32x128xf32>
      %c0_17 = arith.constant 0 : index
      %c0_18 = arith.constant 0 : index
      %20 = vector.load %arg7[%c0_17, %c0_18] : memref<32x128xf32, #tpu.memory_space<vmem>>, vector<32x128xf32>
      tpu.vector_store %arg7[%c0_17, %c0_18], %19 {strides = array<i32>} : memref<32x128xf32, #tpu.memory_space<vmem>>, vector<32x128xf32>,
    } else {
    }
    return
  }
  func.func @transform_0(%arg0: i32, %arg1: i32, %arg2: i32) -> (i32, i32) {
    %c0_i32 = arith.constant 0 : i32
    return %arg0, %arg2 : i32, i32
  }
  func.func @transform_1(%arg0: i32, %arg1: i32, %arg2: i32) -> (i32, i32) {
    %c0_i32 = arith.constant 0 : i32
    return %arg2, %arg1 : i32, i32
  }
  func.func @transform_2(%arg0: i32, %arg1: i32, %arg2: i32) -> (i32, i32) {
    %c0_i32 = arith.constant 0 : i32
    %c0_i32_0 = arith.constant 0 : i32
    return %c0_i32, %arg1 : i32, i32
  }
  func.func @transform_3(%arg0: i32, %arg1: i32, %arg2: i32) -> (i32, i32) {
    %c0_i32 = arith.constant 0 : i32
    return %arg0, %arg1 : i32, i32
  }
  func.func @transform_4(%arg0: i32, %arg1: i32, %arg2: i32) -> (i32, i32) {
    %c0_i32 = arith.constant 0 : i32
    return %arg0, %arg1 : i32, i32
  }
}

module attributes {stable_mosaic.version = 11 : i64} {
  func.func @_gemm_kernel(%arg0: i32, %arg1: i32, %arg2: i32, %arg3: memref<128x128xbf16, #tpu.memory_space<vmem>>, %arg4: memref<128x128xbf16, #tpu.memory_space<vmem>>, %arg5: memref<1x128xf32, #tpu.memory_space<vmem>>, %arg6: memref<128x128xf32, #tpu.memory_space<vmem>>, %arg7: memref<128x128xf32, #tpu.memory_space<vmem>>) attributes {dimension_semantics = [#tpu.dimension_semantics<parallel>, #tpu.dimension_semantics<parallel>, #tpu.dimension_semantics<arbitrary>], iteration_bounds = array<i64: 1, 1, 1>, scalar_prefetch = 0 : i64, scratch_operands = 1 : i64, tpu.core_type = #tpu.core_type<tc>, window_params = [{transform_indices = @transform_0, window_bounds = array<i64: 128, 128>}, {transform_indices = @transform_1, window_bounds = array<i64: 128, 128>}, {transform_indices = @transform_2, window_bounds = array<i64: 1, 128>}, {transform_indices = @transform_3, window_bounds = array<i64: 128, 128>}]} {
    %c0_i32 = arith.constant 0 : i32
    %0 = arith.cmpi eq, %arg2, %c0_i32 : i32
    %1 = arith.extui %0 : i1 to i32
    %c0_i32_0 = arith.constant 0 : i32
    %2 = arith.cmpi ne, %1, %c0_i32_0 : i32
    scf.if %2 {
      %cst_10 = arith.constant 0.000000e+00 : f32
      %12 = vector.broadcast %cst_10 : f32 to vector<128x128xf32>
      %c0_11 = arith.constant 0 : index
      %c0_12 = arith.constant 0 : index
      %13 = vector.load %arg7[%c0_11, %c0_12] : memref<128x128xf32, #tpu.memory_space<vmem>>, vector<128x128xf32>
      tpu.vector_store %arg7[%c0_11, %c0_12], %12 {strides = array<i32>} : memref<128x128xf32, #tpu.memory_space<vmem>>, vector<128x128xf32>,
    } else {
    }
    %c0 = arith.constant 0 : index
    %c0_1 = arith.constant 0 : index
    %3 = vector.load %arg7[%c0, %c0_1] : memref<128x128xf32, #tpu.memory_space<vmem>>, vector<128x128xf32>
    %c0_2 = arith.constant 0 : index
    %c0_3 = arith.constant 0 : index
    %4 = vector.load %arg3[%c0_2, %c0_3] : memref<128x128xbf16, #tpu.memory_space<vmem>>, vector<128x128xbf16>
    %c0_4 = arith.constant 0 : index
    %c0_5 = arith.constant 0 : index
    %5 = vector.load %arg4[%c0_4, %c0_5] : memref<128x128xbf16, #tpu.memory_space<vmem>>, vector<128x128xbf16>
    %cst = arith.constant dense<0.000000e+00> : vector<128x128xf32>
    %6 = tpu.matmul %4, %5, %cst {dimension_numbers = #tpu.dot_dimension_numbers<[1], [0], [0], [1], [0, 0, 1, 1], [], []>} : vector<128x128xbf16>, vector<128x128xbf16>, vector<128x128xf32> -> vector<128x128xf32>
    %7 = arith.addf %3, %6 : vector<128x128xf32>
    %c0_6 = arith.constant 0 : index
    %c0_7 = arith.constant 0 : index
    %8 = vector.load %arg7[%c0_6, %c0_7] : memref<128x128xf32, #tpu.memory_space<vmem>>, vector<128x128xf32>
    tpu.vector_store %arg7[%c0_6, %c0_7], %7 {strides = array<i32>} : memref<128x128xf32, #tpu.memory_space<vmem>>, vector<128x128xf32>,
    %c0_i32_8 = arith.constant 0 : i32
    %9 = arith.cmpi eq, %arg2, %c0_i32_8 : i32
    %10 = arith.extui %9 : i1 to i32
    %c0_i32_9 = arith.constant 0 : i32
    %11 = arith.cmpi ne, %10, %c0_i32_9 : i32
    scf.if %11 {
      %c0_10 = arith.constant 0 : index
      %c0_11 = arith.constant 0 : index
      %12 = vector.load %arg7[%c0_10, %c0_11] : memref<128x128xf32, #tpu.memory_space<vmem>>, vector<128x128xf32>
      %c0_12 = arith.constant 0 : index
      %c0_13 = arith.constant 0 : index
      %13 = vector.load %arg5[%c0_12, %c0_13] : memref<1x128xf32, #tpu.memory_space<vmem>>, vector<1x128xf32>
      %14 = vector.broadcast %13 : vector<1x128xf32> to vector<128x128xf32>
      %15 = arith.addf %12, %14 : vector<128x128xf32>
      %cst_14 = arith.constant 0.000000e+00 : f32
      %16 = vector.broadcast %cst_14 : f32 to vector<128x128xf32>
      %17 = arith.maximumf %15, %16 : vector<128x128xf32>
      %c0_15 = arith.constant 0 : index
      %c0_16 = arith.constant 0 : index
      %18 = vector.load %arg6[%c0_15, %c0_16] : memref<128x128xf32, #tpu.memory_space<vmem>>, vector<128x128xf32>
      tpu.vector_store %arg6[%c0_15, %c0_16], %17 {strides = array<i32>} : memref<128x128xf32, #tpu.memory_space<vmem>>, vector<128x128xf32>,
    } else {
    }
    return
  }
  func.func @transform_0(%arg0: i32, %arg1: i32, %arg2: i32) -> (i32, i32) {
    %c0_i32 = arith.constant 0 : i32
    return %arg0, %arg2 : i32, i32
  }
  func.func @transform_1(%arg0: i32, %arg1: i32, %arg2: i32) -> (i32, i32) {
    %c0_i32 = arith.constant 0 : i32
    return %arg2, %arg1 : i32, i32
  }
  func.func @transform_2(%arg0: i32, %arg1: i32, %arg2: i32) -> (i32, i32) {
    %c0_i32 = arith.constant 0 : i32
    %c0_i32_0 = arith.constant 0 : i32
    return %c0_i32, %arg1 : i32, i32
  }
  func.func @transform_3(%arg0: i32, %arg1: i32, %arg2: i32) -> (i32, i32) {
    %c0_i32 = arith.constant 0 : i32
    return %arg0, %arg1 : i32, i32
  }
}

module attributes {stable_mosaic.version = 11 : i64} {
  func.func @_gemm_kernel(%arg0: i32, %arg1: i32, %arg2: i32, %arg3: memref<128x128xbf16, #tpu.memory_space<vmem>>, %arg4: memref<128x128xbf16, #tpu.memory_space<vmem>>, %arg5: memref<1x128xf32, #tpu.memory_space<vmem>>, %arg6: memref<128x128xf32, #tpu.memory_space<vmem>>, %arg7: memref<128x128xf32, #tpu.memory_space<vmem>>) attributes {dimension_semantics = [#tpu.dimension_semantics<parallel>, #tpu.dimension_semantics<parallel>, #tpu.dimension_semantics<arbitrary>], iteration_bounds = array<i64: 1, 1, 1>, scalar_prefetch = 0 : i64, scratch_operands = 1 : i64, tpu.core_type = #tpu.core_type<tc>, window_params = [{transform_indices = @transform_0, window_bounds = array<i64: 128, 128>}, {transform_indices = @transform_1, window_bounds = array<i64: 128, 128>}, {transform_indices = @transform_2, window_bounds = array<i64: 1, 128>}, {transform_indices = @transform_3, window_bounds = array<i64: 128, 128>}]} {
    %c0_i32 = arith.constant 0 : i32
    %0 = arith.cmpi eq, %arg2, %c0_i32 : i32
    %1 = arith.extui %0 : i1 to i32
    %c0_i32_0 = arith.constant 0 : i32
    %2 = arith.cmpi ne, %1, %c0_i32_0 : i32
    scf.if %2 {
      %cst_10 = arith.constant 0.000000e+00 : f32
      %12 = vector.broadcast %cst_10 : f32 to vector<128x128xf32>
      %c0_11 = arith.constant 0 : index
      %c0_12 = arith.constant 0 : index
      %13 = vector.load %arg7[%c0_11, %c0_12] : memref<128x128xf32, #tpu.memory_space<vmem>>, vector<128x128xf32>
      tpu.vector_store %arg7[%c0_11, %c0_12], %12 {strides = array<i32>} : memref<128x128xf32, #tpu.memory_space<vmem>>, vector<128x128xf32>,
    } else {
    }
    %c0 = arith.constant 0 : index
    %c0_1 = arith.constant 0 : index
    %3 = vector.load %arg7[%c0, %c0_1] : memref<128x128xf32, #tpu.memory_space<vmem>>, vector<128x128xf32>
    %c0_2 = arith.constant 0 : index
    %c0_3 = arith.constant 0 : index
    %4 = vector.load %arg3[%c0_2, %c0_3] : memref<128x128xbf16, #tpu.memory_space<vmem>>, vector<128x128xbf16>
    %c0_4 = arith.constant 0 : index
    %c0_5 = arith.constant 0 : index
    %5 = vector.load %arg4[%c0_4, %c0_5] : memref<128x128xbf16, #tpu.memory_space<vmem>>, vector<128x128xbf16>
    %cst = arith.constant dense<0.000000e+00> : vector<128x128xf32>
    %6 = tpu.matmul %4, %5, %cst {dimension_numbers = #tpu.dot_dimension_numbers<[1], [0], [0], [1], [0, 0, 1, 1], [], []>} : vector<128x128xbf16>, vector<128x128xbf16>, vector<128x128xf32> -> vector<128x128xf32>
    %7 = arith.addf %3, %6 : vector<128x128xf32>
    %c0_6 = arith.constant 0 : index
    %c0_7 = arith.constant 0 : index
    %8 = vector.load %arg7[%c0_6, %c0_7] : memref<128x128xf32, #tpu.memory_space<vmem>>, vector<128x128xf32>
    tpu.vector_store %arg7[%c0_6, %c0_7], %7 {strides = array<i32>} : memref<128x128xf32, #tpu.memory_space<vmem>>, vector<128x128xf32>,
    %c0_i32_8 = arith.constant 0 : i32
    %9 = arith.cmpi eq, %arg2, %c0_i32_8 : i32
    %10 = arith.extui %9 : i1 to i32
    %c0_i32_9 = arith.constant 0 : i32
    %11 = arith.cmpi ne, %10, %c0_i32_9 : i32
    scf.if %11 {
      %c0_10 = arith.constant 0 : index
      %c0_11 = arith.constant 0 : index
      %12 = vector.load %arg7[%c0_10, %c0_11] : memref<128x128xf32, #tpu.memory_space<vmem>>, vector<128x128xf32>
      %c0_12 = arith.constant 0 : index
      %c0_13 = arith.constant 0 : index
      %13 = vector.load %arg5[%c0_12, %c0_13] : memref<1x128xf32, #tpu.memory_space<vmem>>, vector<1x128xf32>
      %14 = vector.broadcast %13 : vector<1x128xf32> to vector<128x128xf32>
      %15 = arith.addf %12, %14 : vector<128x128xf32>
      %cst_14 = arith.constant 0.000000e+00 : f32
      %16 = vector.broadcast %cst_14 : f32 to vector<128x128xf32>
      %17 = arith.maximumf %15, %16 : vector<128x128xf32>
      %c0_15 = arith.constant 0 : index
      %c0_16 = arith.constant 0 : index
      %18 = vector.load %arg6[%c0_15, %c0_16] : memref<128x128xf32, #tpu.memory_space<vmem>>, vector<128x128xf32>
      tpu.vector_store %arg6[%c0_15, %c0_16], %17 {strides = array<i32>} : memref<128x128xf32, #tpu.memory_space<vmem>>, vector<128x128xf32>,
    } else {
    }
    return
  }
  func.func @transform_0(%arg0: i32, %arg1: i32, %arg2: i32) -> (i32, i32) {
    %c0_i32 = arith.constant 0 : i32
    return %arg0, %arg2 : i32, i32
  }
  func.func @transform_1(%arg0: i32, %arg1: i32, %arg2: i32) -> (i32, i32) {
    %c0_i32 = arith.constant 0 : i32
    return %arg2, %arg1 : i32, i32
  }
  func.func @transform_2(%arg0: i32, %arg1: i32, %arg2: i32) -> (i32, i32) {
    %c0_i32 = arith.constant 0 : i32
    %c0_i32_0 = arith.constant 0 : i32
    return %c0_i32, %arg1 : i32, i32
  }
  func.func @transform_3(%arg0: i32, %arg1: i32, %arg2: i32) -> (i32, i32) {
    %c0_i32 = arith.constant 0 : i32
    return %arg0, %arg1 : i32, i32
  }
}

module attributes {stable_mosaic.version = 11 : i64} {
  func.func @_gemm_kernel(%arg0: i32, %arg1: i32, %arg2: i32, %arg3: memref<128x128xbf16, #tpu.memory_space<vmem>>, %arg4: memref<128x128xbf16, #tpu.memory_space<vmem>>, %arg5: memref<1x128xf32, #tpu.memory_space<vmem>>, %arg6: memref<128x128xf32, #tpu.memory_space<vmem>>, %arg7: memref<128x128xf32, #tpu.memory_space<vmem>>) attributes {dimension_semantics = [#tpu.dimension_semantics<parallel>, #tpu.dimension_semantics<parallel>, #tpu.dimension_semantics<arbitrary>], iteration_bounds = array<i64: 1, 1, 1>, scalar_prefetch = 0 : i64, scratch_operands = 1 : i64, tpu.core_type = #tpu.core_type<tc>, window_params = [{transform_indices = @transform_0, window_bounds = array<i64: 128, 128>}, {transform_indices = @transform_1, window_bounds = array<i64: 128, 128>}, {transform_indices = @transform_2, window_bounds = array<i64: 1, 128>}, {transform_indices = @transform_3, window_bounds = array<i64: 128, 128>}]} {
    %c0_i32 = arith.constant 0 : i32
    %0 = arith.cmpi eq, %arg2, %c0_i32 : i32
    %1 = arith.extui %0 : i1 to i32
    %c0_i32_0 = arith.constant 0 : i32
    %2 = arith.cmpi ne, %1, %c0_i32_0 : i32
    scf.if %2 {
      %cst_10 = arith.constant 0.000000e+00 : f32
      %12 = vector.broadcast %cst_10 : f32 to vector<128x128xf32>
      %c0_11 = arith.constant 0 : index
      %c0_12 = arith.constant 0 : index
      %13 = vector.load %arg7[%c0_11, %c0_12] : memref<128x128xf32, #tpu.memory_space<vmem>>, vector<128x128xf32>
      tpu.vector_store %arg7[%c0_11, %c0_12], %12 {strides = array<i32>} : memref<128x128xf32, #tpu.memory_space<vmem>>, vector<128x128xf32>,
    } else {
    }
    %c0 = arith.constant 0 : index
    %c0_1 = arith.constant 0 : index
    %3 = vector.load %arg7[%c0, %c0_1] : memref<128x128xf32, #tpu.memory_space<vmem>>, vector<128x128xf32>
    %c0_2 = arith.constant 0 : index
    %c0_3 = arith.constant 0 : index
    %4 = vector.load %arg3[%c0_2, %c0_3] : memref<128x128xbf16, #tpu.memory_space<vmem>>, vector<128x128xbf16>
    %c0_4 = arith.constant 0 : index
    %c0_5 = arith.constant 0 : index
    %5 = vector.load %arg4[%c0_4, %c0_5] : memref<128x128xbf16, #tpu.memory_space<vmem>>, vector<128x128xbf16>
    %cst = arith.constant dense<0.000000e+00> : vector<128x128xf32>
    %6 = tpu.matmul %4, %5, %cst {dimension_numbers = #tpu.dot_dimension_numbers<[1], [0], [0], [1], [0, 0, 1, 1], [], []>} : vector<128x128xbf16>, vector<128x128xbf16>, vector<128x128xf32> -> vector<128x128xf32>
    %7 = arith.addf %3, %6 : vector<128x128xf32>
    %c0_6 = arith.constant 0 : index
    %c0_7 = arith.constant 0 : index
    %8 = vector.load %arg7[%c0_6, %c0_7] : memref<128x128xf32, #tpu.memory_space<vmem>>, vector<128x128xf32>
    tpu.vector_store %arg7[%c0_6, %c0_7], %7 {strides = array<i32>} : memref<128x128xf32, #tpu.memory_space<vmem>>, vector<128x128xf32>,
    %c0_i32_8 = arith.constant 0 : i32
    %9 = arith.cmpi eq, %arg2, %c0_i32_8 : i32
    %10 = arith.extui %9 : i1 to i32
    %c0_i32_9 = arith.constant 0 : i32
    %11 = arith.cmpi ne, %10, %c0_i32_9 : i32
    scf.if %11 {
      %c0_10 = arith.constant 0 : index
      %c0_11 = arith.constant 0 : index
      %12 = vector.load %arg7[%c0_10, %c0_11] : memref<128x128xf32, #tpu.memory_space<vmem>>, vector<128x128xf32>
      %c0_12 = arith.constant 0 : index
      %c0_13 = arith.constant 0 : index
      %13 = vector.load %arg5[%c0_12, %c0_13] : memref<1x128xf32, #tpu.memory_space<vmem>>, vector<1x128xf32>
      %14 = vector.broadcast %13 : vector<1x128xf32> to vector<128x128xf32>
      %15 = arith.addf %12, %14 : vector<128x128xf32>
      %cst_14 = arith.constant 0.000000e+00 : f32
      %16 = vector.broadcast %cst_14 : f32 to vector<128x128xf32>
      %17 = arith.maximumf %15, %16 : vector<128x128xf32>
      %c0_15 = arith.constant 0 : index
      %c0_16 = arith.constant 0 : index
      %18 = vector.load %arg6[%c0_15, %c0_16] : memref<128x128xf32, #tpu.memory_space<vmem>>, vector<128x128xf32>
      tpu.vector_store %arg6[%c0_15, %c0_16], %17 {strides = array<i32>} : memref<128x128xf32, #tpu.memory_space<vmem>>, vector<128x128xf32>,
    } else {
    }
    return
  }
  func.func @transform_0(%arg0: i32, %arg1: i32, %arg2: i32) -> (i32, i32) {
    %c0_i32 = arith.constant 0 : i32
    return %arg0, %arg2 : i32, i32
  }
  func.func @transform_1(%arg0: i32, %arg1: i32, %arg2: i32) -> (i32, i32) {
    %c0_i32 = arith.constant 0 : i32
    return %arg2, %arg1 : i32, i32
  }
  func.func @transform_2(%arg0: i32, %arg1: i32, %arg2: i32) -> (i32, i32) {
    %c0_i32 = arith.constant 0 : i32
    %c0_i32_0 = arith.constant 0 : i32
    return %c0_i32, %arg1 : i32, i32
  }
  func.func @transform_3(%arg0: i32, %arg1: i32, %arg2: i32) -> (i32, i32) {
    %c0_i32 = arith.constant 0 : i32
    return %arg0, %arg1 : i32, i32
  }
}

module attributes {stable_mosaic.version = 11 : i64} {
  func.func @_gemm_kernel(%arg0: i32, %arg1: i32, %arg2: i32, %arg3: memref<512x128xbf16, #tpu.memory_space<vmem>>, %arg4: memref<128x128xbf16, #tpu.memory_space<vmem>>, %arg5: memref<1x128xf32, #tpu.memory_space<vmem>>, %arg6: memref<512x128xf32, #tpu.memory_space<vmem>>, %arg7: memref<512x128xf32, #tpu.memory_space<vmem>>) attributes {dimension_semantics = [#tpu.dimension_semantics<parallel>, #tpu.dimension_semantics<parallel>, #tpu.dimension_semantics<arbitrary>], iteration_bounds = array<i64: 1, 1, 1>, scalar_prefetch = 0 : i64, scratch_operands = 1 : i64, tpu.core_type = #tpu.core_type<tc>, window_params = [{transform_indices = @transform_0, window_bounds = array<i64: 512, 128>}, {transform_indices = @transform_1, window_bounds = array<i64: 128, 128>}, {transform_indices = @transform_2, window_bounds = array<i64: 1, 128>}, {transform_indices = @transform_3, window_bounds = array<i64: 512, 128>}]} {
    %c0_i32 = arith.constant 0 : i32
    %0 = arith.cmpi eq, %arg2, %c0_i32 : i32
    %1 = arith.extui %0 : i1 to i32
    %c0_i32_0 = arith.constant 0 : i32
    %2 = arith.cmpi ne, %1, %c0_i32_0 : i32
    scf.if %2 {
      %cst_10 = arith.constant 0.000000e+00 : f32
      %12 = vector.broadcast %cst_10 : f32 to vector<512x128xf32>
      %c0_11 = arith.constant 0 : index
      %c0_12 = arith.constant 0 : index
      %13 = vector.load %arg7[%c0_11, %c0_12] : memref<512x128xf32, #tpu.memory_space<vmem>>, vector<512x128xf32>
      tpu.vector_store %arg7[%c0_11, %c0_12], %12 {strides = array<i32>} : memref<512x128xf32, #tpu.memory_space<vmem>>, vector<512x128xf32>,
    } else {
    }
    %c0 = arith.constant 0 : index
    %c0_1 = arith.constant 0 : index
    %3 = vector.load %arg7[%c0, %c0_1] : memref<512x128xf32, #tpu.memory_space<vmem>>, vector<512x128xf32>
    %c0_2 = arith.constant 0 : index
    %c0_3 = arith.constant 0 : index
    %4 = vector.load %arg3[%c0_2, %c0_3] : memref<512x128xbf16, #tpu.memory_space<vmem>>, vector<512x128xbf16>
    %c0_4 = arith.constant 0 : index
    %c0_5 = arith.constant 0 : index
    %5 = vector.load %arg4[%c0_4, %c0_5] : memref<128x128xbf16, #tpu.memory_space<vmem>>, vector<128x128xbf16>
    %cst = arith.constant dense<0.000000e+00> : vector<512x128xf32>
    %6 = tpu.matmul %4, %5, %cst {dimension_numbers = #tpu.dot_dimension_numbers<[1], [0], [0], [1], [0, 0, 1, 1], [], []>} : vector<512x128xbf16>, vector<128x128xbf16>, vector<512x128xf32> -> vector<512x128xf32>
    %7 = arith.addf %3, %6 : vector<512x128xf32>
    %c0_6 = arith.constant 0 : index
    %c0_7 = arith.constant 0 : index
    %8 = vector.load %arg7[%c0_6, %c0_7] : memref<512x128xf32, #tpu.memory_space<vmem>>, vector<512x128xf32>
    tpu.vector_store %arg7[%c0_6, %c0_7], %7 {strides = array<i32>} : memref<512x128xf32, #tpu.memory_space<vmem>>, vector<512x128xf32>,
    %c0_i32_8 = arith.constant 0 : i32
    %9 = arith.cmpi eq, %arg2, %c0_i32_8 : i32
    %10 = arith.extui %9 : i1 to i32
    %c0_i32_9 = arith.constant 0 : i32
    %11 = arith.cmpi ne, %10, %c0_i32_9 : i32
    scf.if %11 {
      %c0_10 = arith.constant 0 : index
      %c0_11 = arith.constant 0 : index
      %12 = vector.load %arg7[%c0_10, %c0_11] : memref<512x128xf32, #tpu.memory_space<vmem>>, vector<512x128xf32>
      %c0_12 = arith.constant 0 : index
      %c0_13 = arith.constant 0 : index
      %13 = vector.load %arg5[%c0_12, %c0_13] : memref<1x128xf32, #tpu.memory_space<vmem>>, vector<1x128xf32>
      %14 = vector.broadcast %13 : vector<1x128xf32> to vector<512x128xf32>
      %15 = arith.addf %12, %14 : vector<512x128xf32>
      %c0_14 = arith.constant 0 : index
      %c0_15 = arith.constant 0 : index
      %16 = vector.load %arg6[%c0_14, %c0_15] : memref<512x128xf32, #tpu.memory_space<vmem>>, vector<512x128xf32>
      tpu.vector_store %arg6[%c0_14, %c0_15], %15 {strides = array<i32>} : memref<512x128xf32, #tpu.memory_space<vmem>>, vector<512x128xf32>,
    } else {
    }
    return
  }
  func.func @transform_0(%arg0: i32, %arg1: i32, %arg2: i32) -> (i32, i32) {
    %c0_i32 = arith.constant 0 : i32
    return %arg0, %arg2 : i32, i32
  }
  func.func @transform_1(%arg0: i32, %arg1: i32, %arg2: i32) -> (i32, i32) {
    %c0_i32 = arith.constant 0 : i32
    return %arg2, %arg1 : i32, i32
  }
  func.func @transform_2(%arg0: i32, %arg1: i32, %arg2: i32) -> (i32, i32) {
    %c0_i32 = arith.constant 0 : i32
    %c0_i32_0 = arith.constant 0 : i32
    return %c0_i32, %arg1 : i32, i32
  }
  func.func @transform_3(%arg0: i32, %arg1: i32, %arg2: i32) -> (i32, i32) {
    %c0_i32 = arith.constant 0 : i32
    return %arg0, %arg1 : i32, i32
  }
}

</mosaic_0001>

<llo_original>
// kernel: fcn_mt_forward.13
$region0: #{fcn_mt_forward.13}
  #allocation0 [shape = 'u32[]', space=smem, size = 0x4, offset = 0x4, fixed_abs, tag = 'smem constant byte address 0x4 - core index']
  #allocation1 [shape = 'u32[72,128]{1,0:T(1,128)}', space=vmem, size = 0x9000, scoped, tag = 'internal scratch']
  #allocation2 [shape = 'f32[128,128]{1,0:T(8,128)}', space=vmem, size = 0x10000, scoped, tag = 'scratch operand']
  %s0 = inlined_call_operand.vmem [shape: bf16[128,128], index: 0, kind: input, shape index: {}]
  %s1 = inlined_call_operand.vmem [shape: bf16[128,128], index: 1, kind: input, shape index: {}]
  %s2 = inlined_call_operand.vmem [shape: f32[1,128], index: 2, kind: input, shape index: {}]
  %s3 = inlined_call_operand.vmem [shape: f32[128,128], index: 3, kind: output, shape index: {}]
  %s4 = sld [smem:[#allocation0]]
  $region30: #{fcn_mt_forward.13} parent=0
    _
  %s6 = ssub.s32 1, %s4
  %s7 = scalar_select 0, %s6, %s4
  // Predicated region
  $region2: #{fcn_mt_forward.13} parent=0 // pred_check
    _
  $region3: #{fcn_mt_forward.13} parent=0 // pred_check_branch
    %9 = sbr.rel (0) target = $region5
  $region4: #{fcn_mt_forward.13} parent=0 // pred_region
    _
  $region5: #{fcn_mt_forward.13} parent=0 // pred_fallthru
    _
  // Predicated region
  $region6: #{fcn_mt_forward.13} parent=0 // pred_check
    _
  $region7: #{fcn_mt_forward.13} parent=0 // pred_check_branch
    %11 = sbr.rel (0) target = $region9
  $region8: #{fcn_mt_forward.13} parent=0 // pred_region
    _
  $region9: #{fcn_mt_forward.13} parent=0 // pred_fallthru
    _
  // Predicated region
  $region10: #{fcn_mt_forward.13} parent=0 // pred_check
    _
  $region11: #{fcn_mt_forward.13} parent=0 // pred_check_branch
    %13 = sbr.rel (0) target = $region13
  $region12: #{fcn_mt_forward.13} parent=0 // pred_region
    _
  $region13: #{fcn_mt_forward.13} parent=0 // pred_fallthru
    _
  %p14 = scmp.eq.s32.totalorder 0, 0
  // Predicated region
  $region14: #{fcn_mt_forward.13} parent=0 // pred_check
    %p15 = pneg %p14
  $region15: #{fcn_mt_forward.13} parent=0 // pred_check_branch
    %17 = sbr.rel (%p15) target = $region17
  $region16: #{fcn_mt_forward.13} parent=0 // pred_region
    %18 = vst [vmem:[#allocation2] sm:$0xff] 0.0
    %19 = vst [vmem:[#allocation2 + $0x8] sm:$0xff] 0.0
    %20 = vst [vmem:[#allocation2 + $0x10] sm:$0xff] 0.0
    %21 = vst [vmem:[#allocation2 + $0x18] sm:$0xff] 0.0
    %22 = vst [vmem:[#allocation2 + $0x20] sm:$0xff] 0.0
    %23 = vst [vmem:[#allocation2 + $0x28] sm:$0xff] 0.0
    %24 = vst [vmem:[#allocation2 + $0x30] sm:$0xff] 0.0
    %25 = vst [vmem:[#allocation2 + $0x38] sm:$0xff] 0.0
    %26 = vst [vmem:[#allocation2 + $0x40] sm:$0xff] 0.0
    %27 = vst [vmem:[#allocation2 + $0x48] sm:$0xff] 0.0
    %28 = vst [vmem:[#allocation2 + $0x50] sm:$0xff] 0.0
    %29 = vst [vmem:[#allocation2 + $0x58] sm:$0xff] 0.0
    %30 = vst [vmem:[#allocation2 + $0x60] sm:$0xff] 0.0
    %31 = vst [vmem:[#allocation2 + $0x68] sm:$0xff] 0.0
    %32 = vst [vmem:[#allocation2 + $0x70] sm:$0xff] 0.0
    %33 = vst [vmem:[#allocation2 + $0x78] sm:$0xff] 0.0
  $region17: #{fcn_mt_forward.13} parent=0 // pred_fallthru
    _
  %v34 = vld [vmem:[#allocation2] sm:$0xff]
  %v35 = vld [vmem:[#allocation2 + $0x8] sm:$0xff]
  %v36 = vld [vmem:[#allocation2 + $0x10] sm:$0xff]
  %v37 = vld [vmem:[#allocation2 + $0x18] sm:$0xff]
  %v38 = vld [vmem:[#allocation2 + $0x20] sm:$0xff]
  %v39 = vld [vmem:[#allocation2 + $0x28] sm:$0xff]
  %v40 = vld [vmem:[#allocation2 + $0x30] sm:$0xff]
  %v41 = vld [vmem:[#allocation2 + $0x38] sm:$0xff]
  %v42 = vld [vmem:[#allocation2 + $0x40] sm:$0xff]
  %v43 = vld [vmem:[#allocation2 + $0x48] sm:$0xff]
  %v44 = vld [vmem:[#allocation2 + $0x50] sm:$0xff]
  %v45 = vld [vmem:[#allocation2 + $0x58] sm:$0xff]
  %v46 = vld [vmem:[#allocation2 + $0x60] sm:$0xff]
  %v47 = vld [vmem:[#allocation2 + $0x68] sm:$0xff]
  %v48 = vld [vmem:[#allocation2 + $0x70] sm:$0xff]
  %v49 = vld [vmem:[#allocation2 + $0x78] sm:$0xff]
  %v50 = vld [vmem:[%s0] sm:$0xf]
  %v51 = vld [vmem:[%s0 + $0x4] sm:$0xf]
  %v52 = vld [vmem:[%s0 + $0x8] sm:$0xf]
  %v53 = vld [vmem:[%s0 + $0xc] sm:$0xf]
  %v54 = vld [vmem:[%s0 + $0x10] sm:$0xf]
  %v55 = vld [vmem:[%s0 + $0x14] sm:$0xf]
  %v56 = vld [vmem:[%s0 + $0x18] sm:$0xf]
  %v57 = vld [vmem:[%s0 + $0x1c] sm:$0xf]
  %v58 = vld [vmem:[%s0 + $0x20] sm:$0xf]
  %v59 = vld [vmem:[%s0 + $0x24] sm:$0xf]
  %v60 = vld [vmem:[%s0 + $0x28] sm:$0xf]
  %v61 = vld [vmem:[%s0 + $0x2c] sm:$0xf]
  %v62 = vld [vmem:[%s0 + $0x30] sm:$0xf]
  %v63 = vld [vmem:[%s0 + $0x34] sm:$0xf]
  %v64 = vld [vmem:[%s0 + $0x38] sm:$0xf]
  %v65 = vld [vmem:[%s0 + $0x3c] sm:$0xf]
  %v66 = vld [vmem:[%s1] sm:$0xf]
  %v67 = vld [vmem:[%s1 + $0x4] sm:$0xf]
  %v68 = vld [vmem:[%s1 + $0x8] sm:$0xf]
  %v69 = vld [vmem:[%s1 + $0xc] sm:$0xf]
  %v70 = vld [vmem:[%s1 + $0x10] sm:$0xf]
  %v71 = vld [vmem:[%s1 + $0x14] sm:$0xf]
  %v72 = vld [vmem:[%s1 + $0x18] sm:$0xf]
  %v73 = vld [vmem:[%s1 + $0x1c] sm:$0xf]
  %v74 = vld [vmem:[%s1 + $0x20] sm:$0xf]
  %v75 = vld [vmem:[%s1 + $0x24] sm:$0xf]
  %v76 = vld [vmem:[%s1 + $0x28] sm:$0xf]
  %v77 = vld [vmem:[%s1 + $0x2c] sm:$0xf]
  %v78 = vld [vmem:[%s1 + $0x30] sm:$0xf]
  %v79 = vld [vmem:[%s1 + $0x34] sm:$0xf]
  %v80 = vld [vmem:[%s1 + $0x38] sm:$0xf]
  %v81 = vld [vmem:[%s1 + $0x3c] sm:$0xf]
  %v98 = vunpack.c.l.b16 %v50
  %v99 = vunpack.c.l.b16 %v51
  %v100 = vunpack.c.l.b16 %v52
  %v101 = vunpack.c.l.b16 %v53
  %v102 = vunpack.c.l.b16 %v54
  %v103 = vunpack.c.l.b16 %v55
  %v104 = vunpack.c.l.b16 %v56
  %v105 = vunpack.c.l.b16 %v57
  %v106 = vunpack.c.l.b16 %v58
  %v107 = vunpack.c.l.b16 %v59
  %v108 = vunpack.c.l.b16 %v60
  %v109 = vunpack.c.l.b16 %v61
  %v110 = vunpack.c.l.b16 %v62
  %v111 = vunpack.c.l.b16 %v63
  %v112 = vunpack.c.l.b16 %v64
  %v113 = vunpack.c.l.b16 %v65
  %v114 = vpack.c.b16 %v99, %v98
  %v115 = vpack.c.b16 %v101, %v100
  %v116 = vpack.c.b16 %v103, %v102
  %v117 = vpack.c.b16 %v105, %v104
  %v118 = vpack.c.b16 %v107, %v106
  %v119 = vpack.c.b16 %v109, %v108
  %v120 = vpack.c.b16 %v111, %v110
  %v121 = vpack.c.b16 %v113, %v112
  %v146 = vunpack.c.l.b16 %v66
  %v147 = vunpack.c.l.b16 %v67
  %v148 = vunpack.c.l.b16 %v68
  %v149 = vunpack.c.l.b16 %v69
  %v150 = vunpack.c.l.b16 %v70
  %v151 = vunpack.c.l.b16 %v71
  %v152 = vunpack.c.l.b16 %v72
  %v153 = vunpack.c.l.b16 %v73
  %v154 = vunpack.c.l.b16 %v74
  %v155 = vunpack.c.l.b16 %v75
  %v156 = vunpack.c.l.b16 %v76
  %v157 = vunpack.c.l.b16 %v77
  %v158 = vunpack.c.l.b16 %v78
  %v159 = vunpack.c.l.b16 %v79
  %v160 = vunpack.c.l.b16 %v80
  %v161 = vunpack.c.l.b16 %v81
  %v162 = vpack.c.b16 %v147, %v146
  %v163 = vpack.c.b16 %v149, %v148
  %v164 = vpack.c.b16 %v151, %v150
  %v165 = vpack.c.b16 %v153, %v152
  %v166 = vpack.c.b16 %v155, %v154
  %v167 = vpack.c.b16 %v157, %v156
  %v168 = vpack.c.b16 %v159, %v158
  %v169 = vpack.c.b16 %v161, %v160
  %178 = vmatpush.bf16.msra.mxu0 %v169
  %179 = vmatpush.bf16.msra.mxu0 %v168
  %180 = vmatpush.bf16.msra.mxu0 %v167
  %181 = vmatpush.bf16.msra.mxu0 %v166
  %182 = vmatpush.bf16.msra.mxu0 %v165
  %183 = vmatpush.bf16.msra.mxu0 %v164
  %184 = vmatpush.bf16.msra.mxu0 %v163
  %185 = vmatpush.bf16.msra.mxu0 %v162
  %186 = vmatmul.bf16.gmra.mxu0 %v114
  %v187 = vpop.f32.mrf.mxu0
  %v188 = vadd.f32 0.0, %v187
  %v189 = vpop.f32.mrf.mxu0
  %v190 = vadd.f32 0.0, %v189
  %191 = vmatmul.bf16.gmra.mxu0 %v115
  %v192 = vpop.f32.mrf.mxu0
  %v193 = vadd.f32 0.0, %v192
  %v194 = vpop.f32.mrf.mxu0
  %v195 = vadd.f32 0.0, %v194
  %196 = vmatmul.bf16.gmra.mxu0 %v116
  %v197 = vpop.f32.mrf.mxu0
  %v198 = vadd.f32 0.0, %v197
  %v199 = vpop.f32.mrf.mxu0
  %v200 = vadd.f32 0.0, %v199
  %201 = vmatmul.bf16.gmra.mxu0 %v117
  %v202 = vpop.f32.mrf.mxu0
  %v203 = vadd.f32 0.0, %v202
  %v204 = vpop.f32.mrf.mxu0
  %v205 = vadd.f32 0.0, %v204
  %206 = vmatmul.bf16.gmra.mxu0 %v118
  %v207 = vpop.f32.mrf.mxu0
  %v208 = vadd.f32 0.0, %v207
  %v209 = vpop.f32.mrf.mxu0
  %v210 = vadd.f32 0.0, %v209
  %211 = vmatmul.bf16.gmra.mxu0 %v119
  %v212 = vpop.f32.mrf.mxu0
  %v213 = vadd.f32 0.0, %v212
  %v214 = vpop.f32.mrf.mxu0
  %v215 = vadd.f32 0.0, %v214
  %216 = vmatmul.bf16.gmra.mxu0 %v120
  %v217 = vpop.f32.mrf.mxu0
  %v218 = vadd.f32 0.0, %v217
  %v219 = vpop.f32.mrf.mxu0
  %v220 = vadd.f32 0.0, %v219
  %221 = vmatmul.bf16.gmra.mxu0 %v121
  %v222 = vpop.f32.mrf.mxu0
  %v223 = vadd.f32 0.0, %v222
  %v224 = vpop.f32.mrf.mxu0
  %v225 = vadd.f32 0.0, %v224
  %226 = vdwg.mxu0
  %v227 = vadd.f32 %v34, %v188
  %v228 = vadd.f32 %v35, %v190
  %v229 = vadd.f32 %v36, %v193
  %v230 = vadd.f32 %v37, %v195
  %v231 = vadd.f32 %v38, %v198
  %v232 = vadd.f32 %v39, %v200
  %v233 = vadd.f32 %v40, %v203
  %v234 = vadd.f32 %v41, %v205
  %v235 = vadd.f32 %v42, %v208
  %v236 = vadd.f32 %v43, %v210
  %v237 = vadd.f32 %v44, %v213
  %v238 = vadd.f32 %v45, %v215
  %v239 = vadd.f32 %v46, %v218
  %v240 = vadd.f32 %v47, %v220
  %v241 = vadd.f32 %v48, %v223
  %v242 = vadd.f32 %v49, %v225
  %243 = vst [vmem:[#allocation2] sm:$0xff] %v227
  %244 = vst [vmem:[#allocation2 + $0x8] sm:$0xff] %v228
  %245 = vst [vmem:[#allocation2 + $0x10] sm:$0xff] %v229
  %246 = vst [vmem:[#allocation2 + $0x18] sm:$0xff] %v230
  %247 = vst [vmem:[#allocation2 + $0x20] sm:$0xff] %v231
  %248 = vst [vmem:[#allocation2 + $0x28] sm:$0xff] %v232
  %249 = vst [vmem:[#allocation2 + $0x30] sm:$0xff] %v233
  %250 = vst [vmem:[#allocation2 + $0x38] sm:$0xff] %v234
  %251 = vst [vmem:[#allocation2 + $0x40] sm:$0xff] %v235
  %252 = vst [vmem:[#allocation2 + $0x48] sm:$0xff] %v236
  %253 = vst [vmem:[#allocation2 + $0x50] sm:$0xff] %v237
  %254 = vst [vmem:[#allocation2 + $0x58] sm:$0xff] %v238
  %255 = vst [vmem:[#allocation2 + $0x60] sm:$0xff] %v239
  %256 = vst [vmem:[#allocation2 + $0x68] sm:$0xff] %v240
  %257 = vst [vmem:[#allocation2 + $0x70] sm:$0xff] %v241
  %258 = vst [vmem:[#allocation2 + $0x78] sm:$0xff] %v242
  // Predicated region
  $region18: #{fcn_mt_forward.13} parent=0 // pred_check
    %p259 = pneg %p14
  $region19: #{fcn_mt_forward.13} parent=0 // pred_check_branch
    %261 = sbr.rel (%p259) target = $region21
  $region20: #{fcn_mt_forward.13} parent=0 // pred_region
    %v262 = vld [vmem:[#allocation2] sm:$0xff]
    %v263 = vld [vmem:[#allocation2 + $0x8] sm:$0xff]
    %v264 = vld [vmem:[#allocation2 + $0x10] sm:$0xff]
    %v265 = vld [vmem:[#allocation2 + $0x18] sm:$0xff]
    %v266 = vld [vmem:[#allocation2 + $0x20] sm:$0xff]
    %v267 = vld [vmem:[#allocation2 + $0x28] sm:$0xff]
    %v268 = vld [vmem:[#allocation2 + $0x30] sm:$0xff]
    %v269 = vld [vmem:[#allocation2 + $0x38] sm:$0xff]
    %v270 = vld [vmem:[#allocation2 + $0x40] sm:$0xff]
    %v271 = vld [vmem:[#allocation2 + $0x48] sm:$0xff]
    %v272 = vld [vmem:[#allocation2 + $0x50] sm:$0xff]
    %v273 = vld [vmem:[#allocation2 + $0x58] sm:$0xff]
    %v274 = vld [vmem:[#allocation2 + $0x60] sm:$0xff]
    %v275 = vld [vmem:[#allocation2 + $0x68] sm:$0xff]
    %v276 = vld [vmem:[#allocation2 + $0x70] sm:$0xff]
    %v277 = vld [vmem:[#allocation2 + $0x78] sm:$0xff]
    %v278 = vld [vmem:[%s2] sm:$0x1]
    %v280 = vperm.slane %v278, 0
    %v282 = vadd.f32 %v262, %v280
    %v283 = vadd.f32 %v263, %v280
    %v284 = vadd.f32 %v264, %v280
    %v285 = vadd.f32 %v265, %v280
    %v286 = vadd.f32 %v266, %v280
    %v287 = vadd.f32 %v267, %v280
    %v288 = vadd.f32 %v268, %v280
    %v289 = vadd.f32 %v269, %v280
    %v290 = vadd.f32 %v270, %v280
    %v291 = vadd.f32 %v271, %v280
    %v292 = vadd.f32 %v272, %v280
    %v293 = vadd.f32 %v273, %v280
    %v294 = vadd.f32 %v274, %v280
    %v295 = vadd.f32 %v275, %v280
    %v296 = vadd.f32 %v276, %v280
    %v297 = vadd.f32 %v277, %v280
    %v298 = vmax.f32 %v282, 0.0
    %v299 = vmax.f32 %v283, 0.0
    %v300 = vmax.f32 %v284, 0.0
    %v301 = vmax.f32 %v285, 0.0
    %v302 = vmax.f32 %v286, 0.0
    %v303 = vmax.f32 %v287, 0.0
    %v304 = vmax.f32 %v288, 0.0
    %v305 = vmax.f32 %v289, 0.0
    %v306 = vmax.f32 %v290, 0.0
    %v307 = vmax.f32 %v291, 0.0
    %v308 = vmax.f32 %v292, 0.0
    %v309 = vmax.f32 %v293, 0.0
    %v310 = vmax.f32 %v294, 0.0
    %v311 = vmax.f32 %v295, 0.0
    %v312 = vmax.f32 %v296, 0.0
    %v313 = vmax.f32 %v297, 0.0
    %314 = vst [vmem:[%s3] sm:$0xff] %v298
    %315 = vst [vmem:[%s3 + $0x8] sm:$0xff] %v299
    %316 = vst [vmem:[%s3 + $0x10] sm:$0xff] %v300
    %317 = vst [vmem:[%s3 + $0x18] sm:$0xff] %v301
    %318 = vst [vmem:[%s3 + $0x20] sm:$0xff] %v302
    %319 = vst [vmem:[%s3 + $0x28] sm:$0xff] %v303
    %320 = vst [vmem:[%s3 + $0x30] sm:$0xff] %v304
    %321 = vst [vmem:[%s3 + $0x38] sm:$0xff] %v305
    %322 = vst [vmem:[%s3 + $0x40] sm:$0xff] %v306
    %323 = vst [vmem:[%s3 + $0x48] sm:$0xff] %v307
    %324 = vst [vmem:[%s3 + $0x50] sm:$0xff] %v308
    %325 = vst [vmem:[%s3 + $0x58] sm:$0xff] %v309
    %326 = vst [vmem:[%s3 + $0x60] sm:$0xff] %v310
    %327 = vst [vmem:[%s3 + $0x68] sm:$0xff] %v311
    %328 = vst [vmem:[%s3 + $0x70] sm:$0xff] %v312
    %329 = vst [vmem:[%s3 + $0x78] sm:$0xff] %v313
  $region21: #{fcn_mt_forward.13} parent=0 // pred_fallthru
    _
  // Predicated region
  $region22: #{fcn_mt_forward.13} parent=0 // pred_check
    _
  $region23: #{fcn_mt_forward.13} parent=0 // pred_check_branch
    %331 = sbr.rel (0) target = $region25
  $region24: #{fcn_mt_forward.13} parent=0 // pred_region
    _
  $region25: #{fcn_mt_forward.13} parent=0 // pred_fallthru
    _
  // Predicated region
  $region26: #{fcn_mt_forward.13} parent=0 // pred_check
    _
  $region27: #{fcn_mt_forward.13} parent=0 // pred_check_branch
    %333 = sbr.rel (0) target = $region29
  $region28: #{fcn_mt_forward.13} parent=0 // pred_region
    _
  $region29: #{fcn_mt_forward.13} parent=0 // pred_fallthru
    _

// kernel: fcn_mt_forward.14
$region0: #{fcn_mt_forward.14}
  #allocation0 [shape = 'u32[]', space=smem, size = 0x4, offset = 0x4, fixed_abs, tag = 'smem constant byte address 0x4 - core index']
  #allocation1 [shape = 'u32[72,128]{1,0:T(1,128)}', space=vmem, size = 0x9000, scoped, tag = 'internal scratch']
  #allocation2 [shape = 'f32[32,128]{1,0:T(8,128)}', space=vmem, size = 0x4000, scoped, tag = 'scratch operand']
  %s0 = inlined_call_operand.vmem [shape: bf16[32,256], index: 0, kind: input, shape index: {}]
  %s1 = inlined_call_operand.vmem [shape: bf16[256,128], index: 1, kind: input, shape index: {}]
  %s2 = inlined_call_operand.vmem [shape: f32[1,128], index: 2, kind: input, shape index: {}]
  %s3 = inlined_call_operand.vmem [shape: f32[32,128], index: 3, kind: output, shape index: {}]
  %s4 = sld [smem:[#allocation0]]
  $region30: #{fcn_mt_forward.14} parent=0
    _
  %s6 = ssub.s32 1, %s4
  %s7 = scalar_select 0, %s6, %s4
  // Predicated region
  $region2: #{fcn_mt_forward.14} parent=0 // pred_check
    _
  $region3: #{fcn_mt_forward.14} parent=0 // pred_check_branch
    %9 = sbr.rel (0) target = $region5
  $region4: #{fcn_mt_forward.14} parent=0 // pred_region
    _
  $region5: #{fcn_mt_forward.14} parent=0 // pred_fallthru
    _
  // Predicated region
  $region6: #{fcn_mt_forward.14} parent=0 // pred_check
    _
  $region7: #{fcn_mt_forward.14} parent=0 // pred_check_branch
    %11 = sbr.rel (0) target = $region9
  $region8: #{fcn_mt_forward.14} parent=0 // pred_region
    _
  $region9: #{fcn_mt_forward.14} parent=0 // pred_fallthru
    _
  // Predicated region
  $region10: #{fcn_mt_forward.14} parent=0 // pred_check
    _
  $region11: #{fcn_mt_forward.14} parent=0 // pred_check_branch
    %13 = sbr.rel (0) target = $region13
  $region12: #{fcn_mt_forward.14} parent=0 // pred_region
    _
  $region13: #{fcn_mt_forward.14} parent=0 // pred_fallthru
    _
  %p14 = scmp.eq.s32.totalorder 0, 0
  // Predicated region
  $region14: #{fcn_mt_forward.14} parent=0 // pred_check
    %p15 = pneg %p14
  $region15: #{fcn_mt_forward.14} parent=0 // pred_check_branch
    %17 = sbr.rel (%p15) target = $region17
  $region16: #{fcn_mt_forward.14} parent=0 // pred_region
    %18 = vst [vmem:[#allocation2] sm:$0xff] 0.0
    %19 = vst [vmem:[#allocation2 + $0x8] sm:$0xff] 0.0
    %20 = vst [vmem:[#allocation2 + $0x10] sm:$0xff] 0.0
    %21 = vst [vmem:[#allocation2 + $0x18] sm:$0xff] 0.0
  $region17: #{fcn_mt_forward.14} parent=0 // pred_fallthru
    _
  %v22 = vld [vmem:[#allocation2] sm:$0xff]
  %v23 = vld [vmem:[#allocation2 + $0x8] sm:$0xff]
  %v24 = vld [vmem:[#allocation2 + $0x10] sm:$0xff]
  %v25 = vld [vmem:[#allocation2 + $0x18] sm:$0xff]
  %v26 = vld [vmem:[%s0] sm:$0xff]
  %v27 = vld [vmem:[%s0 + $0x8] sm:$0xff]
  %v28 = vld [vmem:[%s0 + $0x10] sm:$0xff]
  %v29 = vld [vmem:[%s0 + $0x18] sm:$0xff]
  %v30 = vld [vmem:[%s1] sm:$0xf]
  %v31 = vld [vmem:[%s1 + $0x4] sm:$0xf]
  %v32 = vld [vmem:[%s1 + $0x8] sm:$0xf]
  %v33 = vld [vmem:[%s1 + $0xc] sm:$0xf]
  %v34 = vld [vmem:[%s1 + $0x10] sm:$0xf]
  %v35 = vld [vmem:[%s1 + $0x14] sm:$0xf]
  %v36 = vld [vmem:[%s1 + $0x18] sm:$0xf]
  %v37 = vld [vmem:[%s1 + $0x1c] sm:$0xf]
  %v38 = vld [vmem:[%s1 + $0x20] sm:$0xf]
  %v39 = vld [vmem:[%s1 + $0x24] sm:$0xf]
  %v40 = vld [vmem:[%s1 + $0x28] sm:$0xf]
  %v41 = vld [vmem:[%s1 + $0x2c] sm:$0xf]
  %v42 = vld [vmem:[%s1 + $0x30] sm:$0xf]
  %v43 = vld [vmem:[%s1 + $0x34] sm:$0xf]
  %v44 = vld [vmem:[%s1 + $0x38] sm:$0xf]
  %v45 = vld [vmem:[%s1 + $0x3c] sm:$0xf]
  %v46 = vld [vmem:[%s1 + $0x40] sm:$0xf]
  %v47 = vld [vmem:[%s1 + $0x44] sm:$0xf]
  %v48 = vld [vmem:[%s1 + $0x48] sm:$0xf]
  %v49 = vld [vmem:[%s1 + $0x4c] sm:$0xf]
  %v50 = vld [vmem:[%s1 + $0x50] sm:$0xf]
  %v51 = vld [vmem:[%s1 + $0x54] sm:$0xf]
  %v52 = vld [vmem:[%s1 + $0x58] sm:$0xf]
  %v53 = vld [vmem:[%s1 + $0x5c] sm:$0xf]
  %v54 = vld [vmem:[%s1 + $0x60] sm:$0xf]
  %v55 = vld [vmem:[%s1 + $0x64] sm:$0xf]
  %v56 = vld [vmem:[%s1 + $0x68] sm:$0xf]
  %v57 = vld [vmem:[%s1 + $0x6c] sm:$0xf]
  %v58 = vld [vmem:[%s1 + $0x70] sm:$0xf]
  %v59 = vld [vmem:[%s1 + $0x74] sm:$0xf]
  %v60 = vld [vmem:[%s1 + $0x78] sm:$0xf]
  %v61 = vld [vmem:[%s1 + $0x7c] sm:$0xf]
  %v66 = vunpack.c.l.b16 %v26
  %v67 = vunpack.c.h.b16 %v26
  %v68 = vunpack.c.l.b16 %v27
  %v69 = vunpack.c.h.b16 %v27
  %v70 = vunpack.c.l.b16 %v28
  %v71 = vunpack.c.h.b16 %v28
  %v72 = vunpack.c.l.b16 %v29
  %v73 = vunpack.c.h.b16 %v29
  %v74 = vpack.c.b16 %v68, %v66
  %v75 = vpack.c.b16 %v69, %v67
  %v76 = vpack.c.b16 %v72, %v70
  %v77 = vpack.c.b16 %v73, %v71
  %v114 = vunpack.c.l.b16 %v30
  %v115 = vunpack.c.l.b16 %v31
  %v116 = vunpack.c.l.b16 %v32
  %v117 = vunpack.c.l.b16 %v33
  %v118 = vunpack.c.l.b16 %v34
  %v119 = vunpack.c.l.b16 %v35
  %v120 = vunpack.c.l.b16 %v36
  %v121 = vunpack.c.l.b16 %v37
  %v122 = vunpack.c.l.b16 %v38
  %v123 = vunpack.c.l.b16 %v39
  %v124 = vunpack.c.l.b16 %v40
  %v125 = vunpack.c.l.b16 %v41
  %v126 = vunpack.c.l.b16 %v42
  %v127 = vunpack.c.l.b16 %v43
  %v128 = vunpack.c.l.b16 %v44
  %v129 = vunpack.c.l.b16 %v45
  %v130 = vunpack.c.l.b16 %v46
  %v131 = vunpack.c.l.b16 %v47
  %v132 = vunpack.c.l.b16 %v48
  %v133 = vunpack.c.l.b16 %v49
  %v134 = vunpack.c.l.b16 %v50
  %v135 = vunpack.c.l.b16 %v51
  %v136 = vunpack.c.l.b16 %v52
  %v137 = vunpack.c.l.b16 %v53
  %v138 = vunpack.c.l.b16 %v54
  %v139 = vunpack.c.l.b16 %v55
  %v140 = vunpack.c.l.b16 %v56
  %v141 = vunpack.c.l.b16 %v57
  %v142 = vunpack.c.l.b16 %v58
  %v143 = vunpack.c.l.b16 %v59
  %v144 = vunpack.c.l.b16 %v60
  %v145 = vunpack.c.l.b16 %v61
  %v146 = vpack.c.b16 %v115, %v114
  %v147 = vpack.c.b16 %v117, %v116
  %v148 = vpack.c.b16 %v119, %v118
  %v149 = vpack.c.b16 %v121, %v120
  %v150 = vpack.c.b16 %v123, %v122
  %v151 = vpack.c.b16 %v125, %v124
  %v152 = vpack.c.b16 %v127, %v126
  %v153 = vpack.c.b16 %v129, %v128
  %v154 = vpack.c.b16 %v131, %v130
  %v155 = vpack.c.b16 %v133, %v132
  %v156 = vpack.c.b16 %v135, %v134
  %v157 = vpack.c.b16 %v137, %v136
  %v158 = vpack.c.b16 %v139, %v138
  %v159 = vpack.c.b16 %v141, %v140
  %v160 = vpack.c.b16 %v143, %v142
  %v161 = vpack.c.b16 %v145, %v144
  %178 = vmatpush.bf16.msra.mxu0 %v153
  %179 = vmatpush.bf16.msra.mxu0 %v152
  %180 = vmatpush.bf16.msra.mxu0 %v151
  %181 = vmatpush.bf16.msra.mxu0 %v150
  %182 = vmatpush.bf16.msra.mxu0 %v149
  %183 = vmatpush.bf16.msra.mxu0 %v148
  %184 = vmatpush.bf16.msra.mxu0 %v147
  %185 = vmatpush.bf16.msra.mxu0 %v146
  %186 = vmatmul.bf16.gmra.mxu0 %v74
  %v187 = vpop.f32.mrf.mxu0
  %v188 = vadd.f32 0.0, %v187
  %v189 = vpop.f32.mrf.mxu0
  %v190 = vadd.f32 0.0, %v189
  %191 = vmatmul.bf16.gmra.mxu0 %v76
  %v192 = vpop.f32.mrf.mxu0
  %v193 = vadd.f32 0.0, %v192
  %v194 = vpop.f32.mrf.mxu0
  %v195 = vadd.f32 0.0, %v194
  %196 = vdwg.mxu0
  %197 = vmatpush.bf16.msra.mxu0 %v161
  %198 = vmatpush.bf16.msra.mxu0 %v160
  %199 = vmatpush.bf16.msra.mxu0 %v159
  %200 = vmatpush.bf16.msra.mxu0 %v158
  %201 = vmatpush.bf16.msra.mxu0 %v157
  %202 = vmatpush.bf16.msra.mxu0 %v156
  %203 = vmatpush.bf16.msra.mxu0 %v155
  %204 = vmatpush.bf16.msra.mxu0 %v154
  %205 = vmatmul.bf16.gmra.mxu0 %v75
  %v206 = vpop.f32.mrf.mxu0
  %v207 = vadd.f32 %v188, %v206
  %v208 = vpop.f32.mrf.mxu0
  %v209 = vadd.f32 %v190, %v208
  %210 = vmatmul.bf16.gmra.mxu0 %v77
  %v211 = vpop.f32.mrf.mxu0
  %v212 = vadd.f32 %v193, %v211
  %v213 = vpop.f32.mrf.mxu0
  %v214 = vadd.f32 %v195, %v213
  %215 = vdwg.mxu0
  %v216 = vadd.f32 %v22, %v207
  %v217 = vadd.f32 %v23, %v209
  %v218 = vadd.f32 %v24, %v212
  %v219 = vadd.f32 %v25, %v214
  %220 = vst [vmem:[#allocation2] sm:$0xff] %v216
  %221 = vst [vmem:[#allocation2 + $0x8] sm:$0xff] %v217
  %222 = vst [vmem:[#allocation2 + $0x10] sm:$0xff] %v218
  %223 = vst [vmem:[#allocation2 + $0x18] sm:$0xff] %v219
  // Predicated region
  $region18: #{fcn_mt_forward.14} parent=0 // pred_check
    %p224 = pneg %p14
  $region19: #{fcn_mt_forward.14} parent=0 // pred_check_branch
    %226 = sbr.rel (%p224) target = $region21
  $region20: #{fcn_mt_forward.14} parent=0 // pred_region
    %v227 = vld [vmem:[#allocation2] sm:$0xff]
    %v228 = vld [vmem:[#allocation2 + $0x8] sm:$0xff]
    %v229 = vld [vmem:[#allocation2 + $0x10] sm:$0xff]
    %v230 = vld [vmem:[#allocation2 + $0x18] sm:$0xff]
    %v231 = vld [vmem:[%s2] sm:$0x1]
    %v233 = vperm.slane %v231, 0
    %v235 = vadd.f32 %v227, %v233
    %v236 = vadd.f32 %v228, %v233
    %v237 = vadd.f32 %v229, %v233
    %v238 = vadd.f32 %v230, %v233
    %v239 = vmax.f32 %v235, 0.0
    %v240 = vmax.f32 %v236, 0.0
    %v241 = vmax.f32 %v237, 0.0
    %v242 = vmax.f32 %v238, 0.0
    %243 = vst [vmem:[%s3] sm:$0xff] %v239
    %244 = vst [vmem:[%s3 + $0x8] sm:$0xff] %v240
    %245 = vst [vmem:[%s3 + $0x10] sm:$0xff] %v241
    %246 = vst [vmem:[%s3 + $0x18] sm:$0xff] %v242
  $region21: #{fcn_mt_forward.14} parent=0 // pred_fallthru
    _
  // Predicated region
  $region22: #{fcn_mt_forward.14} parent=0 // pred_check
    _
  $region23: #{fcn_mt_forward.14} parent=0 // pred_check_branch
    %248 = sbr.rel (0) target = $region25
  $region24: #{fcn_mt_forward.14} parent=0 // pred_region
    _
  $region25: #{fcn_mt_forward.14} parent=0 // pred_fallthru
    _
  // Predicated region
  $region26: #{fcn_mt_forward.14} parent=0 // pred_check
    _
  $region27: #{fcn_mt_forward.14} parent=0 // pred_check_branch
    %250 = sbr.rel (0) target = $region29
  $region28: #{fcn_mt_forward.14} parent=0 // pred_region
    _
  $region29: #{fcn_mt_forward.14} parent=0 // pred_fallthru
    _

// kernel: fcn_mt_forward.15
$region0: #{fcn_mt_forward.15}
  #allocation0 [shape = 'u32[]', space=smem, size = 0x4, offset = 0x4, fixed_abs, tag = 'smem constant byte address 0x4 - core index']
  #allocation1 [shape = 'u32[72,128]{1,0:T(1,128)}', space=vmem, size = 0x9000, scoped, tag = 'internal scratch']
  #allocation2 [shape = 'f32[32,128]{1,0:T(8,128)}', space=vmem, size = 0x4000, scoped, tag = 'scratch operand']
  %s0 = inlined_call_operand.vmem [shape: bf16[32,384], index: 0, kind: input, shape index: {}]
  %s1 = inlined_call_operand.vmem [shape: bf16[384,128], index: 1, kind: input, shape index: {}]
  %s2 = inlined_call_operand.vmem [shape: f32[1,128], index: 2, kind: input, shape index: {}]
  %s3 = inlined_call_operand.vmem [shape: f32[32,128], index: 3, kind: output, shape index: {}]
  %s4 = sld [smem:[#allocation0]]
  $region30: #{fcn_mt_forward.15} parent=0
    _
  %s6 = ssub.s32 1, %s4
  %s7 = scalar_select 0, %s6, %s4
  // Predicated region
  $region2: #{fcn_mt_forward.15} parent=0 // pred_check
    _
  $region3: #{fcn_mt_forward.15} parent=0 // pred_check_branch
    %9 = sbr.rel (0) target = $region5
  $region4: #{fcn_mt_forward.15} parent=0 // pred_region
    _
  $region5: #{fcn_mt_forward.15} parent=0 // pred_fallthru
    _
  // Predicated region
  $region6: #{fcn_mt_forward.15} parent=0 // pred_check
    _
  $region7: #{fcn_mt_forward.15} parent=0 // pred_check_branch
    %11 = sbr.rel (0) target = $region9
  $region8: #{fcn_mt_forward.15} parent=0 // pred_region
    _
  $region9: #{fcn_mt_forward.15} parent=0 // pred_fallthru
    _
  // Predicated region
  $region10: #{fcn_mt_forward.15} parent=0 // pred_check
    _
  $region11: #{fcn_mt_forward.15} parent=0 // pred_check_branch
    %13 = sbr.rel (0) target = $region13
  $region12: #{fcn_mt_forward.15} parent=0 // pred_region
    _
  $region13: #{fcn_mt_forward.15} parent=0 // pred_fallthru
    _
  %p14 = scmp.eq.s32.totalorder 0, 0
  // Predicated region
  $region14: #{fcn_mt_forward.15} parent=0 // pred_check
    %p15 = pneg %p14
  $region15: #{fcn_mt_forward.15} parent=0 // pred_check_branch
    %17 = sbr.rel (%p15) target = $region17
  $region16: #{fcn_mt_forward.15} parent=0 // pred_region
    %18 = vst [vmem:[#allocation2] sm:$0xff] 0.0
    %19 = vst [vmem:[#allocation2 + $0x8] sm:$0xff] 0.0
    %20 = vst [vmem:[#allocation2 + $0x10] sm:$0xff] 0.0
    %21 = vst [vmem:[#allocation2 + $0x18] sm:$0xff] 0.0
  $region17: #{fcn_mt_forward.15} parent=0 // pred_fallthru
    _
  %v22 = vld [vmem:[#allocation2] sm:$0xff]
  %v23 = vld [vmem:[#allocation2 + $0x8] sm:$0xff]
  %v24 = vld [vmem:[#allocation2 + $0x10] sm:$0xff]
  %v25 = vld [vmem:[#allocation2 + $0x18] sm:$0xff]
  %v26 = vld [vmem:[%s0] sm:$0xff]
  %v27 = vld [vmem:[%s0 + $0x8] sm:$0xf]
  %v28 = vld [vmem:[%s0 + $0xc] sm:$0xff]
  %v29 = vld [vmem:[%s0 + $0x14] sm:$0xf]
  %v30 = vld [vmem:[%s0 + $0x18] sm:$0xff]
  %v31 = vld [vmem:[%s0 + $0x20] sm:$0xf]
  %v32 = vld [vmem:[%s0 + $0x24] sm:$0xff]
  %v33 = vld [vmem:[%s0 + $0x2c] sm:$0xf]
  %v34 = vld [vmem:[%s1] sm:$0xf]
  %v35 = vld [vmem:[%s1 + $0x4] sm:$0xf]
  %v36 = vld [vmem:[%s1 + $0x8] sm:$0xf]
  %v37 = vld [vmem:[%s1 + $0xc] sm:$0xf]
  %v38 = vld [vmem:[%s1 + $0x10] sm:$0xf]
  %v39 = vld [vmem:[%s1 + $0x14] sm:$0xf]
  %v40 = vld [vmem:[%s1 + $0x18] sm:$0xf]
  %v41 = vld [vmem:[%s1 + $0x1c] sm:$0xf]
  %v42 = vld [vmem:[%s1 + $0x20] sm:$0xf]
  %v43 = vld [vmem:[%s1 + $0x24] sm:$0xf]
  %v44 = vld [vmem:[%s1 + $0x28] sm:$0xf]
  %v45 = vld [vmem:[%s1 + $0x2c] sm:$0xf]
  %v46 = vld [vmem:[%s1 + $0x30] sm:$0xf]
  %v47 = vld [vmem:[%s1 + $0x34] sm:$0xf]
  %v48 = vld [vmem:[%s1 + $0x38] sm:$0xf]
  %v49 = vld [vmem:[%s1 + $0x3c] sm:$0xf]
  %v50 = vld [vmem:[%s1 + $0x40] sm:$0xf]
  %v51 = vld [vmem:[%s1 + $0x44] sm:$0xf]
  %v52 = vld [vmem:[%s1 + $0x48] sm:$0xf]
  %v53 = vld [vmem:[%s1 + $0x4c] sm:$0xf]
  %v54 = vld [vmem:[%s1 + $0x50] sm:$0xf]
  %v55 = vld [vmem:[%s1 + $0x54] sm:$0xf]
  %v56 = vld [vmem:[%s1 + $0x58] sm:$0xf]
  %v57 = vld [vmem:[%s1 + $0x5c] sm:$0xf]
  %v58 = vld [vmem:[%s1 + $0x60] sm:$0xf]
  %v59 = vld [vmem:[%s1 + $0x64] sm:$0xf]
  %v60 = vld [vmem:[%s1 + $0x68] sm:$0xf]
  %v61 = vld [vmem:[%s1 + $0x6c] sm:$0xf]
  %v62 = vld [vmem:[%s1 + $0x70] sm:$0xf]
  %v63 = vld [vmem:[%s1 + $0x74] sm:$0xf]
  %v64 = vld [vmem:[%s1 + $0x78] sm:$0xf]
  %v65 = vld [vmem:[%s1 + $0x7c] sm:$0xf]
  %v66 = vld [vmem:[%s1 + $0x80] sm:$0xf]
  %v67 = vld [vmem:[%s1 + $0x84] sm:$0xf]
  %v68 = vld [vmem:[%s1 + $0x88] sm:$0xf]
  %v69 = vld [vmem:[%s1 + $0x8c] sm:$0xf]
  %v70 = vld [vmem:[%s1 + $0x90] sm:$0xf]
  %v71 = vld [vmem:[%s1 + $0x94] sm:$0xf]
  %v72 = vld [vmem:[%s1 + $0x98] sm:$0xf]
  %v73 = vld [vmem:[%s1 + $0x9c] sm:$0xf]
  %v74 = vld [vmem:[%s1 + $0xa0] sm:$0xf]
  %v75 = vld [vmem:[%s1 + $0xa4] sm:$0xf]
  %v76 = vld [vmem:[%s1 + $0xa8] sm:$0xf]
  %v77 = vld [vmem:[%s1 + $0xac] sm:$0xf]
  %v78 = vld [vmem:[%s1 + $0xb0] sm:$0xf]
  %v79 = vld [vmem:[%s1 + $0xb4] sm:$0xf]
  %v80 = vld [vmem:[%s1 + $0xb8] sm:$0xf]
  %v81 = vld [vmem:[%s1 + $0xbc] sm:$0xf]
  %v90 = vunpack.c.l.b16 %v26
  %v91 = vunpack.c.h.b16 %v26
  %v92 = vunpack.c.l.b16 %v27
  %v93 = vunpack.c.l.b16 %v28
  %v94 = vunpack.c.h.b16 %v28
  %v95 = vunpack.c.l.b16 %v29
  %v96 = vunpack.c.l.b16 %v30
  %v97 = vunpack.c.h.b16 %v30
  %v98 = vunpack.c.l.b16 %v31
  %v99 = vunpack.c.l.b16 %v32
  %v100 = vunpack.c.h.b16 %v32
  %v101 = vunpack.c.l.b16 %v33
  %v102 = vpack.c.b16 %v93, %v90
  %v103 = vpack.c.b16 %v94, %v91
  %v104 = vpack.c.b16 %v95, %v92
  %v105 = vpack.c.b16 %v99, %v96
  %v106 = vpack.c.b16 %v100, %v97
  %v107 = vpack.c.b16 %v101, %v98
  %v162 = vunpack.c.l.b16 %v34
  %v163 = vunpack.c.l.b16 %v35
  %v164 = vunpack.c.l.b16 %v36
  %v165 = vunpack.c.l.b16 %v37
  %v166 = vunpack.c.l.b16 %v38
  %v167 = vunpack.c.l.b16 %v39
  %v168 = vunpack.c.l.b16 %v40
  %v169 = vunpack.c.l.b16 %v41
  %v170 = vunpack.c.l.b16 %v42
  %v171 = vunpack.c.l.b16 %v43
  %v172 = vunpack.c.l.b16 %v44
  %v173 = vunpack.c.l.b16 %v45
  %v174 = vunpack.c.l.b16 %v46
  %v175 = vunpack.c.l.b16 %v47
  %v176 = vunpack.c.l.b16 %v48
  %v177 = vunpack.c.l.b16 %v49
  %v178 = vunpack.c.l.b16 %v50
  %v179 = vunpack.c.l.b16 %v51
  %v180 = vunpack.c.l.b16 %v52
  %v181 = vunpack.c.l.b16 %v53
  %v182 = vunpack.c.l.b16 %v54
  %v183 = vunpack.c.l.b16 %v55
  %v184 = vunpack.c.l.b16 %v56
  %v185 = vunpack.c.l.b16 %v57
  %v186 = vunpack.c.l.b16 %v58
  %v187 = vunpack.c.l.b16 %v59
  %v188 = vunpack.c.l.b16 %v60
  %v189 = vunpack.c.l.b16 %v61
  %v190 = vunpack.c.l.b16 %v62
  %v191 = vunpack.c.l.b16 %v63
  %v192 = vunpack.c.l.b16 %v64
  %v193 = vunpack.c.l.b16 %v65
  %v194 = vunpack.c.l.b16 %v66
  %v195 = vunpack.c.l.b16 %v67
  %v196 = vunpack.c.l.b16 %v68
  %v197 = vunpack.c.l.b16 %v69
  %v198 = vunpack.c.l.b16 %v70
  %v199 = vunpack.c.l.b16 %v71
  %v200 = vunpack.c.l.b16 %v72
  %v201 = vunpack.c.l.b16 %v73
  %v202 = vunpack.c.l.b16 %v74
  %v203 = vunpack.c.l.b16 %v75
  %v204 = vunpack.c.l.b16 %v76
  %v205 = vunpack.c.l.b16 %v77
  %v206 = vunpack.c.l.b16 %v78
  %v207 = vunpack.c.l.b16 %v79
  %v208 = vunpack.c.l.b16 %v80
  %v209 = vunpack.c.l.b16 %v81
  %v210 = vpack.c.b16 %v163, %v162
  %v211 = vpack.c.b16 %v165, %v164
  %v212 = vpack.c.b16 %v167, %v166
  %v213 = vpack.c.b16 %v169, %v168
  %v214 = vpack.c.b16 %v171, %v170
  %v215 = vpack.c.b16 %v173, %v172
  %v216 = vpack.c.b16 %v175, %v174
  %v217 = vpack.c.b16 %v177, %v176
  %v218 = vpack.c.b16 %v179, %v178
  %v219 = vpack.c.b16 %v181, %v180
  %v220 = vpack.c.b16 %v183, %v182
  %v221 = vpack.c.b16 %v185, %v184
  %v222 = vpack.c.b16 %v187, %v186
  %v223 = vpack.c.b16 %v189, %v188
  %v224 = vpack.c.b16 %v191, %v190
  %v225 = vpack.c.b16 %v193, %v192
  %v226 = vpack.c.b16 %v195, %v194
  %v227 = vpack.c.b16 %v197, %v196
  %v228 = vpack.c.b16 %v199, %v198
  %v229 = vpack.c.b16 %v201, %v200
  %v230 = vpack.c.b16 %v203, %v202
  %v231 = vpack.c.b16 %v205, %v204
  %v232 = vpack.c.b16 %v207, %v206
  %v233 = vpack.c.b16 %v209, %v208
  %258 = vmatpush.bf16.msra.mxu0 %v217
  %259 = vmatpush.bf16.msra.mxu0 %v216
  %260 = vmatpush.bf16.msra.mxu0 %v215
  %261 = vmatpush.bf16.msra.mxu0 %v214
  %262 = vmatpush.bf16.msra.mxu0 %v213
  %263 = vmatpush.bf16.msra.mxu0 %v212
  %264 = vmatpush.bf16.msra.mxu0 %v211
  %265 = vmatpush.bf16.msra.mxu0 %v210
  %266 = vmatmul.bf16.gmra.mxu0 %v102
  %v267 = vpop.f32.mrf.mxu0
  %v268 = vadd.f32 0.0, %v267
  %v269 = vpop.f32.mrf.mxu0
  %v270 = vadd.f32 0.0, %v269
  %271 = vmatmul.bf16.gmra.mxu0 %v105
  %v272 = vpop.f32.mrf.mxu0
  %v273 = vadd.f32 0.0, %v272
  %v274 = vpop.f32.mrf.mxu0
  %v275 = vadd.f32 0.0, %v274
  %276 = vdwg.mxu0
  %277 = vmatpush.bf16.msra.mxu0 %v225
  %278 = vmatpush.bf16.msra.mxu0 %v224
  %279 = vmatpush.bf16.msra.mxu0 %v223
  %280 = vmatpush.bf16.msra.mxu0 %v222
  %281 = vmatpush.bf16.msra.mxu0 %v221
  %282 = vmatpush.bf16.msra.mxu0 %v220
  %283 = vmatpush.bf16.msra.mxu0 %v219
  %284 = vmatpush.bf16.msra.mxu0 %v218
  %285 = vmatmul.bf16.gmra.mxu0 %v103
  %v286 = vpop.f32.mrf.mxu0
  %v287 = vadd.f32 %v268, %v286
  %v288 = vpop.f32.mrf.mxu0
  %v289 = vadd.f32 %v270, %v288
  %290 = vmatmul.bf16.gmra.mxu0 %v106
  %v291 = vpop.f32.mrf.mxu0
  %v292 = vadd.f32 %v273, %v291
  %v293 = vpop.f32.mrf.mxu0
  %v294 = vadd.f32 %v275, %v293
  %295 = vdwg.mxu0
  %296 = vmatpush.bf16.msra.mxu0 %v233
  %297 = vmatpush.bf16.msra.mxu0 %v232
  %298 = vmatpush.bf16.msra.mxu0 %v231
  %299 = vmatpush.bf16.msra.mxu0 %v230
  %300 = vmatpush.bf16.msra.mxu0 %v229
  %301 = vmatpush.bf16.msra.mxu0 %v228
  %302 = vmatpush.bf16.msra.mxu0 %v227
  %303 = vmatpush.bf16.msra.mxu0 %v226
  %304 = vmatmul.bf16.gmra.mxu0 %v104
  %v305 = vpop.f32.mrf.mxu0
  %v306 = vadd.f32 %v287, %v305
  %v307 = vpop.f32.mrf.mxu0
  %v308 = vadd.f32 %v289, %v307
  %309 = vmatmul.bf16.gmra.mxu0 %v107
  %v310 = vpop.f32.mrf.mxu0
  %v311 = vadd.f32 %v292, %v310
  %v312 = vpop.f32.mrf.mxu0
  %v313 = vadd.f32 %v294, %v312
  %314 = vdwg.mxu0
  %v315 = vadd.f32 %v22, %v306
  %v316 = vadd.f32 %v23, %v308
  %v317 = vadd.f32 %v24, %v311
  %v318 = vadd.f32 %v25, %v313
  %319 = vst [vmem:[#allocation2] sm:$0xff] %v315
  %320 = vst [vmem:[#allocation2 + $0x8] sm:$0xff] %v316
  %321 = vst [vmem:[#allocation2 + $0x10] sm:$0xff] %v317
  %322 = vst [vmem:[#allocation2 + $0x18] sm:$0xff] %v318
  // Predicated region
  $region18: #{fcn_mt_forward.15} parent=0 // pred_check
    %p323 = pneg %p14
  $region19: #{fcn_mt_forward.15} parent=0 // pred_check_branch
    %325 = sbr.rel (%p323) target = $region21
  $region20: #{fcn_mt_forward.15} parent=0 // pred_region
    %v326 = vld [vmem:[#allocation2] sm:$0xff]
    %v327 = vld [vmem:[#allocation2 + $0x8] sm:$0xff]
    %v328 = vld [vmem:[#allocation2 + $0x10] sm:$0xff]
    %v329 = vld [vmem:[#allocation2 + $0x18] sm:$0xff]
    %v330 = vld [vmem:[%s2] sm:$0x1]
    %v332 = vperm.slane %v330, 0
    %v334 = vadd.f32 %v326, %v332
    %v335 = vadd.f32 %v327, %v332
    %v336 = vadd.f32 %v328, %v332
    %v337 = vadd.f32 %v329, %v332
    %v338 = vmax.f32 %v334, 0.0
    %v339 = vmax.f32 %v335, 0.0
    %v340 = vmax.f32 %v336, 0.0
    %v341 = vmax.f32 %v337, 0.0
    %342 = vst [vmem:[%s3] sm:$0xff] %v338
    %343 = vst [vmem:[%s3 + $0x8] sm:$0xff] %v339
    %344 = vst [vmem:[%s3 + $0x10] sm:$0xff] %v340
    %345 = vst [vmem:[%s3 + $0x18] sm:$0xff] %v341
  $region21: #{fcn_mt_forward.15} parent=0 // pred_fallthru
    _
  // Predicated region
  $region22: #{fcn_mt_forward.15} parent=0 // pred_check
    _
  $region23: #{fcn_mt_forward.15} parent=0 // pred_check_branch
    %347 = sbr.rel (0) target = $region25
  $region24: #{fcn_mt_forward.15} parent=0 // pred_region
    _
  $region25: #{fcn_mt_forward.15} parent=0 // pred_fallthru
    _
  // Predicated region
  $region26: #{fcn_mt_forward.15} parent=0 // pred_check
    _
  $region27: #{fcn_mt_forward.15} parent=0 // pred_check_branch
    %349 = sbr.rel (0) target = $region29
  $region28: #{fcn_mt_forward.15} parent=0 // pred_region
    _
  $region29: #{fcn_mt_forward.15} parent=0 // pred_fallthru
    _

// kernel: fcn_mt_forward.16
$region0: #{fcn_mt_forward.16}
  #allocation0 [shape = 'u32[]', space=smem, size = 0x4, offset = 0x4, fixed_abs, tag = 'smem constant byte address 0x4 - core index']
  #allocation1 [shape = 'u32[72,128]{1,0:T(1,128)}', space=vmem, size = 0x9000, scoped, tag = 'internal scratch']
  #allocation2 [shape = 'f32[32,128]{1,0:T(8,128)}', space=vmem, size = 0x4000, scoped, tag = 'scratch operand']
  %s0 = inlined_call_operand.vmem [shape: bf16[32,384], index: 0, kind: input, shape index: {}]
  %s1 = inlined_call_operand.vmem [shape: bf16[384,128], index: 1, kind: input, shape index: {}]
  %s2 = inlined_call_operand.vmem [shape: f32[1,128], index: 2, kind: input, shape index: {}]
  %s3 = inlined_call_operand.vmem [shape: f32[32,128], index: 3, kind: input, shape index: {}]
  %s4 = inlined_call_operand.vmem [shape: f32[32,128], index: 4, kind: output, shape index: {}]
  %s5 = sld [smem:[#allocation0]]
  $region34: #{fcn_mt_forward.16} parent=0
    _
  %s7 = ssub.s32 1, %s5
  %s8 = scalar_select 0, %s7, %s5
  // Predicated region
  $region2: #{fcn_mt_forward.16} parent=0 // pred_check
    _
  $region3: #{fcn_mt_forward.16} parent=0 // pred_check_branch
    %10 = sbr.rel (0) target = $region5
  $region4: #{fcn_mt_forward.16} parent=0 // pred_region
    _
  $region5: #{fcn_mt_forward.16} parent=0 // pred_fallthru
    _
  // Predicated region
  $region6: #{fcn_mt_forward.16} parent=0 // pred_check
    _
  $region7: #{fcn_mt_forward.16} parent=0 // pred_check_branch
    %12 = sbr.rel (0) target = $region9
  $region8: #{fcn_mt_forward.16} parent=0 // pred_region
    _
  $region9: #{fcn_mt_forward.16} parent=0 // pred_fallthru
    _
  // Predicated region
  $region10: #{fcn_mt_forward.16} parent=0 // pred_check
    _
  $region11: #{fcn_mt_forward.16} parent=0 // pred_check_branch
    %14 = sbr.rel (0) target = $region13
  $region12: #{fcn_mt_forward.16} parent=0 // pred_region
    _
  $region13: #{fcn_mt_forward.16} parent=0 // pred_fallthru
    _
  // Predicated region
  $region14: #{fcn_mt_forward.16} parent=0 // pred_check
    _
  $region15: #{fcn_mt_forward.16} parent=0 // pred_check_branch
    %16 = sbr.rel (0) target = $region17
  $region16: #{fcn_mt_forward.16} parent=0 // pred_region
    _
  $region17: #{fcn_mt_forward.16} parent=0 // pred_fallthru
    _
  %p17 = scmp.eq.s32.totalorder 0, 0
  // Predicated region
  $region18: #{fcn_mt_forward.16} parent=0 // pred_check
    %p18 = pneg %p17
  $region19: #{fcn_mt_forward.16} parent=0 // pred_check_branch
    %20 = sbr.rel (%p18) target = $region21
  $region20: #{fcn_mt_forward.16} parent=0 // pred_region
    %21 = vst [vmem:[#allocation2] sm:$0xff] 0.0
    %22 = vst [vmem:[#allocation2 + $0x8] sm:$0xff] 0.0
    %23 = vst [vmem:[#allocation2 + $0x10] sm:$0xff] 0.0
    %24 = vst [vmem:[#allocation2 + $0x18] sm:$0xff] 0.0
  $region21: #{fcn_mt_forward.16} parent=0 // pred_fallthru
    _
  %v25 = vld [vmem:[#allocation2] sm:$0xff]
  %v26 = vld [vmem:[#allocation2 + $0x8] sm:$0xff]
  %v27 = vld [vmem:[#allocation2 + $0x10] sm:$0xff]
  %v28 = vld [vmem:[#allocation2 + $0x18] sm:$0xff]
  %v29 = vld [vmem:[%s0] sm:$0xff]
  %v30 = vld [vmem:[%s0 + $0x8] sm:$0xf]
  %v31 = vld [vmem:[%s0 + $0xc] sm:$0xff]
  %v32 = vld [vmem:[%s0 + $0x14] sm:$0xf]
  %v33 = vld [vmem:[%s0 + $0x18] sm:$0xff]
  %v34 = vld [vmem:[%s0 + $0x20] sm:$0xf]
  %v35 = vld [vmem:[%s0 + $0x24] sm:$0xff]
  %v36 = vld [vmem:[%s0 + $0x2c] sm:$0xf]
  %v37 = vld [vmem:[%s1] sm:$0xf]
  %v38 = vld [vmem:[%s1 + $0x4] sm:$0xf]
  %v39 = vld [vmem:[%s1 + $0x8] sm:$0xf]
  %v40 = vld [vmem:[%s1 + $0xc] sm:$0xf]
  %v41 = vld [vmem:[%s1 + $0x10] sm:$0xf]
  %v42 = vld [vmem:[%s1 + $0x14] sm:$0xf]
  %v43 = vld [vmem:[%s1 + $0x18] sm:$0xf]
  %v44 = vld [vmem:[%s1 + $0x1c] sm:$0xf]
  %v45 = vld [vmem:[%s1 + $0x20] sm:$0xf]
  %v46 = vld [vmem:[%s1 + $0x24] sm:$0xf]
  %v47 = vld [vmem:[%s1 + $0x28] sm:$0xf]
  %v48 = vld [vmem:[%s1 + $0x2c] sm:$0xf]
  %v49 = vld [vmem:[%s1 + $0x30] sm:$0xf]
  %v50 = vld [vmem:[%s1 + $0x34] sm:$0xf]
  %v51 = vld [vmem:[%s1 + $0x38] sm:$0xf]
  %v52 = vld [vmem:[%s1 + $0x3c] sm:$0xf]
  %v53 = vld [vmem:[%s1 + $0x40] sm:$0xf]
  %v54 = vld [vmem:[%s1 + $0x44] sm:$0xf]
  %v55 = vld [vmem:[%s1 + $0x48] sm:$0xf]
  %v56 = vld [vmem:[%s1 + $0x4c] sm:$0xf]
  %v57 = vld [vmem:[%s1 + $0x50] sm:$0xf]
  %v58 = vld [vmem:[%s1 + $0x54] sm:$0xf]
  %v59 = vld [vmem:[%s1 + $0x58] sm:$0xf]
  %v60 = vld [vmem:[%s1 + $0x5c] sm:$0xf]
  %v61 = vld [vmem:[%s1 + $0x60] sm:$0xf]
  %v62 = vld [vmem:[%s1 + $0x64] sm:$0xf]
  %v63 = vld [vmem:[%s1 + $0x68] sm:$0xf]
  %v64 = vld [vmem:[%s1 + $0x6c] sm:$0xf]
  %v65 = vld [vmem:[%s1 + $0x70] sm:$0xf]
  %v66 = vld [vmem:[%s1 + $0x74] sm:$0xf]
  %v67 = vld [vmem:[%s1 + $0x78] sm:$0xf]
  %v68 = vld [vmem:[%s1 + $0x7c] sm:$0xf]
  %v69 = vld [vmem:[%s1 + $0x80] sm:$0xf]
  %v70 = vld [vmem:[%s1 + $0x84] sm:$0xf]
  %v71 = vld [vmem:[%s1 + $0x88] sm:$0xf]
  %v72 = vld [vmem:[%s1 + $0x8c] sm:$0xf]
  %v73 = vld [vmem:[%s1 + $0x90] sm:$0xf]
  %v74 = vld [vmem:[%s1 + $0x94] sm:$0xf]
  %v75 = vld [vmem:[%s1 + $0x98] sm:$0xf]
  %v76 = vld [vmem:[%s1 + $0x9c] sm:$0xf]
  %v77 = vld [vmem:[%s1 + $0xa0] sm:$0xf]
  %v78 = vld [vmem:[%s1 + $0xa4] sm:$0xf]
  %v79 = vld [vmem:[%s1 + $0xa8] sm:$0xf]
  %v80 = vld [vmem:[%s1 + $0xac] sm:$0xf]
  %v81 = vld [vmem:[%s1 + $0xb0] sm:$0xf]
  %v82 = vld [vmem:[%s1 + $0xb4] sm:$0xf]
  %v83 = vld [vmem:[%s1 + $0xb8] sm:$0xf]
  %v84 = vld [vmem:[%s1 + $0xbc] sm:$0xf]
  %v93 = vunpack.c.l.b16 %v29
  %v94 = vunpack.c.h.b16 %v29
  %v95 = vunpack.c.l.b16 %v30
  %v96 = vunpack.c.l.b16 %v31
  %v97 = vunpack.c.h.b16 %v31
  %v98 = vunpack.c.l.b16 %v32
  %v99 = vunpack.c.l.b16 %v33
  %v100 = vunpack.c.h.b16 %v33
  %v101 = vunpack.c.l.b16 %v34
  %v102 = vunpack.c.l.b16 %v35
  %v103 = vunpack.c.h.b16 %v35
  %v104 = vunpack.c.l.b16 %v36
  %v105 = vpack.c.b16 %v96, %v93
  %v106 = vpack.c.b16 %v97, %v94
  %v107 = vpack.c.b16 %v98, %v95
  %v108 = vpack.c.b16 %v102, %v99
  %v109 = vpack.c.b16 %v103, %v100
  %v110 = vpack.c.b16 %v104, %v101
  %v165 = vunpack.c.l.b16 %v37
  %v166 = vunpack.c.l.b16 %v38
  %v167 = vunpack.c.l.b16 %v39
  %v168 = vunpack.c.l.b16 %v40
  %v169 = vunpack.c.l.b16 %v41
  %v170 = vunpack.c.l.b16 %v42
  %v171 = vunpack.c.l.b16 %v43
  %v172 = vunpack.c.l.b16 %v44
  %v173 = vunpack.c.l.b16 %v45
  %v174 = vunpack.c.l.b16 %v46
  %v175 = vunpack.c.l.b16 %v47
  %v176 = vunpack.c.l.b16 %v48
  %v177 = vunpack.c.l.b16 %v49
  %v178 = vunpack.c.l.b16 %v50
  %v179 = vunpack.c.l.b16 %v51
  %v180 = vunpack.c.l.b16 %v52
  %v181 = vunpack.c.l.b16 %v53
  %v182 = vunpack.c.l.b16 %v54
  %v183 = vunpack.c.l.b16 %v55
  %v184 = vunpack.c.l.b16 %v56
  %v185 = vunpack.c.l.b16 %v57
  %v186 = vunpack.c.l.b16 %v58
  %v187 = vunpack.c.l.b16 %v59
  %v188 = vunpack.c.l.b16 %v60
  %v189 = vunpack.c.l.b16 %v61
  %v190 = vunpack.c.l.b16 %v62
  %v191 = vunpack.c.l.b16 %v63
  %v192 = vunpack.c.l.b16 %v64
  %v193 = vunpack.c.l.b16 %v65
  %v194 = vunpack.c.l.b16 %v66
  %v195 = vunpack.c.l.b16 %v67
  %v196 = vunpack.c.l.b16 %v68
  %v197 = vunpack.c.l.b16 %v69
  %v198 = vunpack.c.l.b16 %v70
  %v199 = vunpack.c.l.b16 %v71
  %v200 = vunpack.c.l.b16 %v72
  %v201 = vunpack.c.l.b16 %v73
  %v202 = vunpack.c.l.b16 %v74
  %v203 = vunpack.c.l.b16 %v75
  %v204 = vunpack.c.l.b16 %v76
  %v205 = vunpack.c.l.b16 %v77
  %v206 = vunpack.c.l.b16 %v78
  %v207 = vunpack.c.l.b16 %v79
  %v208 = vunpack.c.l.b16 %v80
  %v209 = vunpack.c.l.b16 %v81
  %v210 = vunpack.c.l.b16 %v82
  %v211 = vunpack.c.l.b16 %v83
  %v212 = vunpack.c.l.b16 %v84
  %v213 = vpack.c.b16 %v166, %v165
  %v214 = vpack.c.b16 %v168, %v167
  %v215 = vpack.c.b16 %v170, %v169
  %v216 = vpack.c.b16 %v172, %v171
  %v217 = vpack.c.b16 %v174, %v173
  %v218 = vpack.c.b16 %v176, %v175
  %v219 = vpack.c.b16 %v178, %v177
  %v220 = vpack.c.b16 %v180, %v179
  %v221 = vpack.c.b16 %v182, %v181
  %v222 = vpack.c.b16 %v184, %v183
  %v223 = vpack.c.b16 %v186, %v185
  %v224 = vpack.c.b16 %v188, %v187
  %v225 = vpack.c.b16 %v190, %v189
  %v226 = vpack.c.b16 %v192, %v191
  %v227 = vpack.c.b16 %v194, %v193
  %v228 = vpack.c.b16 %v196, %v195
  %v229 = vpack.c.b16 %v198, %v197
  %v230 = vpack.c.b16 %v200, %v199
  %v231 = vpack.c.b16 %v202, %v201
  %v232 = vpack.c.b16 %v204, %v203
  %v233 = vpack.c.b16 %v206, %v205
  %v234 = vpack.c.b16 %v208, %v207
  %v235 = vpack.c.b16 %v210, %v209
  %v236 = vpack.c.b16 %v212, %v211
  %261 = vmatpush.bf16.msra.mxu0 %v220
  %262 = vmatpush.bf16.msra.mxu0 %v219
  %263 = vmatpush.bf16.msra.mxu0 %v218
  %264 = vmatpush.bf16.msra.mxu0 %v217
  %265 = vmatpush.bf16.msra.mxu0 %v216
  %266 = vmatpush.bf16.msra.mxu0 %v215
  %267 = vmatpush.bf16.msra.mxu0 %v214
  %268 = vmatpush.bf16.msra.mxu0 %v213
  %269 = vmatmul.bf16.gmra.mxu0 %v105
  %v270 = vpop.f32.mrf.mxu0
  %v271 = vadd.f32 0.0, %v270
  %v272 = vpop.f32.mrf.mxu0
  %v273 = vadd.f32 0.0, %v272
  %274 = vmatmul.bf16.gmra.mxu0 %v108
  %v275 = vpop.f32.mrf.mxu0
  %v276 = vadd.f32 0.0, %v275
  %v277 = vpop.f32.mrf.mxu0
  %v278 = vadd.f32 0.0, %v277
  %279 = vdwg.mxu0
  %280 = vmatpush.bf16.msra.mxu0 %v228
  %281 = vmatpush.bf16.msra.mxu0 %v227
  %282 = vmatpush.bf16.msra.mxu0 %v226
  %283 = vmatpush.bf16.msra.mxu0 %v225
  %284 = vmatpush.bf16.msra.mxu0 %v224
  %285 = vmatpush.bf16.msra.mxu0 %v223
  %286 = vmatpush.bf16.msra.mxu0 %v222
  %287 = vmatpush.bf16.msra.mxu0 %v221
  %288 = vmatmul.bf16.gmra.mxu0 %v106
  %v289 = vpop.f32.mrf.mxu0
  %v290 = vadd.f32 %v271, %v289
  %v291 = vpop.f32.mrf.mxu0
  %v292 = vadd.f32 %v273, %v291
  %293 = vmatmul.bf16.gmra.mxu0 %v109
  %v294 = vpop.f32.mrf.mxu0
  %v295 = vadd.f32 %v276, %v294
  %v296 = vpop.f32.mrf.mxu0
  %v297 = vadd.f32 %v278, %v296
  %298 = vdwg.mxu0
  %299 = vmatpush.bf16.msra.mxu0 %v236
  %300 = vmatpush.bf16.msra.mxu0 %v235
  %301 = vmatpush.bf16.msra.mxu0 %v234
  %302 = vmatpush.bf16.msra.mxu0 %v233
  %303 = vmatpush.bf16.msra.mxu0 %v232
  %304 = vmatpush.bf16.msra.mxu0 %v231
  %305 = vmatpush.bf16.msra.mxu0 %v230
  %306 = vmatpush.bf16.msra.mxu0 %v229
  %307 = vmatmul.bf16.gmra.mxu0 %v107
  %v308 = vpop.f32.mrf.mxu0
  %v309 = vadd.f32 %v290, %v308
  %v310 = vpop.f32.mrf.mxu0
  %v311 = vadd.f32 %v292, %v310
  %312 = vmatmul.bf16.gmra.mxu0 %v110
  %v313 = vpop.f32.mrf.mxu0
  %v314 = vadd.f32 %v295, %v313
  %v315 = vpop.f32.mrf.mxu0
  %v316 = vadd.f32 %v297, %v315
  %317 = vdwg.mxu0
  %v318 = vadd.f32 %v25, %v309
  %v319 = vadd.f32 %v26, %v311
  %v320 = vadd.f32 %v27, %v314
  %v321 = vadd.f32 %v28, %v316
  %322 = vst [vmem:[#allocation2] sm:$0xff] %v318
  %323 = vst [vmem:[#allocation2 + $0x8] sm:$0xff] %v319
  %324 = vst [vmem:[#allocation2 + $0x10] sm:$0xff] %v320
  %325 = vst [vmem:[#allocation2 + $0x18] sm:$0xff] %v321
  // Predicated region
  $region22: #{fcn_mt_forward.16} parent=0 // pred_check
    %p326 = pneg %p17
  $region23: #{fcn_mt_forward.16} parent=0 // pred_check_branch
    %328 = sbr.rel (%p326) target = $region25
  $region24: #{fcn_mt_forward.16} parent=0 // pred_region
    %v329 = vld [vmem:[#allocation2] sm:$0xff]
    %v330 = vld [vmem:[#allocation2 + $0x8] sm:$0xff]
    %v331 = vld [vmem:[#allocation2 + $0x10] sm:$0xff]
    %v332 = vld [vmem:[#allocation2 + $0x18] sm:$0xff]
    %v333 = vld [vmem:[%s2] sm:$0x1]
    %v335 = vperm.slane %v333, 0
    %v337 = vadd.f32 %v329, %v335
    %v338 = vadd.f32 %v330, %v335
    %v339 = vadd.f32 %v331, %v335
    %v340 = vadd.f32 %v332, %v335
    %v341 = vld [vmem:[%s3] sm:$0xff]
    %v342 = vld [vmem:[%s3 + $0x8] sm:$0xff]
    %v343 = vld [vmem:[%s3 + $0x10] sm:$0xff]
    %v344 = vld [vmem:[%s3 + $0x18] sm:$0xff]
    %v345 = vadd.f32 %v337, %v341
    %v346 = vadd.f32 %v338, %v342
    %v347 = vadd.f32 %v339, %v343
    %v348 = vadd.f32 %v340, %v344
    %v349 = vmax.f32 %v345, 0.0
    %v350 = vmax.f32 %v346, 0.0
    %v351 = vmax.f32 %v347, 0.0
    %v352 = vmax.f32 %v348, 0.0
    %353 = vst [vmem:[%s4] sm:$0xff] %v349
    %354 = vst [vmem:[%s4 + $0x8] sm:$0xff] %v350
    %355 = vst [vmem:[%s4 + $0x10] sm:$0xff] %v351
    %356 = vst [vmem:[%s4 + $0x18] sm:$0xff] %v352
  $region25: #{fcn_mt_forward.16} parent=0 // pred_fallthru
    _
  // Predicated region
  $region26: #{fcn_mt_forward.16} parent=0 // pred_check
    _
  $region27: #{fcn_mt_forward.16} parent=0 // pred_check_branch
    %358 = sbr.rel (0) target = $region29
  $region28: #{fcn_mt_forward.16} parent=0 // pred_region
    _
  $region29: #{fcn_mt_forward.16} parent=0 // pred_fallthru
    _
  // Predicated region
  $region30: #{fcn_mt_forward.16} parent=0 // pred_check
    _
  $region31: #{fcn_mt_forward.16} parent=0 // pred_check_branch
    %360 = sbr.rel (0) target = $region33
  $region32: #{fcn_mt_forward.16} parent=0 // pred_region
    _
  $region33: #{fcn_mt_forward.16} parent=0 // pred_fallthru
    _

// kernel: fcn_mt_forward.17
$region0: #{fcn_mt_forward.17}
  #allocation0 [shape = 'u32[]', space=smem, size = 0x4, offset = 0x4, fixed_abs, tag = 'smem constant byte address 0x4 - core index']
  #allocation1 [shape = 'u32[72,128]{1,0:T(1,128)}', space=vmem, size = 0x9000, scoped, tag = 'internal scratch']
  #allocation2 [shape = 'f32[32,128]{1,0:T(8,128)}', space=vmem, size = 0x4000, scoped, tag = 'scratch operand']
  %s0 = inlined_call_operand.vmem [shape: bf16[32,128], index: 0, kind: input, shape index: {}]
  %s1 = inlined_call_operand.vmem [shape: bf16[128,128], index: 1, kind: input, shape index: {}]
  %s2 = inlined_call_operand.vmem [shape: f32[1,128], index: 2, kind: input, shape index: {}]
  %s3 = inlined_call_operand.vmem [shape: f32[32,128], index: 3, kind: input, shape index: {}]
  %s4 = inlined_call_operand.vmem [shape: f32[32,128], index: 4, kind: output, shape index: {}]
  %s5 = sld [smem:[#allocation0]]
  $region34: #{fcn_mt_forward.17} parent=0
    _
  %s7 = ssub.s32 1, %s5
  %s8 = scalar_select 0, %s7, %s5
  // Predicated region
  $region2: #{fcn_mt_forward.17} parent=0 // pred_check
    _
  $region3: #{fcn_mt_forward.17} parent=0 // pred_check_branch
    %10 = sbr.rel (0) target = $region5
  $region4: #{fcn_mt_forward.17} parent=0 // pred_region
    _
  $region5: #{fcn_mt_forward.17} parent=0 // pred_fallthru
    _
  // Predicated region
  $region6: #{fcn_mt_forward.17} parent=0 // pred_check
    _
  $region7: #{fcn_mt_forward.17} parent=0 // pred_check_branch
    %12 = sbr.rel (0) target = $region9
  $region8: #{fcn_mt_forward.17} parent=0 // pred_region
    _
  $region9: #{fcn_mt_forward.17} parent=0 // pred_fallthru
    _
  // Predicated region
  $region10: #{fcn_mt_forward.17} parent=0 // pred_check
    _
  $region11: #{fcn_mt_forward.17} parent=0 // pred_check_branch
    %14 = sbr.rel (0) target = $region13
  $region12: #{fcn_mt_forward.17} parent=0 // pred_region
    _
  $region13: #{fcn_mt_forward.17} parent=0 // pred_fallthru
    _
  // Predicated region
  $region14: #{fcn_mt_forward.17} parent=0 // pred_check
    _
  $region15: #{fcn_mt_forward.17} parent=0 // pred_check_branch
    %16 = sbr.rel (0) target = $region17
  $region16: #{fcn_mt_forward.17} parent=0 // pred_region
    _
  $region17: #{fcn_mt_forward.17} parent=0 // pred_fallthru
    _
  %p17 = scmp.eq.s32.totalorder 0, 0
  // Predicated region
  $region18: #{fcn_mt_forward.17} parent=0 // pred_check
    %p18 = pneg %p17
  $region19: #{fcn_mt_forward.17} parent=0 // pred_check_branch
    %20 = sbr.rel (%p18) target = $region21
  $region20: #{fcn_mt_forward.17} parent=0 // pred_region
    %21 = vst [vmem:[#allocation2] sm:$0xff] 0.0
    %22 = vst [vmem:[#allocation2 + $0x8] sm:$0xff] 0.0
    %23 = vst [vmem:[#allocation2 + $0x10] sm:$0xff] 0.0
    %24 = vst [vmem:[#allocation2 + $0x18] sm:$0xff] 0.0
  $region21: #{fcn_mt_forward.17} parent=0 // pred_fallthru
    _
  %v25 = vld [vmem:[#allocation2] sm:$0xff]
  %v26 = vld [vmem:[#allocation2 + $0x8] sm:$0xff]
  %v27 = vld [vmem:[#allocation2 + $0x10] sm:$0xff]
  %v28 = vld [vmem:[#allocation2 + $0x18] sm:$0xff]
  %v29 = vld [vmem:[%s0] sm:$0xf]
  %v30 = vld [vmem:[%s0 + $0x4] sm:$0xf]
  %v31 = vld [vmem:[%s0 + $0x8] sm:$0xf]
  %v32 = vld [vmem:[%s0 + $0xc] sm:$0xf]
  %v33 = vld [vmem:[%s1] sm:$0xf]
  %v34 = vld [vmem:[%s1 + $0x4] sm:$0xf]
  %v35 = vld [vmem:[%s1 + $0x8] sm:$0xf]
  %v36 = vld [vmem:[%s1 + $0xc] sm:$0xf]
  %v37 = vld [vmem:[%s1 + $0x10] sm:$0xf]
  %v38 = vld [vmem:[%s1 + $0x14] sm:$0xf]
  %v39 = vld [vmem:[%s1 + $0x18] sm:$0xf]
  %v40 = vld [vmem:[%s1 + $0x1c] sm:$0xf]
  %v41 = vld [vmem:[%s1 + $0x20] sm:$0xf]
  %v42 = vld [vmem:[%s1 + $0x24] sm:$0xf]
  %v43 = vld [vmem:[%s1 + $0x28] sm:$0xf]
  %v44 = vld [vmem:[%s1 + $0x2c] sm:$0xf]
  %v45 = vld [vmem:[%s1 + $0x30] sm:$0xf]
  %v46 = vld [vmem:[%s1 + $0x34] sm:$0xf]
  %v47 = vld [vmem:[%s1 + $0x38] sm:$0xf]
  %v48 = vld [vmem:[%s1 + $0x3c] sm:$0xf]
  %v53 = vunpack.c.l.b16 %v29
  %v54 = vunpack.c.l.b16 %v30
  %v55 = vunpack.c.l.b16 %v31
  %v56 = vunpack.c.l.b16 %v32
  %v57 = vpack.c.b16 %v54, %v53
  %v58 = vpack.c.b16 %v56, %v55
  %v77 = vunpack.c.l.b16 %v33
  %v78 = vunpack.c.l.b16 %v34
  %v79 = vunpack.c.l.b16 %v35
  %v80 = vunpack.c.l.b16 %v36
  %v81 = vunpack.c.l.b16 %v37
  %v82 = vunpack.c.l.b16 %v38
  %v83 = vunpack.c.l.b16 %v39
  %v84 = vunpack.c.l.b16 %v40
  %v85 = vunpack.c.l.b16 %v41
  %v86 = vunpack.c.l.b16 %v42
  %v87 = vunpack.c.l.b16 %v43
  %v88 = vunpack.c.l.b16 %v44
  %v89 = vunpack.c.l.b16 %v45
  %v90 = vunpack.c.l.b16 %v46
  %v91 = vunpack.c.l.b16 %v47
  %v92 = vunpack.c.l.b16 %v48
  %v93 = vpack.c.b16 %v78, %v77
  %v94 = vpack.c.b16 %v80, %v79
  %v95 = vpack.c.b16 %v82, %v81
  %v96 = vpack.c.b16 %v84, %v83
  %v97 = vpack.c.b16 %v86, %v85
  %v98 = vpack.c.b16 %v88, %v87
  %v99 = vpack.c.b16 %v90, %v89
  %v100 = vpack.c.b16 %v92, %v91
  %109 = vmatpush.bf16.msra.mxu0 %v100
  %110 = vmatpush.bf16.msra.mxu0 %v99
  %111 = vmatpush.bf16.msra.mxu0 %v98
  %112 = vmatpush.bf16.msra.mxu0 %v97
  %113 = vmatpush.bf16.msra.mxu0 %v96
  %114 = vmatpush.bf16.msra.mxu0 %v95
  %115 = vmatpush.bf16.msra.mxu0 %v94
  %116 = vmatpush.bf16.msra.mxu0 %v93
  %117 = vmatmul.bf16.gmra.mxu0 %v57
  %v118 = vpop.f32.mrf.mxu0
  %v119 = vadd.f32 0.0, %v118
  %v120 = vpop.f32.mrf.mxu0
  %v121 = vadd.f32 0.0, %v120
  %122 = vmatmul.bf16.gmra.mxu0 %v58
  %v123 = vpop.f32.mrf.mxu0
  %v124 = vadd.f32 0.0, %v123
  %v125 = vpop.f32.mrf.mxu0
  %v126 = vadd.f32 0.0, %v125
  %127 = vdwg.mxu0
  %v128 = vadd.f32 %v25, %v119
  %v129 = vadd.f32 %v26, %v121
  %v130 = vadd.f32 %v27, %v124
  %v131 = vadd.f32 %v28, %v126
  %132 = vst [vmem:[#allocation2] sm:$0xff] %v128
  %133 = vst [vmem:[#allocation2 + $0x8] sm:$0xff] %v129
  %134 = vst [vmem:[#allocation2 + $0x10] sm:$0xff] %v130
  %135 = vst [vmem:[#allocation2 + $0x18] sm:$0xff] %v131
  // Predicated region
  $region22: #{fcn_mt_forward.17} parent=0 // pred_check
    %p136 = pneg %p17
  $region23: #{fcn_mt_forward.17} parent=0 // pred_check_branch
    %138 = sbr.rel (%p136) target = $region25
  $region24: #{fcn_mt_forward.17} parent=0 // pred_region
    %v139 = vld [vmem:[#allocation2] sm:$0xff]
    %v140 = vld [vmem:[#allocation2 + $0x8] sm:$0xff]
    %v141 = vld [vmem:[#allocation2 + $0x10] sm:$0xff]
    %v142 = vld [vmem:[#allocation2 + $0x18] sm:$0xff]
    %v143 = vld [vmem:[%s2] sm:$0x1]
    %v145 = vperm.slane %v143, 0
    %v147 = vadd.f32 %v139, %v145
    %v148 = vadd.f32 %v140, %v145
    %v149 = vadd.f32 %v141, %v145
    %v150 = vadd.f32 %v142, %v145
    %v151 = vld [vmem:[%s3] sm:$0xff]
    %v152 = vld [vmem:[%s3 + $0x8] sm:$0xff]
    %v153 = vld [vmem:[%s3 + $0x10] sm:$0xff]
    %v154 = vld [vmem:[%s3 + $0x18] sm:$0xff]
    %v155 = vadd.f32 %v147, %v151
    %v156 = vadd.f32 %v148, %v152
    %v157 = vadd.f32 %v149, %v153
    %v158 = vadd.f32 %v150, %v154
    %v159 = vmax.f32 %v155, 0.0
    %v160 = vmax.f32 %v156, 0.0
    %v161 = vmax.f32 %v157, 0.0
    %v162 = vmax.f32 %v158, 0.0
    %163 = vst [vmem:[%s4] sm:$0xff] %v159
    %164 = vst [vmem:[%s4 + $0x8] sm:$0xff] %v160
    %165 = vst [vmem:[%s4 + $0x10] sm:$0xff] %v161
    %166 = vst [vmem:[%s4 + $0x18] sm:$0xff] %v162
  $region25: #{fcn_mt_forward.17} parent=0 // pred_fallthru
    _
  // Predicated region
  $region26: #{fcn_mt_forward.17} parent=0 // pred_check
    _
  $region27: #{fcn_mt_forward.17} parent=0 // pred_check_branch
    %168 = sbr.rel (0) target = $region29
  $region28: #{fcn_mt_forward.17} parent=0 // pred_region
    _
  $region29: #{fcn_mt_forward.17} parent=0 // pred_fallthru
    _
  // Predicated region
  $region30: #{fcn_mt_forward.17} parent=0 // pred_check
    _
  $region31: #{fcn_mt_forward.17} parent=0 // pred_check_branch
    %170 = sbr.rel (0) target = $region33
  $region32: #{fcn_mt_forward.17} parent=0 // pred_region
    _
  $region33: #{fcn_mt_forward.17} parent=0 // pred_fallthru
    _

// kernel: fcn_mt_forward.18
$region0: #{fcn_mt_forward.18}
  #allocation0 [shape = 'u32[]', space=smem, size = 0x4, offset = 0x4, fixed_abs, tag = 'smem constant byte address 0x4 - core index']
  #allocation1 [shape = 'u32[72,128]{1,0:T(1,128)}', space=vmem, size = 0x9000, scoped, tag = 'internal scratch']
  #allocation2 [shape = 'f32[32,128]{1,0:T(8,128)}', space=vmem, size = 0x4000, scoped, tag = 'scratch operand']
  %s0 = inlined_call_operand.vmem [shape: bf16[32,128], index: 0, kind: input, shape index: {}]
  %s1 = inlined_call_operand.vmem [shape: bf16[128,128], index: 1, kind: input, shape index: {}]
  %s2 = inlined_call_operand.vmem [shape: f32[1,128], index: 2, kind: input, shape index: {}]
  %s3 = inlined_call_operand.vmem [shape: f32[32,128], index: 3, kind: input, shape index: {}]
  %s4 = inlined_call_operand.vmem [shape: f32[32,128], index: 4, kind: output, shape index: {}]
  %s5 = sld [smem:[#allocation0]]
  $region34: #{fcn_mt_forward.18} parent=0
    _
  %s7 = ssub.s32 1, %s5
  %s8 = scalar_select 0, %s7, %s5
  // Predicated region
  $region2: #{fcn_mt_forward.18} parent=0 // pred_check
    _
  $region3: #{fcn_mt_forward.18} parent=0 // pred_check_branch
    %10 = sbr.rel (0) target = $region5
  $region4: #{fcn_mt_forward.18} parent=0 // pred_region
    _
  $region5: #{fcn_mt_forward.18} parent=0 // pred_fallthru
    _
  // Predicated region
  $region6: #{fcn_mt_forward.18} parent=0 // pred_check
    _
  $region7: #{fcn_mt_forward.18} parent=0 // pred_check_branch
    %12 = sbr.rel (0) target = $region9
  $region8: #{fcn_mt_forward.18} parent=0 // pred_region
    _
  $region9: #{fcn_mt_forward.18} parent=0 // pred_fallthru
    _
  // Predicated region
  $region10: #{fcn_mt_forward.18} parent=0 // pred_check
    _
  $region11: #{fcn_mt_forward.18} parent=0 // pred_check_branch
    %14 = sbr.rel (0) target = $region13
  $region12: #{fcn_mt_forward.18} parent=0 // pred_region
    _
  $region13: #{fcn_mt_forward.18} parent=0 // pred_fallthru
    _
  // Predicated region
  $region14: #{fcn_mt_forward.18} parent=0 // pred_check
    _
  $region15: #{fcn_mt_forward.18} parent=0 // pred_check_branch
    %16 = sbr.rel (0) target = $region17
  $region16: #{fcn_mt_forward.18} parent=0 // pred_region
    _
  $region17: #{fcn_mt_forward.18} parent=0 // pred_fallthru
    _
  %p17 = scmp.eq.s32.totalorder 0, 0
  // Predicated region
  $region18: #{fcn_mt_forward.18} parent=0 // pred_check
    %p18 = pneg %p17
  $region19: #{fcn_mt_forward.18} parent=0 // pred_check_branch
    %20 = sbr.rel (%p18) target = $region21
  $region20: #{fcn_mt_forward.18} parent=0 // pred_region
    %21 = vst [vmem:[#allocation2] sm:$0xff] 0.0
    %22 = vst [vmem:[#allocation2 + $0x8] sm:$0xff] 0.0
    %23 = vst [vmem:[#allocation2 + $0x10] sm:$0xff] 0.0
    %24 = vst [vmem:[#allocation2 + $0x18] sm:$0xff] 0.0
  $region21: #{fcn_mt_forward.18} parent=0 // pred_fallthru
    _
  %v25 = vld [vmem:[#allocation2] sm:$0xff]
  %v26 = vld [vmem:[#allocation2 + $0x8] sm:$0xff]
  %v27 = vld [vmem:[#allocation2 + $0x10] sm:$0xff]
  %v28 = vld [vmem:[#allocation2 + $0x18] sm:$0xff]
  %v29 = vld [vmem:[%s0] sm:$0xf]
  %v30 = vld [vmem:[%s0 + $0x4] sm:$0xf]
  %v31 = vld [vmem:[%s0 + $0x8] sm:$0xf]
  %v32 = vld [vmem:[%s0 + $0xc] sm:$0xf]
  %v33 = vld [vmem:[%s1] sm:$0xf]
  %v34 = vld [vmem:[%s1 + $0x4] sm:$0xf]
  %v35 = vld [vmem:[%s1 + $0x8] sm:$0xf]
  %v36 = vld [vmem:[%s1 + $0xc] sm:$0xf]
  %v37 = vld [vmem:[%s1 + $0x10] sm:$0xf]
  %v38 = vld [vmem:[%s1 + $0x14] sm:$0xf]
  %v39 = vld [vmem:[%s1 + $0x18] sm:$0xf]
  %v40 = vld [vmem:[%s1 + $0x1c] sm:$0xf]
  %v41 = vld [vmem:[%s1 + $0x20] sm:$0xf]
  %v42 = vld [vmem:[%s1 + $0x24] sm:$0xf]
  %v43 = vld [vmem:[%s1 + $0x28] sm:$0xf]
  %v44 = vld [vmem:[%s1 + $0x2c] sm:$0xf]
  %v45 = vld [vmem:[%s1 + $0x30] sm:$0xf]
  %v46 = vld [vmem:[%s1 + $0x34] sm:$0xf]
  %v47 = vld [vmem:[%s1 + $0x38] sm:$0xf]
  %v48 = vld [vmem:[%s1 + $0x3c] sm:$0xf]
  %v53 = vunpack.c.l.b16 %v29
  %v54 = vunpack.c.l.b16 %v30
  %v55 = vunpack.c.l.b16 %v31
  %v56 = vunpack.c.l.b16 %v32
  %v57 = vpack.c.b16 %v54, %v53
  %v58 = vpack.c.b16 %v56, %v55
  %v77 = vunpack.c.l.b16 %v33
  %v78 = vunpack.c.l.b16 %v34
  %v79 = vunpack.c.l.b16 %v35
  %v80 = vunpack.c.l.b16 %v36
  %v81 = vunpack.c.l.b16 %v37
  %v82 = vunpack.c.l.b16 %v38
  %v83 = vunpack.c.l.b16 %v39
  %v84 = vunpack.c.l.b16 %v40
  %v85 = vunpack.c.l.b16 %v41
  %v86 = vunpack.c.l.b16 %v42
  %v87 = vunpack.c.l.b16 %v43
  %v88 = vunpack.c.l.b16 %v44
  %v89 = vunpack.c.l.b16 %v45
  %v90 = vunpack.c.l.b16 %v46
  %v91 = vunpack.c.l.b16 %v47
  %v92 = vunpack.c.l.b16 %v48
  %v93 = vpack.c.b16 %v78, %v77
  %v94 = vpack.c.b16 %v80, %v79
  %v95 = vpack.c.b16 %v82, %v81
  %v96 = vpack.c.b16 %v84, %v83
  %v97 = vpack.c.b16 %v86, %v85
  %v98 = vpack.c.b16 %v88, %v87
  %v99 = vpack.c.b16 %v90, %v89
  %v100 = vpack.c.b16 %v92, %v91
  %109 = vmatpush.bf16.msra.mxu0 %v100
  %110 = vmatpush.bf16.msra.mxu0 %v99
  %111 = vmatpush.bf16.msra.mxu0 %v98
  %112 = vmatpush.bf16.msra.mxu0 %v97
  %113 = vmatpush.bf16.msra.mxu0 %v96
  %114 = vmatpush.bf16.msra.mxu0 %v95
  %115 = vmatpush.bf16.msra.mxu0 %v94
  %116 = vmatpush.bf16.msra.mxu0 %v93
  %117 = vmatmul.bf16.gmra.mxu0 %v57
  %v118 = vpop.f32.mrf.mxu0
  %v119 = vadd.f32 0.0, %v118
  %v120 = vpop.f32.mrf.mxu0
  %v121 = vadd.f32 0.0, %v120
  %122 = vmatmul.bf16.gmra.mxu0 %v58
  %v123 = vpop.f32.mrf.mxu0
  %v124 = vadd.f32 0.0, %v123
  %v125 = vpop.f32.mrf.mxu0
  %v126 = vadd.f32 0.0, %v125
  %127 = vdwg.mxu0
  %v128 = vadd.f32 %v25, %v119
  %v129 = vadd.f32 %v26, %v121
  %v130 = vadd.f32 %v27, %v124
  %v131 = vadd.f32 %v28, %v126
  %132 = vst [vmem:[#allocation2] sm:$0xff] %v128
  %133 = vst [vmem:[#allocation2 + $0x8] sm:$0xff] %v129
  %134 = vst [vmem:[#allocation2 + $0x10] sm:$0xff] %v130
  %135 = vst [vmem:[#allocation2 + $0x18] sm:$0xff] %v131
  // Predicated region
  $region22: #{fcn_mt_forward.18} parent=0 // pred_check
    %p136 = pneg %p17
  $region23: #{fcn_mt_forward.18} parent=0 // pred_check_branch
    %138 = sbr.rel (%p136) target = $region25
  $region24: #{fcn_mt_forward.18} parent=0 // pred_region
    %v139 = vld [vmem:[#allocation2] sm:$0xff]
    %v140 = vld [vmem:[#allocation2 + $0x8] sm:$0xff]
    %v141 = vld [vmem:[#allocation2 + $0x10] sm:$0xff]
    %v142 = vld [vmem:[#allocation2 + $0x18] sm:$0xff]
    %v143 = vld [vmem:[%s2] sm:$0x1]
    %v145 = vperm.slane %v143, 0
    %v147 = vadd.f32 %v139, %v145
    %v148 = vadd.f32 %v140, %v145
    %v149 = vadd.f32 %v141, %v145
    %v150 = vadd.f32 %v142, %v145
    %v151 = vld [vmem:[%s3] sm:$0xff]
    %v152 = vld [vmem:[%s3 + $0x8] sm:$0xff]
    %v153 = vld [vmem:[%s3 + $0x10] sm:$0xff]
    %v154 = vld [vmem:[%s3 + $0x18] sm:$0xff]
    %v155 = vadd.f32 %v147, %v151
    %v156 = vadd.f32 %v148, %v152
    %v157 = vadd.f32 %v149, %v153
    %v158 = vadd.f32 %v150, %v154
    %v159 = vmax.f32 %v155, 0.0
    %v160 = vmax.f32 %v156, 0.0
    %v161 = vmax.f32 %v157, 0.0
    %v162 = vmax.f32 %v158, 0.0
    %163 = vst [vmem:[%s4] sm:$0xff] %v159
    %164 = vst [vmem:[%s4 + $0x8] sm:$0xff] %v160
    %165 = vst [vmem:[%s4 + $0x10] sm:$0xff] %v161
    %166 = vst [vmem:[%s4 + $0x18] sm:$0xff] %v162
  $region25: #{fcn_mt_forward.18} parent=0 // pred_fallthru
    _
  // Predicated region
  $region26: #{fcn_mt_forward.18} parent=0 // pred_check
    _
  $region27: #{fcn_mt_forward.18} parent=0 // pred_check_branch
    %168 = sbr.rel (0) target = $region29
  $region28: #{fcn_mt_forward.18} parent=0 // pred_region
    _
  $region29: #{fcn_mt_forward.18} parent=0 // pred_fallthru
    _
  // Predicated region
  $region30: #{fcn_mt_forward.18} parent=0 // pred_check
    _
  $region31: #{fcn_mt_forward.18} parent=0 // pred_check_branch
    %170 = sbr.rel (0) target = $region33
  $region32: #{fcn_mt_forward.18} parent=0 // pred_region
    _
  $region33: #{fcn_mt_forward.18} parent=0 // pred_fallthru
    _

// kernel: fcn_mt_forward.20
$region0: #{fcn_mt_forward.20}
  #allocation0 [shape = 'u32[]', space=smem, size = 0x4, offset = 0x4, fixed_abs, tag = 'smem constant byte address 0x4 - core index']
  #allocation1 [shape = 'u32[72,128]{1,0:T(1,128)}', space=vmem, size = 0x9000, scoped, tag = 'internal scratch']
  #allocation2 [shape = 'f32[32,128]{1,0:T(8,128)}', space=vmem, size = 0x4000, scoped, tag = 'scratch operand']
  %s0 = inlined_call_operand.vmem [shape: bf16[32,128], index: 0, kind: input, shape index: {}]
  %s1 = inlined_call_operand.vmem [shape: bf16[128,128], index: 1, kind: input, shape index: {}]
  %s2 = inlined_call_operand.vmem [shape: f32[1,128], index: 2, kind: input, shape index: {}]
  %s3 = inlined_call_operand.vmem [shape: f32[32,128], index: 3, kind: input, shape index: {}]
  %s4 = inlined_call_operand.vmem [shape: f32[32,128], index: 4, kind: output, shape index: {}]
  %s5 = sld [smem:[#allocation0]]
  $region34: #{fcn_mt_forward.20} parent=0
    _
  %s7 = ssub.s32 1, %s5
  %s8 = scalar_select 0, %s7, %s5
  // Predicated region
  $region2: #{fcn_mt_forward.20} parent=0 // pred_check
    _
  $region3: #{fcn_mt_forward.20} parent=0 // pred_check_branch
    %10 = sbr.rel (0) target = $region5
  $region4: #{fcn_mt_forward.20} parent=0 // pred_region
    _
  $region5: #{fcn_mt_forward.20} parent=0 // pred_fallthru
    _
  // Predicated region
  $region6: #{fcn_mt_forward.20} parent=0 // pred_check
    _
  $region7: #{fcn_mt_forward.20} parent=0 // pred_check_branch
    %12 = sbr.rel (0) target = $region9
  $region8: #{fcn_mt_forward.20} parent=0 // pred_region
    _
  $region9: #{fcn_mt_forward.20} parent=0 // pred_fallthru
    _
  // Predicated region
  $region10: #{fcn_mt_forward.20} parent=0 // pred_check
    _
  $region11: #{fcn_mt_forward.20} parent=0 // pred_check_branch
    %14 = sbr.rel (0) target = $region13
  $region12: #{fcn_mt_forward.20} parent=0 // pred_region
    _
  $region13: #{fcn_mt_forward.20} parent=0 // pred_fallthru
    _
  // Predicated region
  $region14: #{fcn_mt_forward.20} parent=0 // pred_check
    _
  $region15: #{fcn_mt_forward.20} parent=0 // pred_check_branch
    %16 = sbr.rel (0) target = $region17
  $region16: #{fcn_mt_forward.20} parent=0 // pred_region
    _
  $region17: #{fcn_mt_forward.20} parent=0 // pred_fallthru
    _
  %p17 = scmp.eq.s32.totalorder 0, 0
  // Predicated region
  $region18: #{fcn_mt_forward.20} parent=0 // pred_check
    %p18 = pneg %p17
  $region19: #{fcn_mt_forward.20} parent=0 // pred_check_branch
    %20 = sbr.rel (%p18) target = $region21
  $region20: #{fcn_mt_forward.20} parent=0 // pred_region
    %21 = vst [vmem:[#allocation2] sm:$0xff] 0.0
    %22 = vst [vmem:[#allocation2 + $0x8] sm:$0xff] 0.0
    %23 = vst [vmem:[#allocation2 + $0x10] sm:$0xff] 0.0
    %24 = vst [vmem:[#allocation2 + $0x18] sm:$0xff] 0.0
  $region21: #{fcn_mt_forward.20} parent=0 // pred_fallthru
    _
  %v25 = vld [vmem:[#allocation2] sm:$0xff]
  %v26 = vld [vmem:[#allocation2 + $0x8] sm:$0xff]
  %v27 = vld [vmem:[#allocation2 + $0x10] sm:$0xff]
  %v28 = vld [vmem:[#allocation2 + $0x18] sm:$0xff]
  %v29 = vld [vmem:[%s0] sm:$0xf]
  %v30 = vld [vmem:[%s0 + $0x4] sm:$0xf]
  %v31 = vld [vmem:[%s0 + $0x8] sm:$0xf]
  %v32 = vld [vmem:[%s0 + $0xc] sm:$0xf]
  %v33 = vld [vmem:[%s1] sm:$0xf]
  %v34 = vld [vmem:[%s1 + $0x4] sm:$0xf]
  %v35 = vld [vmem:[%s1 + $0x8] sm:$0xf]
  %v36 = vld [vmem:[%s1 + $0xc] sm:$0xf]
  %v37 = vld [vmem:[%s1 + $0x10] sm:$0xf]
  %v38 = vld [vmem:[%s1 + $0x14] sm:$0xf]
  %v39 = vld [vmem:[%s1 + $0x18] sm:$0xf]
  %v40 = vld [vmem:[%s1 + $0x1c] sm:$0xf]
  %v41 = vld [vmem:[%s1 + $0x20] sm:$0xf]
  %v42 = vld [vmem:[%s1 + $0x24] sm:$0xf]
  %v43 = vld [vmem:[%s1 + $0x28] sm:$0xf]
  %v44 = vld [vmem:[%s1 + $0x2c] sm:$0xf]
  %v45 = vld [vmem:[%s1 + $0x30] sm:$0xf]
  %v46 = vld [vmem:[%s1 + $0x34] sm:$0xf]
  %v47 = vld [vmem:[%s1 + $0x38] sm:$0xf]
  %v48 = vld [vmem:[%s1 + $0x3c] sm:$0xf]
  %v53 = vunpack.c.l.b16 %v29
  %v54 = vunpack.c.l.b16 %v30
  %v55 = vunpack.c.l.b16 %v31
  %v56 = vunpack.c.l.b16 %v32
  %v57 = vpack.c.b16 %v54, %v53
  %v58 = vpack.c.b16 %v56, %v55
  %v77 = vunpack.c.l.b16 %v33
  %v78 = vunpack.c.l.b16 %v34
  %v79 = vunpack.c.l.b16 %v35
  %v80 = vunpack.c.l.b16 %v36
  %v81 = vunpack.c.l.b16 %v37
  %v82 = vunpack.c.l.b16 %v38
  %v83 = vunpack.c.l.b16 %v39
  %v84 = vunpack.c.l.b16 %v40
  %v85 = vunpack.c.l.b16 %v41
  %v86 = vunpack.c.l.b16 %v42
  %v87 = vunpack.c.l.b16 %v43
  %v88 = vunpack.c.l.b16 %v44
  %v89 = vunpack.c.l.b16 %v45
  %v90 = vunpack.c.l.b16 %v46
  %v91 = vunpack.c.l.b16 %v47
  %v92 = vunpack.c.l.b16 %v48
  %v93 = vpack.c.b16 %v78, %v77
  %v94 = vpack.c.b16 %v80, %v79
  %v95 = vpack.c.b16 %v82, %v81
  %v96 = vpack.c.b16 %v84, %v83
  %v97 = vpack.c.b16 %v86, %v85
  %v98 = vpack.c.b16 %v88, %v87
  %v99 = vpack.c.b16 %v90, %v89
  %v100 = vpack.c.b16 %v92, %v91
  %109 = vmatpush.bf16.msra.mxu0 %v100
  %110 = vmatpush.bf16.msra.mxu0 %v99
  %111 = vmatpush.bf16.msra.mxu0 %v98
  %112 = vmatpush.bf16.msra.mxu0 %v97
  %113 = vmatpush.bf16.msra.mxu0 %v96
  %114 = vmatpush.bf16.msra.mxu0 %v95
  %115 = vmatpush.bf16.msra.mxu0 %v94
  %116 = vmatpush.bf16.msra.mxu0 %v93
  %117 = vmatmul.bf16.gmra.mxu0 %v57
  %v118 = vpop.f32.mrf.mxu0
  %v119 = vadd.f32 0.0, %v118
  %v120 = vpop.f32.mrf.mxu0
  %v121 = vadd.f32 0.0, %v120
  %122 = vmatmul.bf16.gmra.mxu0 %v58
  %v123 = vpop.f32.mrf.mxu0
  %v124 = vadd.f32 0.0, %v123
  %v125 = vpop.f32.mrf.mxu0
  %v126 = vadd.f32 0.0, %v125
  %127 = vdwg.mxu0
  %v128 = vadd.f32 %v25, %v119
  %v129 = vadd.f32 %v26, %v121
  %v130 = vadd.f32 %v27, %v124
  %v131 = vadd.f32 %v28, %v126
  %132 = vst [vmem:[#allocation2] sm:$0xff] %v128
  %133 = vst [vmem:[#allocation2 + $0x8] sm:$0xff] %v129
  %134 = vst [vmem:[#allocation2 + $0x10] sm:$0xff] %v130
  %135 = vst [vmem:[#allocation2 + $0x18] sm:$0xff] %v131
  // Predicated region
  $region22: #{fcn_mt_forward.20} parent=0 // pred_check
    %p136 = pneg %p17
  $region23: #{fcn_mt_forward.20} parent=0 // pred_check_branch
    %138 = sbr.rel (%p136) target = $region25
  $region24: #{fcn_mt_forward.20} parent=0 // pred_region
    %v139 = vld [vmem:[#allocation2] sm:$0xff]
    %v140 = vld [vmem:[#allocation2 + $0x8] sm:$0xff]
    %v141 = vld [vmem:[#allocation2 + $0x10] sm:$0xff]
    %v142 = vld [vmem:[#allocation2 + $0x18] sm:$0xff]
    %v143 = vld [vmem:[%s2] sm:$0x1]
    %v145 = vperm.slane %v143, 0
    %v147 = vadd.f32 %v139, %v145
    %v148 = vadd.f32 %v140, %v145
    %v149 = vadd.f32 %v141, %v145
    %v150 = vadd.f32 %v142, %v145
    %v151 = vld [vmem:[%s3] sm:$0xff]
    %v152 = vld [vmem:[%s3 + $0x8] sm:$0xff]
    %v153 = vld [vmem:[%s3 + $0x10] sm:$0xff]
    %v154 = vld [vmem:[%s3 + $0x18] sm:$0xff]
    %v155 = vadd.f32 %v147, %v151
    %v156 = vadd.f32 %v148, %v152
    %v157 = vadd.f32 %v149, %v153
    %v158 = vadd.f32 %v150, %v154
    %v159 = vmax.f32 %v155, 0.0
    %v160 = vmax.f32 %v156, 0.0
    %v161 = vmax.f32 %v157, 0.0
    %v162 = vmax.f32 %v158, 0.0
    %163 = vst [vmem:[%s4] sm:$0xff] %v159
    %164 = vst [vmem:[%s4 + $0x8] sm:$0xff] %v160
    %165 = vst [vmem:[%s4 + $0x10] sm:$0xff] %v161
    %166 = vst [vmem:[%s4 + $0x18] sm:$0xff] %v162
  $region25: #{fcn_mt_forward.20} parent=0 // pred_fallthru
    _
  // Predicated region
  $region26: #{fcn_mt_forward.20} parent=0 // pred_check
    _
  $region27: #{fcn_mt_forward.20} parent=0 // pred_check_branch
    %168 = sbr.rel (0) target = $region29
  $region28: #{fcn_mt_forward.20} parent=0 // pred_region
    _
  $region29: #{fcn_mt_forward.20} parent=0 // pred_fallthru
    _
  // Predicated region
  $region30: #{fcn_mt_forward.20} parent=0 // pred_check
    _
  $region31: #{fcn_mt_forward.20} parent=0 // pred_check_branch
    %170 = sbr.rel (0) target = $region33
  $region32: #{fcn_mt_forward.20} parent=0 // pred_region
    _
  $region33: #{fcn_mt_forward.20} parent=0 // pred_fallthru
    _

// kernel: fcn_mt_forward.22
$region0: #{fcn_mt_forward.22}
  #allocation0 [shape = 'u32[]', space=smem, size = 0x4, offset = 0x4, fixed_abs, tag = 'smem constant byte address 0x4 - core index']
  #allocation1 [shape = 'u32[72,128]{1,0:T(1,128)}', space=vmem, size = 0x9000, scoped, tag = 'internal scratch']
  #allocation2 [shape = 'f32[128,128]{1,0:T(8,128)}', space=vmem, size = 0x10000, scoped, tag = 'scratch operand']
  %s0 = inlined_call_operand.vmem [shape: bf16[128,128], index: 0, kind: input, shape index: {}]
  %s1 = inlined_call_operand.vmem [shape: bf16[128,128], index: 1, kind: input, shape index: {}]
  %s2 = inlined_call_operand.vmem [shape: f32[1,128], index: 2, kind: input, shape index: {}]
  %s3 = inlined_call_operand.vmem [shape: f32[128,128], index: 3, kind: output, shape index: {}]
  %s4 = sld [smem:[#allocation0]]
  $region30: #{fcn_mt_forward.22} parent=0
    _
  %s6 = ssub.s32 1, %s4
  %s7 = scalar_select 0, %s6, %s4
  // Predicated region
  $region2: #{fcn_mt_forward.22} parent=0 // pred_check
    _
  $region3: #{fcn_mt_forward.22} parent=0 // pred_check_branch
    %9 = sbr.rel (0) target = $region5
  $region4: #{fcn_mt_forward.22} parent=0 // pred_region
    _
  $region5: #{fcn_mt_forward.22} parent=0 // pred_fallthru
    _
  // Predicated region
  $region6: #{fcn_mt_forward.22} parent=0 // pred_check
    _
  $region7: #{fcn_mt_forward.22} parent=0 // pred_check_branch
    %11 = sbr.rel (0) target = $region9
  $region8: #{fcn_mt_forward.22} parent=0 // pred_region
    _
  $region9: #{fcn_mt_forward.22} parent=0 // pred_fallthru
    _
  // Predicated region
  $region10: #{fcn_mt_forward.22} parent=0 // pred_check
    _
  $region11: #{fcn_mt_forward.22} parent=0 // pred_check_branch
    %13 = sbr.rel (0) target = $region13
  $region12: #{fcn_mt_forward.22} parent=0 // pred_region
    _
  $region13: #{fcn_mt_forward.22} parent=0 // pred_fallthru
    _
  %p14 = scmp.eq.s32.totalorder 0, 0
  // Predicated region
  $region14: #{fcn_mt_forward.22} parent=0 // pred_check
    %p15 = pneg %p14
  $region15: #{fcn_mt_forward.22} parent=0 // pred_check_branch
    %17 = sbr.rel (%p15) target = $region17
  $region16: #{fcn_mt_forward.22} parent=0 // pred_region
    %18 = vst [vmem:[#allocation2] sm:$0xff] 0.0
    %19 = vst [vmem:[#allocation2 + $0x8] sm:$0xff] 0.0
    %20 = vst [vmem:[#allocation2 + $0x10] sm:$0xff] 0.0
    %21 = vst [vmem:[#allocation2 + $0x18] sm:$0xff] 0.0
    %22 = vst [vmem:[#allocation2 + $0x20] sm:$0xff] 0.0
    %23 = vst [vmem:[#allocation2 + $0x28] sm:$0xff] 0.0
    %24 = vst [vmem:[#allocation2 + $0x30] sm:$0xff] 0.0
    %25 = vst [vmem:[#allocation2 + $0x38] sm:$0xff] 0.0
    %26 = vst [vmem:[#allocation2 + $0x40] sm:$0xff] 0.0
    %27 = vst [vmem:[#allocation2 + $0x48] sm:$0xff] 0.0
    %28 = vst [vmem:[#allocation2 + $0x50] sm:$0xff] 0.0
    %29 = vst [vmem:[#allocation2 + $0x58] sm:$0xff] 0.0
    %30 = vst [vmem:[#allocation2 + $0x60] sm:$0xff] 0.0
    %31 = vst [vmem:[#allocation2 + $0x68] sm:$0xff] 0.0
    %32 = vst [vmem:[#allocation2 + $0x70] sm:$0xff] 0.0
    %33 = vst [vmem:[#allocation2 + $0x78] sm:$0xff] 0.0
  $region17: #{fcn_mt_forward.22} parent=0 // pred_fallthru
    _
  %v34 = vld [vmem:[#allocation2] sm:$0xff]
  %v35 = vld [vmem:[#allocation2 + $0x8] sm:$0xff]
  %v36 = vld [vmem:[#allocation2 + $0x10] sm:$0xff]
  %v37 = vld [vmem:[#allocation2 + $0x18] sm:$0xff]
  %v38 = vld [vmem:[#allocation2 + $0x20] sm:$0xff]
  %v39 = vld [vmem:[#allocation2 + $0x28] sm:$0xff]
  %v40 = vld [vmem:[#allocation2 + $0x30] sm:$0xff]
  %v41 = vld [vmem:[#allocation2 + $0x38] sm:$0xff]
  %v42 = vld [vmem:[#allocation2 + $0x40] sm:$0xff]
  %v43 = vld [vmem:[#allocation2 + $0x48] sm:$0xff]
  %v44 = vld [vmem:[#allocation2 + $0x50] sm:$0xff]
  %v45 = vld [vmem:[#allocation2 + $0x58] sm:$0xff]
  %v46 = vld [vmem:[#allocation2 + $0x60] sm:$0xff]
  %v47 = vld [vmem:[#allocation2 + $0x68] sm:$0xff]
  %v48 = vld [vmem:[#allocation2 + $0x70] sm:$0xff]
  %v49 = vld [vmem:[#allocation2 + $0x78] sm:$0xff]
  %v50 = vld [vmem:[%s0] sm:$0xf]
  %v51 = vld [vmem:[%s0 + $0x4] sm:$0xf]
  %v52 = vld [vmem:[%s0 + $0x8] sm:$0xf]
  %v53 = vld [vmem:[%s0 + $0xc] sm:$0xf]
  %v54 = vld [vmem:[%s0 + $0x10] sm:$0xf]
  %v55 = vld [vmem:[%s0 + $0x14] sm:$0xf]
  %v56 = vld [vmem:[%s0 + $0x18] sm:$0xf]
  %v57 = vld [vmem:[%s0 + $0x1c] sm:$0xf]
  %v58 = vld [vmem:[%s0 + $0x20] sm:$0xf]
  %v59 = vld [vmem:[%s0 + $0x24] sm:$0xf]
  %v60 = vld [vmem:[%s0 + $0x28] sm:$0xf]
  %v61 = vld [vmem:[%s0 + $0x2c] sm:$0xf]
  %v62 = vld [vmem:[%s0 + $0x30] sm:$0xf]
  %v63 = vld [vmem:[%s0 + $0x34] sm:$0xf]
  %v64 = vld [vmem:[%s0 + $0x38] sm:$0xf]
  %v65 = vld [vmem:[%s0 + $0x3c] sm:$0xf]
  %v66 = vld [vmem:[%s1] sm:$0xf]
  %v67 = vld [vmem:[%s1 + $0x4] sm:$0xf]
  %v68 = vld [vmem:[%s1 + $0x8] sm:$0xf]
  %v69 = vld [vmem:[%s1 + $0xc] sm:$0xf]
  %v70 = vld [vmem:[%s1 + $0x10] sm:$0xf]
  %v71 = vld [vmem:[%s1 + $0x14] sm:$0xf]
  %v72 = vld [vmem:[%s1 + $0x18] sm:$0xf]
  %v73 = vld [vmem:[%s1 + $0x1c] sm:$0xf]
  %v74 = vld [vmem:[%s1 + $0x20] sm:$0xf]
  %v75 = vld [vmem:[%s1 + $0x24] sm:$0xf]
  %v76 = vld [vmem:[%s1 + $0x28] sm:$0xf]
  %v77 = vld [vmem:[%s1 + $0x2c] sm:$0xf]
  %v78 = vld [vmem:[%s1 + $0x30] sm:$0xf]
  %v79 = vld [vmem:[%s1 + $0x34] sm:$0xf]
  %v80 = vld [vmem:[%s1 + $0x38] sm:$0xf]
  %v81 = vld [vmem:[%s1 + $0x3c] sm:$0xf]
  %v98 = vunpack.c.l.b16 %v50
  %v99 = vunpack.c.l.b16 %v51
  %v100 = vunpack.c.l.b16 %v52
  %v101 = vunpack.c.l.b16 %v53
  %v102 = vunpack.c.l.b16 %v54
  %v103 = vunpack.c.l.b16 %v55
  %v104 = vunpack.c.l.b16 %v56
  %v105 = vunpack.c.l.b16 %v57
  %v106 = vunpack.c.l.b16 %v58
  %v107 = vunpack.c.l.b16 %v59
  %v108 = vunpack.c.l.b16 %v60
  %v109 = vunpack.c.l.b16 %v61
  %v110 = vunpack.c.l.b16 %v62
  %v111 = vunpack.c.l.b16 %v63
  %v112 = vunpack.c.l.b16 %v64
  %v113 = vunpack.c.l.b16 %v65
  %v114 = vpack.c.b16 %v99, %v98
  %v115 = vpack.c.b16 %v101, %v100
  %v116 = vpack.c.b16 %v103, %v102
  %v117 = vpack.c.b16 %v105, %v104
  %v118 = vpack.c.b16 %v107, %v106
  %v119 = vpack.c.b16 %v109, %v108
  %v120 = vpack.c.b16 %v111, %v110
  %v121 = vpack.c.b16 %v113, %v112
  %v146 = vunpack.c.l.b16 %v66
  %v147 = vunpack.c.l.b16 %v67
  %v148 = vunpack.c.l.b16 %v68
  %v149 = vunpack.c.l.b16 %v69
  %v150 = vunpack.c.l.b16 %v70
  %v151 = vunpack.c.l.b16 %v71
  %v152 = vunpack.c.l.b16 %v72
  %v153 = vunpack.c.l.b16 %v73
  %v154 = vunpack.c.l.b16 %v74
  %v155 = vunpack.c.l.b16 %v75
  %v156 = vunpack.c.l.b16 %v76
  %v157 = vunpack.c.l.b16 %v77
  %v158 = vunpack.c.l.b16 %v78
  %v159 = vunpack.c.l.b16 %v79
  %v160 = vunpack.c.l.b16 %v80
  %v161 = vunpack.c.l.b16 %v81
  %v162 = vpack.c.b16 %v147, %v146
  %v163 = vpack.c.b16 %v149, %v148
  %v164 = vpack.c.b16 %v151, %v150
  %v165 = vpack.c.b16 %v153, %v152
  %v166 = vpack.c.b16 %v155, %v154
  %v167 = vpack.c.b16 %v157, %v156
  %v168 = vpack.c.b16 %v159, %v158
  %v169 = vpack.c.b16 %v161, %v160
  %178 = vmatpush.bf16.msra.mxu0 %v169
  %179 = vmatpush.bf16.msra.mxu0 %v168
  %180 = vmatpush.bf16.msra.mxu0 %v167
  %181 = vmatpush.bf16.msra.mxu0 %v166
  %182 = vmatpush.bf16.msra.mxu0 %v165
  %183 = vmatpush.bf16.msra.mxu0 %v164
  %184 = vmatpush.bf16.msra.mxu0 %v163
  %185 = vmatpush.bf16.msra.mxu0 %v162
  %186 = vmatmul.bf16.gmra.mxu0 %v114
  %v187 = vpop.f32.mrf.mxu0
  %v188 = vadd.f32 0.0, %v187
  %v189 = vpop.f32.mrf.mxu0
  %v190 = vadd.f32 0.0, %v189
  %191 = vmatmul.bf16.gmra.mxu0 %v115
  %v192 = vpop.f32.mrf.mxu0
  %v193 = vadd.f32 0.0, %v192
  %v194 = vpop.f32.mrf.mxu0
  %v195 = vadd.f32 0.0, %v194
  %196 = vmatmul.bf16.gmra.mxu0 %v116
  %v197 = vpop.f32.mrf.mxu0
  %v198 = vadd.f32 0.0, %v197
  %v199 = vpop.f32.mrf.mxu0
  %v200 = vadd.f32 0.0, %v199
  %201 = vmatmul.bf16.gmra.mxu0 %v117
  %v202 = vpop.f32.mrf.mxu0
  %v203 = vadd.f32 0.0, %v202
  %v204 = vpop.f32.mrf.mxu0
  %v205 = vadd.f32 0.0, %v204
  %206 = vmatmul.bf16.gmra.mxu0 %v118
  %v207 = vpop.f32.mrf.mxu0
  %v208 = vadd.f32 0.0, %v207
  %v209 = vpop.f32.mrf.mxu0
  %v210 = vadd.f32 0.0, %v209
  %211 = vmatmul.bf16.gmra.mxu0 %v119
  %v212 = vpop.f32.mrf.mxu0
  %v213 = vadd.f32 0.0, %v212
  %v214 = vpop.f32.mrf.mxu0
  %v215 = vadd.f32 0.0, %v214
  %216 = vmatmul.bf16.gmra.mxu0 %v120
  %v217 = vpop.f32.mrf.mxu0
  %v218 = vadd.f32 0.0, %v217
  %v219 = vpop.f32.mrf.mxu0
  %v220 = vadd.f32 0.0, %v219
  %221 = vmatmul.bf16.gmra.mxu0 %v121
  %v222 = vpop.f32.mrf.mxu0
  %v223 = vadd.f32 0.0, %v222
  %v224 = vpop.f32.mrf.mxu0
  %v225 = vadd.f32 0.0, %v224
  %226 = vdwg.mxu0
  %v227 = vadd.f32 %v34, %v188
  %v228 = vadd.f32 %v35, %v190
  %v229 = vadd.f32 %v36, %v193
  %v230 = vadd.f32 %v37, %v195
  %v231 = vadd.f32 %v38, %v198
  %v232 = vadd.f32 %v39, %v200
  %v233 = vadd.f32 %v40, %v203
  %v234 = vadd.f32 %v41, %v205
  %v235 = vadd.f32 %v42, %v208
  %v236 = vadd.f32 %v43, %v210
  %v237 = vadd.f32 %v44, %v213
  %v238 = vadd.f32 %v45, %v215
  %v239 = vadd.f32 %v46, %v218
  %v240 = vadd.f32 %v47, %v220
  %v241 = vadd.f32 %v48, %v223
  %v242 = vadd.f32 %v49, %v225
  %243 = vst [vmem:[#allocation2] sm:$0xff] %v227
  %244 = vst [vmem:[#allocation2 + $0x8] sm:$0xff] %v228
  %245 = vst [vmem:[#allocation2 + $0x10] sm:$0xff] %v229
  %246 = vst [vmem:[#allocation2 + $0x18] sm:$0xff] %v230
  %247 = vst [vmem:[#allocation2 + $0x20] sm:$0xff] %v231
  %248 = vst [vmem:[#allocation2 + $0x28] sm:$0xff] %v232
  %249 = vst [vmem:[#allocation2 + $0x30] sm:$0xff] %v233
  %250 = vst [vmem:[#allocation2 + $0x38] sm:$0xff] %v234
  %251 = vst [vmem:[#allocation2 + $0x40] sm:$0xff] %v235
  %252 = vst [vmem:[#allocation2 + $0x48] sm:$0xff] %v236
  %253 = vst [vmem:[#allocation2 + $0x50] sm:$0xff] %v237
  %254 = vst [vmem:[#allocation2 + $0x58] sm:$0xff] %v238
  %255 = vst [vmem:[#allocation2 + $0x60] sm:$0xff] %v239
  %256 = vst [vmem:[#allocation2 + $0x68] sm:$0xff] %v240
  %257 = vst [vmem:[#allocation2 + $0x70] sm:$0xff] %v241
  %258 = vst [vmem:[#allocation2 + $0x78] sm:$0xff] %v242
  // Predicated region
  $region18: #{fcn_mt_forward.22} parent=0 // pred_check
    %p259 = pneg %p14
  $region19: #{fcn_mt_forward.22} parent=0 // pred_check_branch
    %261 = sbr.rel (%p259) target = $region21
  $region20: #{fcn_mt_forward.22} parent=0 // pred_region
    %v262 = vld [vmem:[#allocation2] sm:$0xff]
    %v263 = vld [vmem:[#allocation2 + $0x8] sm:$0xff]
    %v264 = vld [vmem:[#allocation2 + $0x10] sm:$0xff]
    %v265 = vld [vmem:[#allocation2 + $0x18] sm:$0xff]
    %v266 = vld [vmem:[#allocation2 + $0x20] sm:$0xff]
    %v267 = vld [vmem:[#allocation2 + $0x28] sm:$0xff]
    %v268 = vld [vmem:[#allocation2 + $0x30] sm:$0xff]
    %v269 = vld [vmem:[#allocation2 + $0x38] sm:$0xff]
    %v270 = vld [vmem:[#allocation2 + $0x40] sm:$0xff]
    %v271 = vld [vmem:[#allocation2 + $0x48] sm:$0xff]
    %v272 = vld [vmem:[#allocation2 + $0x50] sm:$0xff]
    %v273 = vld [vmem:[#allocation2 + $0x58] sm:$0xff]
    %v274 = vld [vmem:[#allocation2 + $0x60] sm:$0xff]
    %v275 = vld [vmem:[#allocation2 + $0x68] sm:$0xff]
    %v276 = vld [vmem:[#allocation2 + $0x70] sm:$0xff]
    %v277 = vld [vmem:[#allocation2 + $0x78] sm:$0xff]
    %v278 = vld [vmem:[%s2] sm:$0x1]
    %v280 = vperm.slane %v278, 0
    %v282 = vadd.f32 %v262, %v280
    %v283 = vadd.f32 %v263, %v280
    %v284 = vadd.f32 %v264, %v280
    %v285 = vadd.f32 %v265, %v280
    %v286 = vadd.f32 %v266, %v280
    %v287 = vadd.f32 %v267, %v280
    %v288 = vadd.f32 %v268, %v280
    %v289 = vadd.f32 %v269, %v280
    %v290 = vadd.f32 %v270, %v280
    %v291 = vadd.f32 %v271, %v280
    %v292 = vadd.f32 %v272, %v280
    %v293 = vadd.f32 %v273, %v280
    %v294 = vadd.f32 %v274, %v280
    %v295 = vadd.f32 %v275, %v280
    %v296 = vadd.f32 %v276, %v280
    %v297 = vadd.f32 %v277, %v280
    %v298 = vmax.f32 %v282, 0.0
    %v299 = vmax.f32 %v283, 0.0
    %v300 = vmax.f32 %v284, 0.0
    %v301 = vmax.f32 %v285, 0.0
    %v302 = vmax.f32 %v286, 0.0
    %v303 = vmax.f32 %v287, 0.0
    %v304 = vmax.f32 %v288, 0.0
    %v305 = vmax.f32 %v289, 0.0
    %v306 = vmax.f32 %v290, 0.0
    %v307 = vmax.f32 %v291, 0.0
    %v308 = vmax.f32 %v292, 0.0
    %v309 = vmax.f32 %v293, 0.0
    %v310 = vmax.f32 %v294, 0.0
    %v311 = vmax.f32 %v295, 0.0
    %v312 = vmax.f32 %v296, 0.0
    %v313 = vmax.f32 %v297, 0.0
    %314 = vst [vmem:[%s3] sm:$0xff] %v298
    %315 = vst [vmem:[%s3 + $0x8] sm:$0xff] %v299
    %316 = vst [vmem:[%s3 + $0x10] sm:$0xff] %v300
    %317 = vst [vmem:[%s3 + $0x18] sm:$0xff] %v301
    %318 = vst [vmem:[%s3 + $0x20] sm:$0xff] %v302
    %319 = vst [vmem:[%s3 + $0x28] sm:$0xff] %v303
    %320 = vst [vmem:[%s3 + $0x30] sm:$0xff] %v304
    %321 = vst [vmem:[%s3 + $0x38] sm:$0xff] %v305
    %322 = vst [vmem:[%s3 + $0x40] sm:$0xff] %v306
    %323 = vst [vmem:[%s3 + $0x48] sm:$0xff] %v307
    %324 = vst [vmem:[%s3 + $0x50] sm:$0xff] %v308
    %325 = vst [vmem:[%s3 + $0x58] sm:$0xff] %v309
    %326 = vst [vmem:[%s3 + $0x60] sm:$0xff] %v310
    %327 = vst [vmem:[%s3 + $0x68] sm:$0xff] %v311
    %328 = vst [vmem:[%s3 + $0x70] sm:$0xff] %v312
    %329 = vst [vmem:[%s3 + $0x78] sm:$0xff] %v313
  $region21: #{fcn_mt_forward.22} parent=0 // pred_fallthru
    _
  // Predicated region
  $region22: #{fcn_mt_forward.22} parent=0 // pred_check
    _
  $region23: #{fcn_mt_forward.22} parent=0 // pred_check_branch
    %331 = sbr.rel (0) target = $region25
  $region24: #{fcn_mt_forward.22} parent=0 // pred_region
    _
  $region25: #{fcn_mt_forward.22} parent=0 // pred_fallthru
    _
  // Predicated region
  $region26: #{fcn_mt_forward.22} parent=0 // pred_check
    _
  $region27: #{fcn_mt_forward.22} parent=0 // pred_check_branch
    %333 = sbr.rel (0) target = $region29
  $region28: #{fcn_mt_forward.22} parent=0 // pred_region
    _
  $region29: #{fcn_mt_forward.22} parent=0 // pred_fallthru
    _

// kernel: fcn_mt_forward.21
$region0: #{fcn_mt_forward.21}
  #allocation0 [shape = 'u32[]', space=smem, size = 0x4, offset = 0x4, fixed_abs, tag = 'smem constant byte address 0x4 - core index']
  #allocation1 [shape = 'u32[72,128]{1,0:T(1,128)}', space=vmem, size = 0x9000, scoped, tag = 'internal scratch']
  #allocation2 [shape = 'f32[128,128]{1,0:T(8,128)}', space=vmem, size = 0x10000, scoped, tag = 'scratch operand']
  %s0 = inlined_call_operand.vmem [shape: bf16[128,128], index: 0, kind: input, shape index: {}]
  %s1 = inlined_call_operand.vmem [shape: bf16[128,128], index: 1, kind: input, shape index: {}]
  %s2 = inlined_call_operand.vmem [shape: f32[1,128], index: 2, kind: input, shape index: {}]
  %s3 = inlined_call_operand.vmem [shape: f32[128,128], index: 3, kind: output, shape index: {}]
  %s4 = sld [smem:[#allocation0]]
  $region30: #{fcn_mt_forward.21} parent=0
    _
  %s6 = ssub.s32 1, %s4
  %s7 = scalar_select 0, %s6, %s4
  // Predicated region
  $region2: #{fcn_mt_forward.21} parent=0 // pred_check
    _
  $region3: #{fcn_mt_forward.21} parent=0 // pred_check_branch
    %9 = sbr.rel (0) target = $region5
  $region4: #{fcn_mt_forward.21} parent=0 // pred_region
    _
  $region5: #{fcn_mt_forward.21} parent=0 // pred_fallthru
    _
  // Predicated region
  $region6: #{fcn_mt_forward.21} parent=0 // pred_check
    _
  $region7: #{fcn_mt_forward.21} parent=0 // pred_check_branch
    %11 = sbr.rel (0) target = $region9
  $region8: #{fcn_mt_forward.21} parent=0 // pred_region
    _
  $region9: #{fcn_mt_forward.21} parent=0 // pred_fallthru
    _
  // Predicated region
  $region10: #{fcn_mt_forward.21} parent=0 // pred_check
    _
  $region11: #{fcn_mt_forward.21} parent=0 // pred_check_branch
    %13 = sbr.rel (0) target = $region13
  $region12: #{fcn_mt_forward.21} parent=0 // pred_region
    _
  $region13: #{fcn_mt_forward.21} parent=0 // pred_fallthru
    _
  %p14 = scmp.eq.s32.totalorder 0, 0
  // Predicated region
  $region14: #{fcn_mt_forward.21} parent=0 // pred_check
    %p15 = pneg %p14
  $region15: #{fcn_mt_forward.21} parent=0 // pred_check_branch
    %17 = sbr.rel (%p15) target = $region17
  $region16: #{fcn_mt_forward.21} parent=0 // pred_region
    %18 = vst [vmem:[#allocation2] sm:$0xff] 0.0
    %19 = vst [vmem:[#allocation2 + $0x8] sm:$0xff] 0.0
    %20 = vst [vmem:[#allocation2 + $0x10] sm:$0xff] 0.0
    %21 = vst [vmem:[#allocation2 + $0x18] sm:$0xff] 0.0
    %22 = vst [vmem:[#allocation2 + $0x20] sm:$0xff] 0.0
    %23 = vst [vmem:[#allocation2 + $0x28] sm:$0xff] 0.0
    %24 = vst [vmem:[#allocation2 + $0x30] sm:$0xff] 0.0
    %25 = vst [vmem:[#allocation2 + $0x38] sm:$0xff] 0.0
    %26 = vst [vmem:[#allocation2 + $0x40] sm:$0xff] 0.0
    %27 = vst [vmem:[#allocation2 + $0x48] sm:$0xff] 0.0
    %28 = vst [vmem:[#allocation2 + $0x50] sm:$0xff] 0.0
    %29 = vst [vmem:[#allocation2 + $0x58] sm:$0xff] 0.0
    %30 = vst [vmem:[#allocation2 + $0x60] sm:$0xff] 0.0
    %31 = vst [vmem:[#allocation2 + $0x68] sm:$0xff] 0.0
    %32 = vst [vmem:[#allocation2 + $0x70] sm:$0xff] 0.0
    %33 = vst [vmem:[#allocation2 + $0x78] sm:$0xff] 0.0
  $region17: #{fcn_mt_forward.21} parent=0 // pred_fallthru
    _
  %v34 = vld [vmem:[#allocation2] sm:$0xff]
  %v35 = vld [vmem:[#allocation2 + $0x8] sm:$0xff]
  %v36 = vld [vmem:[#allocation2 + $0x10] sm:$0xff]
  %v37 = vld [vmem:[#allocation2 + $0x18] sm:$0xff]
  %v38 = vld [vmem:[#allocation2 + $0x20] sm:$0xff]
  %v39 = vld [vmem:[#allocation2 + $0x28] sm:$0xff]
  %v40 = vld [vmem:[#allocation2 + $0x30] sm:$0xff]
  %v41 = vld [vmem:[#allocation2 + $0x38] sm:$0xff]
  %v42 = vld [vmem:[#allocation2 + $0x40] sm:$0xff]
  %v43 = vld [vmem:[#allocation2 + $0x48] sm:$0xff]
  %v44 = vld [vmem:[#allocation2 + $0x50] sm:$0xff]
  %v45 = vld [vmem:[#allocation2 + $0x58] sm:$0xff]
  %v46 = vld [vmem:[#allocation2 + $0x60] sm:$0xff]
  %v47 = vld [vmem:[#allocation2 + $0x68] sm:$0xff]
  %v48 = vld [vmem:[#allocation2 + $0x70] sm:$0xff]
  %v49 = vld [vmem:[#allocation2 + $0x78] sm:$0xff]
  %v50 = vld [vmem:[%s0] sm:$0xf]
  %v51 = vld [vmem:[%s0 + $0x4] sm:$0xf]
  %v52 = vld [vmem:[%s0 + $0x8] sm:$0xf]
  %v53 = vld [vmem:[%s0 + $0xc] sm:$0xf]
  %v54 = vld [vmem:[%s0 + $0x10] sm:$0xf]
  %v55 = vld [vmem:[%s0 + $0x14] sm:$0xf]
  %v56 = vld [vmem:[%s0 + $0x18] sm:$0xf]
  %v57 = vld [vmem:[%s0 + $0x1c] sm:$0xf]
  %v58 = vld [vmem:[%s0 + $0x20] sm:$0xf]
  %v59 = vld [vmem:[%s0 + $0x24] sm:$0xf]
  %v60 = vld [vmem:[%s0 + $0x28] sm:$0xf]
  %v61 = vld [vmem:[%s0 + $0x2c] sm:$0xf]
  %v62 = vld [vmem:[%s0 + $0x30] sm:$0xf]
  %v63 = vld [vmem:[%s0 + $0x34] sm:$0xf]
  %v64 = vld [vmem:[%s0 + $0x38] sm:$0xf]
  %v65 = vld [vmem:[%s0 + $0x3c] sm:$0xf]
  %v66 = vld [vmem:[%s1] sm:$0xf]
  %v67 = vld [vmem:[%s1 + $0x4] sm:$0xf]
  %v68 = vld [vmem:[%s1 + $0x8] sm:$0xf]
  %v69 = vld [vmem:[%s1 + $0xc] sm:$0xf]
  %v70 = vld [vmem:[%s1 + $0x10] sm:$0xf]
  %v71 = vld [vmem:[%s1 + $0x14] sm:$0xf]
  %v72 = vld [vmem:[%s1 + $0x18] sm:$0xf]
  %v73 = vld [vmem:[%s1 + $0x1c] sm:$0xf]
  %v74 = vld [vmem:[%s1 + $0x20] sm:$0xf]
  %v75 = vld [vmem:[%s1 + $0x24] sm:$0xf]
  %v76 = vld [vmem:[%s1 + $0x28] sm:$0xf]
  %v77 = vld [vmem:[%s1 + $0x2c] sm:$0xf]
  %v78 = vld [vmem:[%s1 + $0x30] sm:$0xf]
  %v79 = vld [vmem:[%s1 + $0x34] sm:$0xf]
  %v80 = vld [vmem:[%s1 + $0x38] sm:$0xf]
  %v81 = vld [vmem:[%s1 + $0x3c] sm:$0xf]
  %v98 = vunpack.c.l.b16 %v50
  %v99 = vunpack.c.l.b16 %v51
  %v100 = vunpack.c.l.b16 %v52
  %v101 = vunpack.c.l.b16 %v53
  %v102 = vunpack.c.l.b16 %v54
  %v103 = vunpack.c.l.b16 %v55
  %v104 = vunpack.c.l.b16 %v56
  %v105 = vunpack.c.l.b16 %v57
  %v106 = vunpack.c.l.b16 %v58
  %v107 = vunpack.c.l.b16 %v59
  %v108 = vunpack.c.l.b16 %v60
  %v109 = vunpack.c.l.b16 %v61
  %v110 = vunpack.c.l.b16 %v62
  %v111 = vunpack.c.l.b16 %v63
  %v112 = vunpack.c.l.b16 %v64
  %v113 = vunpack.c.l.b16 %v65
  %v114 = vpack.c.b16 %v99, %v98
  %v115 = vpack.c.b16 %v101, %v100
  %v116 = vpack.c.b16 %v103, %v102
  %v117 = vpack.c.b16 %v105, %v104
  %v118 = vpack.c.b16 %v107, %v106
  %v119 = vpack.c.b16 %v109, %v108
  %v120 = vpack.c.b16 %v111, %v110
  %v121 = vpack.c.b16 %v113, %v112
  %v146 = vunpack.c.l.b16 %v66
  %v147 = vunpack.c.l.b16 %v67
  %v148 = vunpack.c.l.b16 %v68
  %v149 = vunpack.c.l.b16 %v69
  %v150 = vunpack.c.l.b16 %v70
  %v151 = vunpack.c.l.b16 %v71
  %v152 = vunpack.c.l.b16 %v72
  %v153 = vunpack.c.l.b16 %v73
  %v154 = vunpack.c.l.b16 %v74
  %v155 = vunpack.c.l.b16 %v75
  %v156 = vunpack.c.l.b16 %v76
  %v157 = vunpack.c.l.b16 %v77
  %v158 = vunpack.c.l.b16 %v78
  %v159 = vunpack.c.l.b16 %v79
  %v160 = vunpack.c.l.b16 %v80
  %v161 = vunpack.c.l.b16 %v81
  %v162 = vpack.c.b16 %v147, %v146
  %v163 = vpack.c.b16 %v149, %v148
  %v164 = vpack.c.b16 %v151, %v150
  %v165 = vpack.c.b16 %v153, %v152
  %v166 = vpack.c.b16 %v155, %v154
  %v167 = vpack.c.b16 %v157, %v156
  %v168 = vpack.c.b16 %v159, %v158
  %v169 = vpack.c.b16 %v161, %v160
  %178 = vmatpush.bf16.msra.mxu0 %v169
  %179 = vmatpush.bf16.msra.mxu0 %v168
  %180 = vmatpush.bf16.msra.mxu0 %v167
  %181 = vmatpush.bf16.msra.mxu0 %v166
  %182 = vmatpush.bf16.msra.mxu0 %v165
  %183 = vmatpush.bf16.msra.mxu0 %v164
  %184 = vmatpush.bf16.msra.mxu0 %v163
  %185 = vmatpush.bf16.msra.mxu0 %v162
  %186 = vmatmul.bf16.gmra.mxu0 %v114
  %v187 = vpop.f32.mrf.mxu0
  %v188 = vadd.f32 0.0, %v187
  %v189 = vpop.f32.mrf.mxu0
  %v190 = vadd.f32 0.0, %v189
  %191 = vmatmul.bf16.gmra.mxu0 %v115
  %v192 = vpop.f32.mrf.mxu0
  %v193 = vadd.f32 0.0, %v192
  %v194 = vpop.f32.mrf.mxu0
  %v195 = vadd.f32 0.0, %v194
  %196 = vmatmul.bf16.gmra.mxu0 %v116
  %v197 = vpop.f32.mrf.mxu0
  %v198 = vadd.f32 0.0, %v197
  %v199 = vpop.f32.mrf.mxu0
  %v200 = vadd.f32 0.0, %v199
  %201 = vmatmul.bf16.gmra.mxu0 %v117
  %v202 = vpop.f32.mrf.mxu0
  %v203 = vadd.f32 0.0, %v202
  %v204 = vpop.f32.mrf.mxu0
  %v205 = vadd.f32 0.0, %v204
  %206 = vmatmul.bf16.gmra.mxu0 %v118
  %v207 = vpop.f32.mrf.mxu0
  %v208 = vadd.f32 0.0, %v207
  %v209 = vpop.f32.mrf.mxu0
  %v210 = vadd.f32 0.0, %v209
  %211 = vmatmul.bf16.gmra.mxu0 %v119
  %v212 = vpop.f32.mrf.mxu0
  %v213 = vadd.f32 0.0, %v212
  %v214 = vpop.f32.mrf.mxu0
  %v215 = vadd.f32 0.0, %v214
  %216 = vmatmul.bf16.gmra.mxu0 %v120
  %v217 = vpop.f32.mrf.mxu0
  %v218 = vadd.f32 0.0, %v217
  %v219 = vpop.f32.mrf.mxu0
  %v220 = vadd.f32 0.0, %v219
  %221 = vmatmul.bf16.gmra.mxu0 %v121
  %v222 = vpop.f32.mrf.mxu0
  %v223 = vadd.f32 0.0, %v222
  %v224 = vpop.f32.mrf.mxu0
  %v225 = vadd.f32 0.0, %v224
  %226 = vdwg.mxu0
  %v227 = vadd.f32 %v34, %v188
  %v228 = vadd.f32 %v35, %v190
  %v229 = vadd.f32 %v36, %v193
  %v230 = vadd.f32 %v37, %v195
  %v231 = vadd.f32 %v38, %v198
  %v232 = vadd.f32 %v39, %v200
  %v233 = vadd.f32 %v40, %v203
  %v234 = vadd.f32 %v41, %v205
  %v235 = vadd.f32 %v42, %v208
  %v236 = vadd.f32 %v43, %v210
  %v237 = vadd.f32 %v44, %v213
  %v238 = vadd.f32 %v45, %v215
  %v239 = vadd.f32 %v46, %v218
  %v240 = vadd.f32 %v47, %v220
  %v241 = vadd.f32 %v48, %v223
  %v242 = vadd.f32 %v49, %v225
  %243 = vst [vmem:[#allocation2] sm:$0xff] %v227
  %244 = vst [vmem:[#allocation2 + $0x8] sm:$0xff] %v228
  %245 = vst [vmem:[#allocation2 + $0x10] sm:$0xff] %v229
  %246 = vst [vmem:[#allocation2 + $0x18] sm:$0xff] %v230
  %247 = vst [vmem:[#allocation2 + $0x20] sm:$0xff] %v231
  %248 = vst [vmem:[#allocation2 + $0x28] sm:$0xff] %v232
  %249 = vst [vmem:[#allocation2 + $0x30] sm:$0xff] %v233
  %250 = vst [vmem:[#allocation2 + $0x38] sm:$0xff] %v234
  %251 = vst [vmem:[#allocation2 + $0x40] sm:$0xff] %v235
  %252 = vst [vmem:[#allocation2 + $0x48] sm:$0xff] %v236
  %253 = vst [vmem:[#allocation2 + $0x50] sm:$0xff] %v237
  %254 = vst [vmem:[#allocation2 + $0x58] sm:$0xff] %v238
  %255 = vst [vmem:[#allocation2 + $0x60] sm:$0xff] %v239
  %256 = vst [vmem:[#allocation2 + $0x68] sm:$0xff] %v240
  %257 = vst [vmem:[#allocation2 + $0x70] sm:$0xff] %v241
  %258 = vst [vmem:[#allocation2 + $0x78] sm:$0xff] %v242
  // Predicated region
  $region18: #{fcn_mt_forward.21} parent=0 // pred_check
    %p259 = pneg %p14
  $region19: #{fcn_mt_forward.21} parent=0 // pred_check_branch
    %261 = sbr.rel (%p259) target = $region21
  $region20: #{fcn_mt_forward.21} parent=0 // pred_region
    %v262 = vld [vmem:[#allocation2] sm:$0xff]
    %v263 = vld [vmem:[#allocation2 + $0x8] sm:$0xff]
    %v264 = vld [vmem:[#allocation2 + $0x10] sm:$0xff]
    %v265 = vld [vmem:[#allocation2 + $0x18] sm:$0xff]
    %v266 = vld [vmem:[#allocation2 + $0x20] sm:$0xff]
    %v267 = vld [vmem:[#allocation2 + $0x28] sm:$0xff]
    %v268 = vld [vmem:[#allocation2 + $0x30] sm:$0xff]
    %v269 = vld [vmem:[#allocation2 + $0x38] sm:$0xff]
    %v270 = vld [vmem:[#allocation2 + $0x40] sm:$0xff]
    %v271 = vld [vmem:[#allocation2 + $0x48] sm:$0xff]
    %v272 = vld [vmem:[#allocation2 + $0x50] sm:$0xff]
    %v273 = vld [vmem:[#allocation2 + $0x58] sm:$0xff]
    %v274 = vld [vmem:[#allocation2 + $0x60] sm:$0xff]
    %v275 = vld [vmem:[#allocation2 + $0x68] sm:$0xff]
    %v276 = vld [vmem:[#allocation2 + $0x70] sm:$0xff]
    %v277 = vld [vmem:[#allocation2 + $0x78] sm:$0xff]
    %v278 = vld [vmem:[%s2] sm:$0x1]
    %v280 = vperm.slane %v278, 0
    %v282 = vadd.f32 %v262, %v280
    %v283 = vadd.f32 %v263, %v280
    %v284 = vadd.f32 %v264, %v280
    %v285 = vadd.f32 %v265, %v280
    %v286 = vadd.f32 %v266, %v280
    %v287 = vadd.f32 %v267, %v280
    %v288 = vadd.f32 %v268, %v280
    %v289 = vadd.f32 %v269, %v280
    %v290 = vadd.f32 %v270, %v280
    %v291 = vadd.f32 %v271, %v280
    %v292 = vadd.f32 %v272, %v280
    %v293 = vadd.f32 %v273, %v280
    %v294 = vadd.f32 %v274, %v280
    %v295 = vadd.f32 %v275, %v280
    %v296 = vadd.f32 %v276, %v280
    %v297 = vadd.f32 %v277, %v280
    %v298 = vmax.f32 %v282, 0.0
    %v299 = vmax.f32 %v283, 0.0
    %v300 = vmax.f32 %v284, 0.0
    %v301 = vmax.f32 %v285, 0.0
    %v302 = vmax.f32 %v286, 0.0
    %v303 = vmax.f32 %v287, 0.0
    %v304 = vmax.f32 %v288, 0.0
    %v305 = vmax.f32 %v289, 0.0
    %v306 = vmax.f32 %v290, 0.0
    %v307 = vmax.f32 %v291, 0.0
    %v308 = vmax.f32 %v292, 0.0
    %v309 = vmax.f32 %v293, 0.0
    %v310 = vmax.f32 %v294, 0.0
    %v311 = vmax.f32 %v295, 0.0
    %v312 = vmax.f32 %v296, 0.0
    %v313 = vmax.f32 %v297, 0.0
    %314 = vst [vmem:[%s3] sm:$0xff] %v298
    %315 = vst [vmem:[%s3 + $0x8] sm:$0xff] %v299
    %316 = vst [vmem:[%s3 + $0x10] sm:$0xff] %v300
    %317 = vst [vmem:[%s3 + $0x18] sm:$0xff] %v301
    %318 = vst [vmem:[%s3 + $0x20] sm:$0xff] %v302
    %319 = vst [vmem:[%s3 + $0x28] sm:$0xff] %v303
    %320 = vst [vmem:[%s3 + $0x30] sm:$0xff] %v304
    %321 = vst [vmem:[%s3 + $0x38] sm:$0xff] %v305
    %322 = vst [vmem:[%s3 + $0x40] sm:$0xff] %v306
    %323 = vst [vmem:[%s3 + $0x48] sm:$0xff] %v307
    %324 = vst [vmem:[%s3 + $0x50] sm:$0xff] %v308
    %325 = vst [vmem:[%s3 + $0x58] sm:$0xff] %v309
    %326 = vst [vmem:[%s3 + $0x60] sm:$0xff] %v310
    %327 = vst [vmem:[%s3 + $0x68] sm:$0xff] %v311
    %328 = vst [vmem:[%s3 + $0x70] sm:$0xff] %v312
    %329 = vst [vmem:[%s3 + $0x78] sm:$0xff] %v313
  $region21: #{fcn_mt_forward.21} parent=0 // pred_fallthru
    _
  // Predicated region
  $region22: #{fcn_mt_forward.21} parent=0 // pred_check
    _
  $region23: #{fcn_mt_forward.21} parent=0 // pred_check_branch
    %331 = sbr.rel (0) target = $region25
  $region24: #{fcn_mt_forward.21} parent=0 // pred_region
    _
  $region25: #{fcn_mt_forward.21} parent=0 // pred_fallthru
    _
  // Predicated region
  $region26: #{fcn_mt_forward.21} parent=0 // pred_check
    _
  $region27: #{fcn_mt_forward.21} parent=0 // pred_check_branch
    %333 = sbr.rel (0) target = $region29
  $region28: #{fcn_mt_forward.21} parent=0 // pred_region
    _
  $region29: #{fcn_mt_forward.21} parent=0 // pred_fallthru
    _

// kernel: fcn_mt_forward.24
$region0: #{fcn_mt_forward.24}
  #allocation0 [shape = 'u32[]', space=smem, size = 0x4, offset = 0x4, fixed_abs, tag = 'smem constant byte address 0x4 - core index']
  #allocation1 [shape = 'u32[72,128]{1,0:T(1,128)}', space=vmem, size = 0x9000, scoped, tag = 'internal scratch']
  #allocation2 [shape = 'f32[128,128]{1,0:T(8,128)}', space=vmem, size = 0x10000, scoped, tag = 'scratch operand']
  %s0 = inlined_call_operand.vmem [shape: bf16[128,128], index: 0, kind: input, shape index: {}]
  %s1 = inlined_call_operand.vmem [shape: bf16[128,128], index: 1, kind: input, shape index: {}]
  %s2 = inlined_call_operand.vmem [shape: f32[1,128], index: 2, kind: input, shape index: {}]
  %s3 = inlined_call_operand.vmem [shape: f32[128,128], index: 3, kind: output, shape index: {}]
  %s4 = sld [smem:[#allocation0]]
  $region30: #{fcn_mt_forward.24} parent=0
    _
  %s6 = ssub.s32 1, %s4
  %s7 = scalar_select 0, %s6, %s4
  // Predicated region
  $region2: #{fcn_mt_forward.24} parent=0 // pred_check
    _
  $region3: #{fcn_mt_forward.24} parent=0 // pred_check_branch
    %9 = sbr.rel (0) target = $region5
  $region4: #{fcn_mt_forward.24} parent=0 // pred_region
    _
  $region5: #{fcn_mt_forward.24} parent=0 // pred_fallthru
    _
  // Predicated region
  $region6: #{fcn_mt_forward.24} parent=0 // pred_check
    _
  $region7: #{fcn_mt_forward.24} parent=0 // pred_check_branch
    %11 = sbr.rel (0) target = $region9
  $region8: #{fcn_mt_forward.24} parent=0 // pred_region
    _
  $region9: #{fcn_mt_forward.24} parent=0 // pred_fallthru
    _
  // Predicated region
  $region10: #{fcn_mt_forward.24} parent=0 // pred_check
    _
  $region11: #{fcn_mt_forward.24} parent=0 // pred_check_branch
    %13 = sbr.rel (0) target = $region13
  $region12: #{fcn_mt_forward.24} parent=0 // pred_region
    _
  $region13: #{fcn_mt_forward.24} parent=0 // pred_fallthru
    _
  %p14 = scmp.eq.s32.totalorder 0, 0
  // Predicated region
  $region14: #{fcn_mt_forward.24} parent=0 // pred_check
    %p15 = pneg %p14
  $region15: #{fcn_mt_forward.24} parent=0 // pred_check_branch
    %17 = sbr.rel (%p15) target = $region17
  $region16: #{fcn_mt_forward.24} parent=0 // pred_region
    %18 = vst [vmem:[#allocation2] sm:$0xff] 0.0
    %19 = vst [vmem:[#allocation2 + $0x8] sm:$0xff] 0.0
    %20 = vst [vmem:[#allocation2 + $0x10] sm:$0xff] 0.0
    %21 = vst [vmem:[#allocation2 + $0x18] sm:$0xff] 0.0
    %22 = vst [vmem:[#allocation2 + $0x20] sm:$0xff] 0.0
    %23 = vst [vmem:[#allocation2 + $0x28] sm:$0xff] 0.0
    %24 = vst [vmem:[#allocation2 + $0x30] sm:$0xff] 0.0
    %25 = vst [vmem:[#allocation2 + $0x38] sm:$0xff] 0.0
    %26 = vst [vmem:[#allocation2 + $0x40] sm:$0xff] 0.0
    %27 = vst [vmem:[#allocation2 + $0x48] sm:$0xff] 0.0
    %28 = vst [vmem:[#allocation2 + $0x50] sm:$0xff] 0.0
    %29 = vst [vmem:[#allocation2 + $0x58] sm:$0xff] 0.0
    %30 = vst [vmem:[#allocation2 + $0x60] sm:$0xff] 0.0
    %31 = vst [vmem:[#allocation2 + $0x68] sm:$0xff] 0.0
    %32 = vst [vmem:[#allocation2 + $0x70] sm:$0xff] 0.0
    %33 = vst [vmem:[#allocation2 + $0x78] sm:$0xff] 0.0
  $region17: #{fcn_mt_forward.24} parent=0 // pred_fallthru
    _
  %v34 = vld [vmem:[#allocation2] sm:$0xff]
  %v35 = vld [vmem:[#allocation2 + $0x8] sm:$0xff]
  %v36 = vld [vmem:[#allocation2 + $0x10] sm:$0xff]
  %v37 = vld [vmem:[#allocation2 + $0x18] sm:$0xff]
  %v38 = vld [vmem:[#allocation2 + $0x20] sm:$0xff]
  %v39 = vld [vmem:[#allocation2 + $0x28] sm:$0xff]
  %v40 = vld [vmem:[#allocation2 + $0x30] sm:$0xff]
  %v41 = vld [vmem:[#allocation2 + $0x38] sm:$0xff]
  %v42 = vld [vmem:[#allocation2 + $0x40] sm:$0xff]
  %v43 = vld [vmem:[#allocation2 + $0x48] sm:$0xff]
  %v44 = vld [vmem:[#allocation2 + $0x50] sm:$0xff]
  %v45 = vld [vmem:[#allocation2 + $0x58] sm:$0xff]
  %v46 = vld [vmem:[#allocation2 + $0x60] sm:$0xff]
  %v47 = vld [vmem:[#allocation2 + $0x68] sm:$0xff]
  %v48 = vld [vmem:[#allocation2 + $0x70] sm:$0xff]
  %v49 = vld [vmem:[#allocation2 + $0x78] sm:$0xff]
  %v50 = vld [vmem:[%s0] sm:$0xf]
  %v51 = vld [vmem:[%s0 + $0x4] sm:$0xf]
  %v52 = vld [vmem:[%s0 + $0x8] sm:$0xf]
  %v53 = vld [vmem:[%s0 + $0xc] sm:$0xf]
  %v54 = vld [vmem:[%s0 + $0x10] sm:$0xf]
  %v55 = vld [vmem:[%s0 + $0x14] sm:$0xf]
  %v56 = vld [vmem:[%s0 + $0x18] sm:$0xf]
  %v57 = vld [vmem:[%s0 + $0x1c] sm:$0xf]
  %v58 = vld [vmem:[%s0 + $0x20] sm:$0xf]
  %v59 = vld [vmem:[%s0 + $0x24] sm:$0xf]
  %v60 = vld [vmem:[%s0 + $0x28] sm:$0xf]
  %v61 = vld [vmem:[%s0 + $0x2c] sm:$0xf]
  %v62 = vld [vmem:[%s0 + $0x30] sm:$0xf]
  %v63 = vld [vmem:[%s0 + $0x34] sm:$0xf]
  %v64 = vld [vmem:[%s0 + $0x38] sm:$0xf]
  %v65 = vld [vmem:[%s0 + $0x3c] sm:$0xf]
  %v66 = vld [vmem:[%s1] sm:$0xf]
  %v67 = vld [vmem:[%s1 + $0x4] sm:$0xf]
  %v68 = vld [vmem:[%s1 + $0x8] sm:$0xf]
  %v69 = vld [vmem:[%s1 + $0xc] sm:$0xf]
  %v70 = vld [vmem:[%s1 + $0x10] sm:$0xf]
  %v71 = vld [vmem:[%s1 + $0x14] sm:$0xf]
  %v72 = vld [vmem:[%s1 + $0x18] sm:$0xf]
  %v73 = vld [vmem:[%s1 + $0x1c] sm:$0xf]
  %v74 = vld [vmem:[%s1 + $0x20] sm:$0xf]
  %v75 = vld [vmem:[%s1 + $0x24] sm:$0xf]
  %v76 = vld [vmem:[%s1 + $0x28] sm:$0xf]
  %v77 = vld [vmem:[%s1 + $0x2c] sm:$0xf]
  %v78 = vld [vmem:[%s1 + $0x30] sm:$0xf]
  %v79 = vld [vmem:[%s1 + $0x34] sm:$0xf]
  %v80 = vld [vmem:[%s1 + $0x38] sm:$0xf]
  %v81 = vld [vmem:[%s1 + $0x3c] sm:$0xf]
  %v98 = vunpack.c.l.b16 %v50
  %v99 = vunpack.c.l.b16 %v51
  %v100 = vunpack.c.l.b16 %v52
  %v101 = vunpack.c.l.b16 %v53
  %v102 = vunpack.c.l.b16 %v54
  %v103 = vunpack.c.l.b16 %v55
  %v104 = vunpack.c.l.b16 %v56
  %v105 = vunpack.c.l.b16 %v57
  %v106 = vunpack.c.l.b16 %v58
  %v107 = vunpack.c.l.b16 %v59
  %v108 = vunpack.c.l.b16 %v60
  %v109 = vunpack.c.l.b16 %v61
  %v110 = vunpack.c.l.b16 %v62
  %v111 = vunpack.c.l.b16 %v63
  %v112 = vunpack.c.l.b16 %v64
  %v113 = vunpack.c.l.b16 %v65
  %v114 = vpack.c.b16 %v99, %v98
  %v115 = vpack.c.b16 %v101, %v100
  %v116 = vpack.c.b16 %v103, %v102
  %v117 = vpack.c.b16 %v105, %v104
  %v118 = vpack.c.b16 %v107, %v106
  %v119 = vpack.c.b16 %v109, %v108
  %v120 = vpack.c.b16 %v111, %v110
  %v121 = vpack.c.b16 %v113, %v112
  %v146 = vunpack.c.l.b16 %v66
  %v147 = vunpack.c.l.b16 %v67
  %v148 = vunpack.c.l.b16 %v68
  %v149 = vunpack.c.l.b16 %v69
  %v150 = vunpack.c.l.b16 %v70
  %v151 = vunpack.c.l.b16 %v71
  %v152 = vunpack.c.l.b16 %v72
  %v153 = vunpack.c.l.b16 %v73
  %v154 = vunpack.c.l.b16 %v74
  %v155 = vunpack.c.l.b16 %v75
  %v156 = vunpack.c.l.b16 %v76
  %v157 = vunpack.c.l.b16 %v77
  %v158 = vunpack.c.l.b16 %v78
  %v159 = vunpack.c.l.b16 %v79
  %v160 = vunpack.c.l.b16 %v80
  %v161 = vunpack.c.l.b16 %v81
  %v162 = vpack.c.b16 %v147, %v146
  %v163 = vpack.c.b16 %v149, %v148
  %v164 = vpack.c.b16 %v151, %v150
  %v165 = vpack.c.b16 %v153, %v152
  %v166 = vpack.c.b16 %v155, %v154
  %v167 = vpack.c.b16 %v157, %v156
  %v168 = vpack.c.b16 %v159, %v158
  %v169 = vpack.c.b16 %v161, %v160
  %178 = vmatpush.bf16.msra.mxu0 %v169
  %179 = vmatpush.bf16.msra.mxu0 %v168
  %180 = vmatpush.bf16.msra.mxu0 %v167
  %181 = vmatpush.bf16.msra.mxu0 %v166
  %182 = vmatpush.bf16.msra.mxu0 %v165
  %183 = vmatpush.bf16.msra.mxu0 %v164
  %184 = vmatpush.bf16.msra.mxu0 %v163
  %185 = vmatpush.bf16.msra.mxu0 %v162
  %186 = vmatmul.bf16.gmra.mxu0 %v114
  %v187 = vpop.f32.mrf.mxu0
  %v188 = vadd.f32 0.0, %v187
  %v189 = vpop.f32.mrf.mxu0
  %v190 = vadd.f32 0.0, %v189
  %191 = vmatmul.bf16.gmra.mxu0 %v115
  %v192 = vpop.f32.mrf.mxu0
  %v193 = vadd.f32 0.0, %v192
  %v194 = vpop.f32.mrf.mxu0
  %v195 = vadd.f32 0.0, %v194
  %196 = vmatmul.bf16.gmra.mxu0 %v116
  %v197 = vpop.f32.mrf.mxu0
  %v198 = vadd.f32 0.0, %v197
  %v199 = vpop.f32.mrf.mxu0
  %v200 = vadd.f32 0.0, %v199
  %201 = vmatmul.bf16.gmra.mxu0 %v117
  %v202 = vpop.f32.mrf.mxu0
  %v203 = vadd.f32 0.0, %v202
  %v204 = vpop.f32.mrf.mxu0
  %v205 = vadd.f32 0.0, %v204
  %206 = vmatmul.bf16.gmra.mxu0 %v118
  %v207 = vpop.f32.mrf.mxu0
  %v208 = vadd.f32 0.0, %v207
  %v209 = vpop.f32.mrf.mxu0
  %v210 = vadd.f32 0.0, %v209
  %211 = vmatmul.bf16.gmra.mxu0 %v119
  %v212 = vpop.f32.mrf.mxu0
  %v213 = vadd.f32 0.0, %v212
  %v214 = vpop.f32.mrf.mxu0
  %v215 = vadd.f32 0.0, %v214
  %216 = vmatmul.bf16.gmra.mxu0 %v120
  %v217 = vpop.f32.mrf.mxu0
  %v218 = vadd.f32 0.0, %v217
  %v219 = vpop.f32.mrf.mxu0
  %v220 = vadd.f32 0.0, %v219
  %221 = vmatmul.bf16.gmra.mxu0 %v121
  %v222 = vpop.f32.mrf.mxu0
  %v223 = vadd.f32 0.0, %v222
  %v224 = vpop.f32.mrf.mxu0
  %v225 = vadd.f32 0.0, %v224
  %226 = vdwg.mxu0
  %v227 = vadd.f32 %v34, %v188
  %v228 = vadd.f32 %v35, %v190
  %v229 = vadd.f32 %v36, %v193
  %v230 = vadd.f32 %v37, %v195
  %v231 = vadd.f32 %v38, %v198
  %v232 = vadd.f32 %v39, %v200
  %v233 = vadd.f32 %v40, %v203
  %v234 = vadd.f32 %v41, %v205
  %v235 = vadd.f32 %v42, %v208
  %v236 = vadd.f32 %v43, %v210
  %v237 = vadd.f32 %v44, %v213
  %v238 = vadd.f32 %v45, %v215
  %v239 = vadd.f32 %v46, %v218
  %v240 = vadd.f32 %v47, %v220
  %v241 = vadd.f32 %v48, %v223
  %v242 = vadd.f32 %v49, %v225
  %243 = vst [vmem:[#allocation2] sm:$0xff] %v227
  %244 = vst [vmem:[#allocation2 + $0x8] sm:$0xff] %v228
  %245 = vst [vmem:[#allocation2 + $0x10] sm:$0xff] %v229
  %246 = vst [vmem:[#allocation2 + $0x18] sm:$0xff] %v230
  %247 = vst [vmem:[#allocation2 + $0x20] sm:$0xff] %v231
  %248 = vst [vmem:[#allocation2 + $0x28] sm:$0xff] %v232
  %249 = vst [vmem:[#allocation2 + $0x30] sm:$0xff] %v233
  %250 = vst [vmem:[#allocation2 + $0x38] sm:$0xff] %v234
  %251 = vst [vmem:[#allocation2 + $0x40] sm:$0xff] %v235
  %252 = vst [vmem:[#allocation2 + $0x48] sm:$0xff] %v236
  %253 = vst [vmem:[#allocation2 + $0x50] sm:$0xff] %v237
  %254 = vst [vmem:[#allocation2 + $0x58] sm:$0xff] %v238
  %255 = vst [vmem:[#allocation2 + $0x60] sm:$0xff] %v239
  %256 = vst [vmem:[#allocation2 + $0x68] sm:$0xff] %v240
  %257 = vst [vmem:[#allocation2 + $0x70] sm:$0xff] %v241
  %258 = vst [vmem:[#allocation2 + $0x78] sm:$0xff] %v242
  // Predicated region
  $region18: #{fcn_mt_forward.24} parent=0 // pred_check
    %p259 = pneg %p14
  $region19: #{fcn_mt_forward.24} parent=0 // pred_check_branch
    %261 = sbr.rel (%p259) target = $region21
  $region20: #{fcn_mt_forward.24} parent=0 // pred_region
    %v262 = vld [vmem:[#allocation2] sm:$0xff]
    %v263 = vld [vmem:[#allocation2 + $0x8] sm:$0xff]
    %v264 = vld [vmem:[#allocation2 + $0x10] sm:$0xff]
    %v265 = vld [vmem:[#allocation2 + $0x18] sm:$0xff]
    %v266 = vld [vmem:[#allocation2 + $0x20] sm:$0xff]
    %v267 = vld [vmem:[#allocation2 + $0x28] sm:$0xff]
    %v268 = vld [vmem:[#allocation2 + $0x30] sm:$0xff]
    %v269 = vld [vmem:[#allocation2 + $0x38] sm:$0xff]
    %v270 = vld [vmem:[#allocation2 + $0x40] sm:$0xff]
    %v271 = vld [vmem:[#allocation2 + $0x48] sm:$0xff]
    %v272 = vld [vmem:[#allocation2 + $0x50] sm:$0xff]
    %v273 = vld [vmem:[#allocation2 + $0x58] sm:$0xff]
    %v274 = vld [vmem:[#allocation2 + $0x60] sm:$0xff]
    %v275 = vld [vmem:[#allocation2 + $0x68] sm:$0xff]
    %v276 = vld [vmem:[#allocation2 + $0x70] sm:$0xff]
    %v277 = vld [vmem:[#allocation2 + $0x78] sm:$0xff]
    %v278 = vld [vmem:[%s2] sm:$0x1]
    %v280 = vperm.slane %v278, 0
    %v282 = vadd.f32 %v262, %v280
    %v283 = vadd.f32 %v263, %v280
    %v284 = vadd.f32 %v264, %v280
    %v285 = vadd.f32 %v265, %v280
    %v286 = vadd.f32 %v266, %v280
    %v287 = vadd.f32 %v267, %v280
    %v288 = vadd.f32 %v268, %v280
    %v289 = vadd.f32 %v269, %v280
    %v290 = vadd.f32 %v270, %v280
    %v291 = vadd.f32 %v271, %v280
    %v292 = vadd.f32 %v272, %v280
    %v293 = vadd.f32 %v273, %v280
    %v294 = vadd.f32 %v274, %v280
    %v295 = vadd.f32 %v275, %v280
    %v296 = vadd.f32 %v276, %v280
    %v297 = vadd.f32 %v277, %v280
    %v298 = vmax.f32 %v282, 0.0
    %v299 = vmax.f32 %v283, 0.0
    %v300 = vmax.f32 %v284, 0.0
    %v301 = vmax.f32 %v285, 0.0
    %v302 = vmax.f32 %v286, 0.0
    %v303 = vmax.f32 %v287, 0.0
    %v304 = vmax.f32 %v288, 0.0
    %v305 = vmax.f32 %v289, 0.0
    %v306 = vmax.f32 %v290, 0.0
    %v307 = vmax.f32 %v291, 0.0
    %v308 = vmax.f32 %v292, 0.0
    %v309 = vmax.f32 %v293, 0.0
    %v310 = vmax.f32 %v294, 0.0
    %v311 = vmax.f32 %v295, 0.0
    %v312 = vmax.f32 %v296, 0.0
    %v313 = vmax.f32 %v297, 0.0
    %314 = vst [vmem:[%s3] sm:$0xff] %v298
    %315 = vst [vmem:[%s3 + $0x8] sm:$0xff] %v299
    %316 = vst [vmem:[%s3 + $0x10] sm:$0xff] %v300
    %317 = vst [vmem:[%s3 + $0x18] sm:$0xff] %v301
    %318 = vst [vmem:[%s3 + $0x20] sm:$0xff] %v302
    %319 = vst [vmem:[%s3 + $0x28] sm:$0xff] %v303
    %320 = vst [vmem:[%s3 + $0x30] sm:$0xff] %v304
    %321 = vst [vmem:[%s3 + $0x38] sm:$0xff] %v305
    %322 = vst [vmem:[%s3 + $0x40] sm:$0xff] %v306
    %323 = vst [vmem:[%s3 + $0x48] sm:$0xff] %v307
    %324 = vst [vmem:[%s3 + $0x50] sm:$0xff] %v308
    %325 = vst [vmem:[%s3 + $0x58] sm:$0xff] %v309
    %326 = vst [vmem:[%s3 + $0x60] sm:$0xff] %v310
    %327 = vst [vmem:[%s3 + $0x68] sm:$0xff] %v311
    %328 = vst [vmem:[%s3 + $0x70] sm:$0xff] %v312
    %329 = vst [vmem:[%s3 + $0x78] sm:$0xff] %v313
  $region21: #{fcn_mt_forward.24} parent=0 // pred_fallthru
    _
  // Predicated region
  $region22: #{fcn_mt_forward.24} parent=0 // pred_check
    _
  $region23: #{fcn_mt_forward.24} parent=0 // pred_check_branch
    %331 = sbr.rel (0) target = $region25
  $region24: #{fcn_mt_forward.24} parent=0 // pred_region
    _
  $region25: #{fcn_mt_forward.24} parent=0 // pred_fallthru
    _
  // Predicated region
  $region26: #{fcn_mt_forward.24} parent=0 // pred_check
    _
  $region27: #{fcn_mt_forward.24} parent=0 // pred_check_branch
    %333 = sbr.rel (0) target = $region29
  $region28: #{fcn_mt_forward.24} parent=0 // pred_region
    _
  $region29: #{fcn_mt_forward.24} parent=0 // pred_fallthru
    _

// kernel: fcn_mt_forward.25
$region0: #{fcn_mt_forward.25}
  #allocation0 [shape = 'u32[]', space=smem, size = 0x4, offset = 0x4, fixed_abs, tag = 'smem constant byte address 0x4 - core index']
  #allocation1 [shape = 'u32[72,128]{1,0:T(1,128)}', space=vmem, size = 0x9000, scoped, tag = 'internal scratch']
  #allocation2 [shape = 'f32[512,128]{1,0:T(8,128)}', space=vmem, size = 0x40000, scoped, tag = 'scratch operand']
  %s0 = inlined_call_operand.vmem [shape: bf16[512,128], index: 0, kind: input, shape index: {}]
  %s1 = inlined_call_operand.vmem [shape: bf16[128,128], index: 1, kind: input, shape index: {}]
  %s2 = inlined_call_operand.vmem [shape: f32[1,128], index: 2, kind: input, shape index: {}]
  %s3 = inlined_call_operand.vmem [shape: f32[512,128], index: 3, kind: output, shape index: {}]
  %s4 = sld [smem:[#allocation0]]
  $region30: #{fcn_mt_forward.25} parent=0
    _
  %s6 = ssub.s32 1, %s4
  %s7 = scalar_select 0, %s6, %s4
  // Predicated region
  $region2: #{fcn_mt_forward.25} parent=0 // pred_check
    _
  $region3: #{fcn_mt_forward.25} parent=0 // pred_check_branch
    %9 = sbr.rel (0) target = $region5
  $region4: #{fcn_mt_forward.25} parent=0 // pred_region
    _
  $region5: #{fcn_mt_forward.25} parent=0 // pred_fallthru
    _
  // Predicated region
  $region6: #{fcn_mt_forward.25} parent=0 // pred_check
    _
  $region7: #{fcn_mt_forward.25} parent=0 // pred_check_branch
    %11 = sbr.rel (0) target = $region9
  $region8: #{fcn_mt_forward.25} parent=0 // pred_region
    _
  $region9: #{fcn_mt_forward.25} parent=0 // pred_fallthru
    _
  // Predicated region
  $region10: #{fcn_mt_forward.25} parent=0 // pred_check
    _
  $region11: #{fcn_mt_forward.25} parent=0 // pred_check_branch
    %13 = sbr.rel (0) target = $region13
  $region12: #{fcn_mt_forward.25} parent=0 // pred_region
    _
  $region13: #{fcn_mt_forward.25} parent=0 // pred_fallthru
    _
  %p14 = scmp.eq.s32.totalorder 0, 0
  // Predicated region
  $region14: #{fcn_mt_forward.25} parent=0 // pred_check
    %p15 = pneg %p14
  $region15: #{fcn_mt_forward.25} parent=0 // pred_check_branch
    %17 = sbr.rel (%p15) target = $region17
  $region16: #{fcn_mt_forward.25} parent=0 // pred_region
    %18 = vst [vmem:[#allocation2] sm:$0xff] 0.0
    %19 = vst [vmem:[#allocation2 + $0x8] sm:$0xff] 0.0
    %20 = vst [vmem:[#allocation2 + $0x10] sm:$0xff] 0.0
    %21 = vst [vmem:[#allocation2 + $0x18] sm:$0xff] 0.0
    %22 = vst [vmem:[#allocation2 + $0x20] sm:$0xff] 0.0
    %23 = vst [vmem:[#allocation2 + $0x28] sm:$0xff] 0.0
    %24 = vst [vmem:[#allocation2 + $0x30] sm:$0xff] 0.0
    %25 = vst [vmem:[#allocation2 + $0x38] sm:$0xff] 0.0
    %26 = vst [vmem:[#allocation2 + $0x40] sm:$0xff] 0.0
    %27 = vst [vmem:[#allocation2 + $0x48] sm:$0xff] 0.0
    %28 = vst [vmem:[#allocation2 + $0x50] sm:$0xff] 0.0
    %29 = vst [vmem:[#allocation2 + $0x58] sm:$0xff] 0.0
    %30 = vst [vmem:[#allocation2 + $0x60] sm:$0xff] 0.0
    %31 = vst [vmem:[#allocation2 + $0x68] sm:$0xff] 0.0
    %32 = vst [vmem:[#allocation2 + $0x70] sm:$0xff] 0.0
    %33 = vst [vmem:[#allocation2 + $0x78] sm:$0xff] 0.0
    %34 = vst [vmem:[#allocation2 + $0x80] sm:$0xff] 0.0
    %35 = vst [vmem:[#allocation2 + $0x88] sm:$0xff] 0.0
    %36 = vst [vmem:[#allocation2 + $0x90] sm:$0xff] 0.0
    %37 = vst [vmem:[#allocation2 + $0x98] sm:$0xff] 0.0
    %38 = vst [vmem:[#allocation2 + $0xa0] sm:$0xff] 0.0
    %39 = vst [vmem:[#allocation2 + $0xa8] sm:$0xff] 0.0
    %40 = vst [vmem:[#allocation2 + $0xb0] sm:$0xff] 0.0
    %41 = vst [vmem:[#allocation2 + $0xb8] sm:$0xff] 0.0
    %42 = vst [vmem:[#allocation2 + $0xc0] sm:$0xff] 0.0
    %43 = vst [vmem:[#allocation2 + $0xc8] sm:$0xff] 0.0
    %44 = vst [vmem:[#allocation2 + $0xd0] sm:$0xff] 0.0
    %45 = vst [vmem:[#allocation2 + $0xd8] sm:$0xff] 0.0
    %46 = vst [vmem:[#allocation2 + $0xe0] sm:$0xff] 0.0
    %47 = vst [vmem:[#allocation2 + $0xe8] sm:$0xff] 0.0
    %48 = vst [vmem:[#allocation2 + $0xf0] sm:$0xff] 0.0
    %49 = vst [vmem:[#allocation2 + $0xf8] sm:$0xff] 0.0
    %50 = vst [vmem:[#allocation2 + $0x100] sm:$0xff] 0.0
    %51 = vst [vmem:[#allocation2 + $0x108] sm:$0xff] 0.0
    %52 = vst [vmem:[#allocation2 + $0x110] sm:$0xff] 0.0
    %53 = vst [vmem:[#allocation2 + $0x118] sm:$0xff] 0.0
    %54 = vst [vmem:[#allocation2 + $0x120] sm:$0xff] 0.0
    %55 = vst [vmem:[#allocation2 + $0x128] sm:$0xff] 0.0
    %56 = vst [vmem:[#allocation2 + $0x130] sm:$0xff] 0.0
    %57 = vst [vmem:[#allocation2 + $0x138] sm:$0xff] 0.0
    %58 = vst [vmem:[#allocation2 + $0x140] sm:$0xff] 0.0
    %59 = vst [vmem:[#allocation2 + $0x148] sm:$0xff] 0.0
    %60 = vst [vmem:[#allocation2 + $0x150] sm:$0xff] 0.0
    %61 = vst [vmem:[#allocation2 + $0x158] sm:$0xff] 0.0
    %62 = vst [vmem:[#allocation2 + $0x160] sm:$0xff] 0.0
    %63 = vst [vmem:[#allocation2 + $0x168] sm:$0xff] 0.0
    %64 = vst [vmem:[#allocation2 + $0x170] sm:$0xff] 0.0
    %65 = vst [vmem:[#allocation2 + $0x178] sm:$0xff] 0.0
    %66 = vst [vmem:[#allocation2 + $0x180] sm:$0xff] 0.0
    %67 = vst [vmem:[#allocation2 + $0x188] sm:$0xff] 0.0
    %68 = vst [vmem:[#allocation2 + $0x190] sm:$0xff] 0.0
    %69 = vst [vmem:[#allocation2 + $0x198] sm:$0xff] 0.0
    %70 = vst [vmem:[#allocation2 + $0x1a0] sm:$0xff] 0.0
    %71 = vst [vmem:[#allocation2 + $0x1a8] sm:$0xff] 0.0
    %72 = vst [vmem:[#allocation2 + $0x1b0] sm:$0xff] 0.0
    %73 = vst [vmem:[#allocation2 + $0x1b8] sm:$0xff] 0.0
    %74 = vst [vmem:[#allocation2 + $0x1c0] sm:$0xff] 0.0
    %75 = vst [vmem:[#allocation2 + $0x1c8] sm:$0xff] 0.0
    %76 = vst [vmem:[#allocation2 + $0x1d0] sm:$0xff] 0.0
    %77 = vst [vmem:[#allocation2 + $0x1d8] sm:$0xff] 0.0
    %78 = vst [vmem:[#allocation2 + $0x1e0] sm:$0xff] 0.0
    %79 = vst [vmem:[#allocation2 + $0x1e8] sm:$0xff] 0.0
    %80 = vst [vmem:[#allocation2 + $0x1f0] sm:$0xff] 0.0
    %81 = vst [vmem:[#allocation2 + $0x1f8] sm:$0xff] 0.0
  $region17: #{fcn_mt_forward.25} parent=0 // pred_fallthru
    _
  %v82 = vld [vmem:[#allocation2] sm:$0xff]
  %v83 = vld [vmem:[#allocation2 + $0x8] sm:$0xff]
  %v84 = vld [vmem:[#allocation2 + $0x10] sm:$0xff]
  %v85 = vld [vmem:[#allocation2 + $0x18] sm:$0xff]
  %v86 = vld [vmem:[#allocation2 + $0x20] sm:$0xff]
  %v87 = vld [vmem:[#allocation2 + $0x28] sm:$0xff]
  %v88 = vld [vmem:[#allocation2 + $0x30] sm:$0xff]
  %v89 = vld [vmem:[#allocation2 + $0x38] sm:$0xff]
  %v90 = vld [vmem:[#allocation2 + $0x40] sm:$0xff]
  %v91 = vld [vmem:[#allocation2 + $0x48] sm:$0xff]
  %v92 = vld [vmem:[#allocation2 + $0x50] sm:$0xff]
  %v93 = vld [vmem:[#allocation2 + $0x58] sm:$0xff]
  %v94 = vld [vmem:[#allocation2 + $0x60] sm:$0xff]
  %v95 = vld [vmem:[#allocation2 + $0x68] sm:$0xff]
  %v96 = vld [vmem:[#allocation2 + $0x70] sm:$0xff]
  %v97 = vld [vmem:[#allocation2 + $0x78] sm:$0xff]
  %v98 = vld [vmem:[#allocation2 + $0x80] sm:$0xff]
  %v99 = vld [vmem:[#allocation2 + $0x88] sm:$0xff]
  %v100 = vld [vmem:[#allocation2 + $0x90] sm:$0xff]
  %v101 = vld [vmem:[#allocation2 + $0x98] sm:$0xff]
  %v102 = vld [vmem:[#allocation2 + $0xa0] sm:$0xff]
  %v103 = vld [vmem:[#allocation2 + $0xa8] sm:$0xff]
  %v104 = vld [vmem:[#allocation2 + $0xb0] sm:$0xff]
  %v105 = vld [vmem:[#allocation2 + $0xb8] sm:$0xff]
  %v106 = vld [vmem:[#allocation2 + $0xc0] sm:$0xff]
  %v107 = vld [vmem:[#allocation2 + $0xc8] sm:$0xff]
  %v108 = vld [vmem:[#allocation2 + $0xd0] sm:$0xff]
  %v109 = vld [vmem:[#allocation2 + $0xd8] sm:$0xff]
  %v110 = vld [vmem:[#allocation2 + $0xe0] sm:$0xff]
  %v111 = vld [vmem:[#allocation2 + $0xe8] sm:$0xff]
  %v112 = vld [vmem:[#allocation2 + $0xf0] sm:$0xff]
  %v113 = vld [vmem:[#allocation2 + $0xf8] sm:$0xff]
  %v114 = vld [vmem:[#allocation2 + $0x100] sm:$0xff]
  %v115 = vld [vmem:[#allocation2 + $0x108] sm:$0xff]
  %v116 = vld [vmem:[#allocation2 + $0x110] sm:$0xff]
  %v117 = vld [vmem:[#allocation2 + $0x118] sm:$0xff]
  %v118 = vld [vmem:[#allocation2 + $0x120] sm:$0xff]
  %v119 = vld [vmem:[#allocation2 + $0x128] sm:$0xff]
  %v120 = vld [vmem:[#allocation2 + $0x130] sm:$0xff]
  %v121 = vld [vmem:[#allocation2 + $0x138] sm:$0xff]
  %v122 = vld [vmem:[#allocation2 + $0x140] sm:$0xff]
  %v123 = vld [vmem:[#allocation2 + $0x148] sm:$0xff]
  %v124 = vld [vmem:[#allocation2 + $0x150] sm:$0xff]
  %v125 = vld [vmem:[#allocation2 + $0x158] sm:$0xff]
  %v126 = vld [vmem:[#allocation2 + $0x160] sm:$0xff]
  %v127 = vld [vmem:[#allocation2 + $0x168] sm:$0xff]
  %v128 = vld [vmem:[#allocation2 + $0x170] sm:$0xff]
  %v129 = vld [vmem:[#allocation2 + $0x178] sm:$0xff]
  %v130 = vld [vmem:[#allocation2 + $0x180] sm:$0xff]
  %v131 = vld [vmem:[#allocation2 + $0x188] sm:$0xff]
  %v132 = vld [vmem:[#allocation2 + $0x190] sm:$0xff]
  %v133 = vld [vmem:[#allocation2 + $0x198] sm:$0xff]
  %v134 = vld [vmem:[#allocation2 + $0x1a0] sm:$0xff]
  %v135 = vld [vmem:[#allocation2 + $0x1a8] sm:$0xff]
  %v136 = vld [vmem:[#allocation2 + $0x1b0] sm:$0xff]
  %v137 = vld [vmem:[#allocation2 + $0x1b8] sm:$0xff]
  %v138 = vld [vmem:[#allocation2 + $0x1c0] sm:$0xff]
  %v139 = vld [vmem:[#allocation2 + $0x1c8] sm:$0xff]
  %v140 = vld [vmem:[#allocation2 + $0x1d0] sm:$0xff]
  %v141 = vld [vmem:[#allocation2 + $0x1d8] sm:$0xff]
  %v142 = vld [vmem:[#allocation2 + $0x1e0] sm:$0xff]
  %v143 = vld [vmem:[#allocation2 + $0x1e8] sm:$0xff]
  %v144 = vld [vmem:[#allocation2 + $0x1f0] sm:$0xff]
  %v145 = vld [vmem:[#allocation2 + $0x1f8] sm:$0xff]
  %v146 = vld [vmem:[%s0] sm:$0xf]
  %v147 = vld [vmem:[%s0 + $0x4] sm:$0xf]
  %v148 = vld [vmem:[%s0 + $0x8] sm:$0xf]
  %v149 = vld [vmem:[%s0 + $0xc] sm:$0xf]
  %v150 = vld [vmem:[%s0 + $0x10] sm:$0xf]
  %v151 = vld [vmem:[%s0 + $0x14] sm:$0xf]
  %v152 = vld [vmem:[%s0 + $0x18] sm:$0xf]
  %v153 = vld [vmem:[%s0 + $0x1c] sm:$0xf]
  %v154 = vld [vmem:[%s0 + $0x20] sm:$0xf]
  %v155 = vld [vmem:[%s0 + $0x24] sm:$0xf]
  %v156 = vld [vmem:[%s0 + $0x28] sm:$0xf]
  %v157 = vld [vmem:[%s0 + $0x2c] sm:$0xf]
  %v158 = vld [vmem:[%s0 + $0x30] sm:$0xf]
  %v159 = vld [vmem:[%s0 + $0x34] sm:$0xf]
  %v160 = vld [vmem:[%s0 + $0x38] sm:$0xf]
  %v161 = vld [vmem:[%s0 + $0x3c] sm:$0xf]
  %v162 = vld [vmem:[%s0 + $0x40] sm:$0xf]
  %v163 = vld [vmem:[%s0 + $0x44] sm:$0xf]
  %v164 = vld [vmem:[%s0 + $0x48] sm:$0xf]
  %v165 = vld [vmem:[%s0 + $0x4c] sm:$0xf]
  %v166 = vld [vmem:[%s0 + $0x50] sm:$0xf]
  %v167 = vld [vmem:[%s0 + $0x54] sm:$0xf]
  %v168 = vld [vmem:[%s0 + $0x58] sm:$0xf]
  %v169 = vld [vmem:[%s0 + $0x5c] sm:$0xf]
  %v170 = vld [vmem:[%s0 + $0x60] sm:$0xf]
  %v171 = vld [vmem:[%s0 + $0x64] sm:$0xf]
  %v172 = vld [vmem:[%s0 + $0x68] sm:$0xf]
  %v173 = vld [vmem:[%s0 + $0x6c] sm:$0xf]
  %v174 = vld [vmem:[%s0 + $0x70] sm:$0xf]
  %v175 = vld [vmem:[%s0 + $0x74] sm:$0xf]
  %v176 = vld [vmem:[%s0 + $0x78] sm:$0xf]
  %v177 = vld [vmem:[%s0 + $0x7c] sm:$0xf]
  %v178 = vld [vmem:[%s0 + $0x80] sm:$0xf]
  %v179 = vld [vmem:[%s0 + $0x84] sm:$0xf]
  %v180 = vld [vmem:[%s0 + $0x88] sm:$0xf]
  %v181 = vld [vmem:[%s0 + $0x8c] sm:$0xf]
  %v182 = vld [vmem:[%s0 + $0x90] sm:$0xf]
  %v183 = vld [vmem:[%s0 + $0x94] sm:$0xf]
  %v184 = vld [vmem:[%s0 + $0x98] sm:$0xf]
  %v185 = vld [vmem:[%s0 + $0x9c] sm:$0xf]
  %v186 = vld [vmem:[%s0 + $0xa0] sm:$0xf]
  %v187 = vld [vmem:[%s0 + $0xa4] sm:$0xf]
  %v188 = vld [vmem:[%s0 + $0xa8] sm:$0xf]
  %v189 = vld [vmem:[%s0 + $0xac] sm:$0xf]
  %v190 = vld [vmem:[%s0 + $0xb0] sm:$0xf]
  %v191 = vld [vmem:[%s0 + $0xb4] sm:$0xf]
  %v192 = vld [vmem:[%s0 + $0xb8] sm:$0xf]
  %v193 = vld [vmem:[%s0 + $0xbc] sm:$0xf]
  %v194 = vld [vmem:[%s0 + $0xc0] sm:$0xf]
  %v195 = vld [vmem:[%s0 + $0xc4] sm:$0xf]
  %v196 = vld [vmem:[%s0 + $0xc8] sm:$0xf]
  %v197 = vld [vmem:[%s0 + $0xcc] sm:$0xf]
  %v198 = vld [vmem:[%s0 + $0xd0] sm:$0xf]
  %v199 = vld [vmem:[%s0 + $0xd4] sm:$0xf]
  %v200 = vld [vmem:[%s0 + $0xd8] sm:$0xf]
  %v201 = vld [vmem:[%s0 + $0xdc] sm:$0xf]
  %v202 = vld [vmem:[%s0 + $0xe0] sm:$0xf]
  %v203 = vld [vmem:[%s0 + $0xe4] sm:$0xf]
  %v204 = vld [vmem:[%s0 + $0xe8] sm:$0xf]
  %v205 = vld [vmem:[%s0 + $0xec] sm:$0xf]
  %v206 = vld [vmem:[%s0 + $0xf0] sm:$0xf]
  %v207 = vld [vmem:[%s0 + $0xf4] sm:$0xf]
  %v208 = vld [vmem:[%s0 + $0xf8] sm:$0xf]
  %v209 = vld [vmem:[%s0 + $0xfc] sm:$0xf]
  %v210 = vld [vmem:[%s1] sm:$0xf]
  %v211 = vld [vmem:[%s1 + $0x4] sm:$0xf]
  %v212 = vld [vmem:[%s1 + $0x8] sm:$0xf]
  %v213 = vld [vmem:[%s1 + $0xc] sm:$0xf]
  %v214 = vld [vmem:[%s1 + $0x10] sm:$0xf]
  %v215 = vld [vmem:[%s1 + $0x14] sm:$0xf]
  %v216 = vld [vmem:[%s1 + $0x18] sm:$0xf]
  %v217 = vld [vmem:[%s1 + $0x1c] sm:$0xf]
  %v218 = vld [vmem:[%s1 + $0x20] sm:$0xf]
  %v219 = vld [vmem:[%s1 + $0x24] sm:$0xf]
  %v220 = vld [vmem:[%s1 + $0x28] sm:$0xf]
  %v221 = vld [vmem:[%s1 + $0x2c] sm:$0xf]
  %v222 = vld [vmem:[%s1 + $0x30] sm:$0xf]
  %v223 = vld [vmem:[%s1 + $0x34] sm:$0xf]
  %v224 = vld [vmem:[%s1 + $0x38] sm:$0xf]
  %v225 = vld [vmem:[%s1 + $0x3c] sm:$0xf]
  %v290 = vunpack.c.l.b16 %v146
  %v291 = vunpack.c.l.b16 %v147
  %v292 = vunpack.c.l.b16 %v148
  %v293 = vunpack.c.l.b16 %v149
  %v294 = vunpack.c.l.b16 %v150
  %v295 = vunpack.c.l.b16 %v151
  %v296 = vunpack.c.l.b16 %v152
  %v297 = vunpack.c.l.b16 %v153
  %v298 = vunpack.c.l.b16 %v154
  %v299 = vunpack.c.l.b16 %v155
  %v300 = vunpack.c.l.b16 %v156
  %v301 = vunpack.c.l.b16 %v157
  %v302 = vunpack.c.l.b16 %v158
  %v303 = vunpack.c.l.b16 %v159
  %v304 = vunpack.c.l.b16 %v160
  %v305 = vunpack.c.l.b16 %v161
  %v306 = vunpack.c.l.b16 %v162
  %v307 = vunpack.c.l.b16 %v163
  %v308 = vunpack.c.l.b16 %v164
  %v309 = vunpack.c.l.b16 %v165
  %v310 = vunpack.c.l.b16 %v166
  %v311 = vunpack.c.l.b16 %v167
  %v312 = vunpack.c.l.b16 %v168
  %v313 = vunpack.c.l.b16 %v169
  %v314 = vunpack.c.l.b16 %v170
  %v315 = vunpack.c.l.b16 %v171
  %v316 = vunpack.c.l.b16 %v172
  %v317 = vunpack.c.l.b16 %v173
  %v318 = vunpack.c.l.b16 %v174
  %v319 = vunpack.c.l.b16 %v175
  %v320 = vunpack.c.l.b16 %v176
  %v321 = vunpack.c.l.b16 %v177
  %v322 = vunpack.c.l.b16 %v178
  %v323 = vunpack.c.l.b16 %v179
  %v324 = vunpack.c.l.b16 %v180
  %v325 = vunpack.c.l.b16 %v181
  %v326 = vunpack.c.l.b16 %v182
  %v327 = vunpack.c.l.b16 %v183
  %v328 = vunpack.c.l.b16 %v184
  %v329 = vunpack.c.l.b16 %v185
  %v330 = vunpack.c.l.b16 %v186
  %v331 = vunpack.c.l.b16 %v187
  %v332 = vunpack.c.l.b16 %v188
  %v333 = vunpack.c.l.b16 %v189
  %v334 = vunpack.c.l.b16 %v190
  %v335 = vunpack.c.l.b16 %v191
  %v336 = vunpack.c.l.b16 %v192
  %v337 = vunpack.c.l.b16 %v193
  %v338 = vunpack.c.l.b16 %v194
  %v339 = vunpack.c.l.b16 %v195
  %v340 = vunpack.c.l.b16 %v196
  %v341 = vunpack.c.l.b16 %v197
  %v342 = vunpack.c.l.b16 %v198
  %v343 = vunpack.c.l.b16 %v199
  %v344 = vunpack.c.l.b16 %v200
  %v345 = vunpack.c.l.b16 %v201
  %v346 = vunpack.c.l.b16 %v202
  %v347 = vunpack.c.l.b16 %v203
  %v348 = vunpack.c.l.b16 %v204
  %v349 = vunpack.c.l.b16 %v205
  %v350 = vunpack.c.l.b16 %v206
  %v351 = vunpack.c.l.b16 %v207
  %v352 = vunpack.c.l.b16 %v208
  %v353 = vunpack.c.l.b16 %v209
  %v354 = vpack.c.b16 %v291, %v290
  %v355 = vpack.c.b16 %v293, %v292
  %v356 = vpack.c.b16 %v295, %v294
  %v357 = vpack.c.b16 %v297, %v296
  %v358 = vpack.c.b16 %v299, %v298
  %v359 = vpack.c.b16 %v301, %v300
  %v360 = vpack.c.b16 %v303, %v302
  %v361 = vpack.c.b16 %v305, %v304
  %v362 = vpack.c.b16 %v307, %v306
  %v363 = vpack.c.b16 %v309, %v308
  %v364 = vpack.c.b16 %v311, %v310
  %v365 = vpack.c.b16 %v313, %v312
  %v366 = vpack.c.b16 %v315, %v314
  %v367 = vpack.c.b16 %v317, %v316
  %v368 = vpack.c.b16 %v319, %v318
  %v369 = vpack.c.b16 %v321, %v320
  %v370 = vpack.c.b16 %v323, %v322
  %v371 = vpack.c.b16 %v325, %v324
  %v372 = vpack.c.b16 %v327, %v326
  %v373 = vpack.c.b16 %v329, %v328
  %v374 = vpack.c.b16 %v331, %v330
  %v375 = vpack.c.b16 %v333, %v332
  %v376 = vpack.c.b16 %v335, %v334
  %v377 = vpack.c.b16 %v337, %v336
  %v378 = vpack.c.b16 %v339, %v338
  %v379 = vpack.c.b16 %v341, %v340
  %v380 = vpack.c.b16 %v343, %v342
  %v381 = vpack.c.b16 %v345, %v344
  %v382 = vpack.c.b16 %v347, %v346
  %v383 = vpack.c.b16 %v349, %v348
  %v384 = vpack.c.b16 %v351, %v350
  %v385 = vpack.c.b16 %v353, %v352
  %v434 = vunpack.c.l.b16 %v210
  %v435 = vunpack.c.l.b16 %v211
  %v436 = vunpack.c.l.b16 %v212
  %v437 = vunpack.c.l.b16 %v213
  %v438 = vunpack.c.l.b16 %v214
  %v439 = vunpack.c.l.b16 %v215
  %v440 = vunpack.c.l.b16 %v216
  %v441 = vunpack.c.l.b16 %v217
  %v442 = vunpack.c.l.b16 %v218
  %v443 = vunpack.c.l.b16 %v219
  %v444 = vunpack.c.l.b16 %v220
  %v445 = vunpack.c.l.b16 %v221
  %v446 = vunpack.c.l.b16 %v222
  %v447 = vunpack.c.l.b16 %v223
  %v448 = vunpack.c.l.b16 %v224
  %v449 = vunpack.c.l.b16 %v225
  %v450 = vpack.c.b16 %v435, %v434
  %v451 = vpack.c.b16 %v437, %v436
  %v452 = vpack.c.b16 %v439, %v438
  %v453 = vpack.c.b16 %v441, %v440
  %v454 = vpack.c.b16 %v443, %v442
  %v455 = vpack.c.b16 %v445, %v444
  %v456 = vpack.c.b16 %v447, %v446
  %v457 = vpack.c.b16 %v449, %v448
  %466 = vmatpush.bf16.msra.mxu0 %v457
  %467 = vmatpush.bf16.msra.mxu0 %v456
  %468 = vmatpush.bf16.msra.mxu0 %v455
  %469 = vmatpush.bf16.msra.mxu0 %v454
  %470 = vmatpush.bf16.msra.mxu0 %v453
  %471 = vmatpush.bf16.msra.mxu0 %v452
  %472 = vmatpush.bf16.msra.mxu0 %v451
  %473 = vmatpush.bf16.msra.mxu0 %v450
  %474 = vmatmul.bf16.gmra.mxu0 %v354
  %v475 = vpop.f32.mrf.mxu0
  %v476 = vadd.f32 0.0, %v475
  %v477 = vpop.f32.mrf.mxu0
  %v478 = vadd.f32 0.0, %v477
  %479 = vmatmul.bf16.gmra.mxu0 %v355
  %v480 = vpop.f32.mrf.mxu0
  %v481 = vadd.f32 0.0, %v480
  %v482 = vpop.f32.mrf.mxu0
  %v483 = vadd.f32 0.0, %v482
  %484 = vmatmul.bf16.gmra.mxu0 %v356
  %v485 = vpop.f32.mrf.mxu0
  %v486 = vadd.f32 0.0, %v485
  %v487 = vpop.f32.mrf.mxu0
  %v488 = vadd.f32 0.0, %v487
  %489 = vmatmul.bf16.gmra.mxu0 %v357
  %v490 = vpop.f32.mrf.mxu0
  %v491 = vadd.f32 0.0, %v490
  %v492 = vpop.f32.mrf.mxu0
  %v493 = vadd.f32 0.0, %v492
  %494 = vmatmul.bf16.gmra.mxu0 %v358
  %v495 = vpop.f32.mrf.mxu0
  %v496 = vadd.f32 0.0, %v495
  %v497 = vpop.f32.mrf.mxu0
  %v498 = vadd.f32 0.0, %v497
  %499 = vmatmul.bf16.gmra.mxu0 %v359
  %v500 = vpop.f32.mrf.mxu0
  %v501 = vadd.f32 0.0, %v500
  %v502 = vpop.f32.mrf.mxu0
  %v503 = vadd.f32 0.0, %v502
  %504 = vmatmul.bf16.gmra.mxu0 %v360
  %v505 = vpop.f32.mrf.mxu0
  %v506 = vadd.f32 0.0, %v505
  %v507 = vpop.f32.mrf.mxu0
  %v508 = vadd.f32 0.0, %v507
  %509 = vmatmul.bf16.gmra.mxu0 %v361
  %v510 = vpop.f32.mrf.mxu0
  %v511 = vadd.f32 0.0, %v510
  %v512 = vpop.f32.mrf.mxu0
  %v513 = vadd.f32 0.0, %v512
  %514 = vmatmul.bf16.gmra.mxu0 %v362
  %v515 = vpop.f32.mrf.mxu0
  %v516 = vadd.f32 0.0, %v515
  %v517 = vpop.f32.mrf.mxu0
  %v518 = vadd.f32 0.0, %v517
  %519 = vmatmul.bf16.gmra.mxu0 %v363
  %v520 = vpop.f32.mrf.mxu0
  %v521 = vadd.f32 0.0, %v520
  %v522 = vpop.f32.mrf.mxu0
  %v523 = vadd.f32 0.0, %v522
  %524 = vmatmul.bf16.gmra.mxu0 %v364
  %v525 = vpop.f32.mrf.mxu0
  %v526 = vadd.f32 0.0, %v525
  %v527 = vpop.f32.mrf.mxu0
  %v528 = vadd.f32 0.0, %v527
  %529 = vmatmul.bf16.gmra.mxu0 %v365
  %v530 = vpop.f32.mrf.mxu0
  %v531 = vadd.f32 0.0, %v530
  %v532 = vpop.f32.mrf.mxu0
  %v533 = vadd.f32 0.0, %v532
  %534 = vmatmul.bf16.gmra.mxu0 %v366
  %v535 = vpop.f32.mrf.mxu0
  %v536 = vadd.f32 0.0, %v535
  %v537 = vpop.f32.mrf.mxu0
  %v538 = vadd.f32 0.0, %v537
  %539 = vmatmul.bf16.gmra.mxu0 %v367
  %v540 = vpop.f32.mrf.mxu0
  %v541 = vadd.f32 0.0, %v540
  %v542 = vpop.f32.mrf.mxu0
  %v543 = vadd.f32 0.0, %v542
  %544 = vmatmul.bf16.gmra.mxu0 %v368
  %v545 = vpop.f32.mrf.mxu0
  %v546 = vadd.f32 0.0, %v545
  %v547 = vpop.f32.mrf.mxu0
  %v548 = vadd.f32 0.0, %v547
  %549 = vmatmul.bf16.gmra.mxu0 %v369
  %v550 = vpop.f32.mrf.mxu0
  %v551 = vadd.f32 0.0, %v550
  %v552 = vpop.f32.mrf.mxu0
  %v553 = vadd.f32 0.0, %v552
  %554 = vmatmul.bf16.gmra.mxu0 %v370
  %v555 = vpop.f32.mrf.mxu0
  %v556 = vadd.f32 0.0, %v555
  %v557 = vpop.f32.mrf.mxu0
  %v558 = vadd.f32 0.0, %v557
  %559 = vmatmul.bf16.gmra.mxu0 %v371
  %v560 = vpop.f32.mrf.mxu0
  %v561 = vadd.f32 0.0, %v560
  %v562 = vpop.f32.mrf.mxu0
  %v563 = vadd.f32 0.0, %v562
  %564 = vmatmul.bf16.gmra.mxu0 %v372
  %v565 = vpop.f32.mrf.mxu0
  %v566 = vadd.f32 0.0, %v565
  %v567 = vpop.f32.mrf.mxu0
  %v568 = vadd.f32 0.0, %v567
  %569 = vmatmul.bf16.gmra.mxu0 %v373
  %v570 = vpop.f32.mrf.mxu0
  %v571 = vadd.f32 0.0, %v570
  %v572 = vpop.f32.mrf.mxu0
  %v573 = vadd.f32 0.0, %v572
  %574 = vmatmul.bf16.gmra.mxu0 %v374
  %v575 = vpop.f32.mrf.mxu0
  %v576 = vadd.f32 0.0, %v575
  %v577 = vpop.f32.mrf.mxu0
  %v578 = vadd.f32 0.0, %v577
  %579 = vmatmul.bf16.gmra.mxu0 %v375
  %v580 = vpop.f32.mrf.mxu0
  %v581 = vadd.f32 0.0, %v580
  %v582 = vpop.f32.mrf.mxu0
  %v583 = vadd.f32 0.0, %v582
  %584 = vmatmul.bf16.gmra.mxu0 %v376
  %v585 = vpop.f32.mrf.mxu0
  %v586 = vadd.f32 0.0, %v585
  %v587 = vpop.f32.mrf.mxu0
  %v588 = vadd.f32 0.0, %v587
  %589 = vmatmul.bf16.gmra.mxu0 %v377
  %v590 = vpop.f32.mrf.mxu0
  %v591 = vadd.f32 0.0, %v590
  %v592 = vpop.f32.mrf.mxu0
  %v593 = vadd.f32 0.0, %v592
  %594 = vmatmul.bf16.gmra.mxu0 %v378
  %v595 = vpop.f32.mrf.mxu0
  %v596 = vadd.f32 0.0, %v595
  %v597 = vpop.f32.mrf.mxu0
  %v598 = vadd.f32 0.0, %v597
  %599 = vmatmul.bf16.gmra.mxu0 %v379
  %v600 = vpop.f32.mrf.mxu0
  %v601 = vadd.f32 0.0, %v600
  %v602 = vpop.f32.mrf.mxu0
  %v603 = vadd.f32 0.0, %v602
  %604 = vmatmul.bf16.gmra.mxu0 %v380
  %v605 = vpop.f32.mrf.mxu0
  %v606 = vadd.f32 0.0, %v605
  %v607 = vpop.f32.mrf.mxu0
  %v608 = vadd.f32 0.0, %v607
  %609 = vmatmul.bf16.gmra.mxu0 %v381
  %v610 = vpop.f32.mrf.mxu0
  %v611 = vadd.f32 0.0, %v610
  %v612 = vpop.f32.mrf.mxu0
  %v613 = vadd.f32 0.0, %v612
  %614 = vmatmul.bf16.gmra.mxu0 %v382
  %v615 = vpop.f32.mrf.mxu0
  %v616 = vadd.f32 0.0, %v615
  %v617 = vpop.f32.mrf.mxu0
  %v618 = vadd.f32 0.0, %v617
  %619 = vmatmul.bf16.gmra.mxu0 %v383
  %v620 = vpop.f32.mrf.mxu0
  %v621 = vadd.f32 0.0, %v620
  %v622 = vpop.f32.mrf.mxu0
  %v623 = vadd.f32 0.0, %v622
  %624 = vmatmul.bf16.gmra.mxu0 %v384
  %v625 = vpop.f32.mrf.mxu0
  %v626 = vadd.f32 0.0, %v625
  %v627 = vpop.f32.mrf.mxu0
  %v628 = vadd.f32 0.0, %v627
  %629 = vmatmul.bf16.gmra.mxu0 %v385
  %v630 = vpop.f32.mrf.mxu0
  %v631 = vadd.f32 0.0, %v630
  %v632 = vpop.f32.mrf.mxu0
  %v633 = vadd.f32 0.0, %v632
  %634 = vdwg.mxu0
  %v635 = vadd.f32 %v82, %v476
  %v636 = vadd.f32 %v83, %v478
  %v637 = vadd.f32 %v84, %v481
  %v638 = vadd.f32 %v85, %v483
  %v639 = vadd.f32 %v86, %v486
  %v640 = vadd.f32 %v87, %v488
  %v641 = vadd.f32 %v88, %v491
  %v642 = vadd.f32 %v89, %v493
  %v643 = vadd.f32 %v90, %v496
  %v644 = vadd.f32 %v91, %v498
  %v645 = vadd.f32 %v92, %v501
  %v646 = vadd.f32 %v93, %v503
  %v647 = vadd.f32 %v94, %v506
  %v648 = vadd.f32 %v95, %v508
  %v649 = vadd.f32 %v96, %v511
  %v650 = vadd.f32 %v97, %v513
  %v651 = vadd.f32 %v98, %v516
  %v652 = vadd.f32 %v99, %v518
  %v653 = vadd.f32 %v100, %v521
  %v654 = vadd.f32 %v101, %v523
  %v655 = vadd.f32 %v102, %v526
  %v656 = vadd.f32 %v103, %v528
  %v657 = vadd.f32 %v104, %v531
  %v658 = vadd.f32 %v105, %v533
  %v659 = vadd.f32 %v106, %v536
  %v660 = vadd.f32 %v107, %v538
  %v661 = vadd.f32 %v108, %v541
  %v662 = vadd.f32 %v109, %v543
  %v663 = vadd.f32 %v110, %v546
  %v664 = vadd.f32 %v111, %v548
  %v665 = vadd.f32 %v112, %v551
  %v666 = vadd.f32 %v113, %v553
  %v667 = vadd.f32 %v114, %v556
  %v668 = vadd.f32 %v115, %v558
  %v669 = vadd.f32 %v116, %v561
  %v670 = vadd.f32 %v117, %v563
  %v671 = vadd.f32 %v118, %v566
  %v672 = vadd.f32 %v119, %v568
  %v673 = vadd.f32 %v120, %v571
  %v674 = vadd.f32 %v121, %v573
  %v675 = vadd.f32 %v122, %v576
  %v676 = vadd.f32 %v123, %v578
  %v677 = vadd.f32 %v124, %v581
  %v678 = vadd.f32 %v125, %v583
  %v679 = vadd.f32 %v126, %v586
  %v680 = vadd.f32 %v127, %v588
  %v681 = vadd.f32 %v128, %v591
  %v682 = vadd.f32 %v129, %v593
  %v683 = vadd.f32 %v130, %v596
  %v684 = vadd.f32 %v131, %v598
  %v685 = vadd.f32 %v132, %v601
  %v686 = vadd.f32 %v133, %v603
  %v687 = vadd.f32 %v134, %v606
  %v688 = vadd.f32 %v135, %v608
  %v689 = vadd.f32 %v136, %v611
  %v690 = vadd.f32 %v137, %v613
  %v691 = vadd.f32 %v138, %v616
  %v692 = vadd.f32 %v139, %v618
  %v693 = vadd.f32 %v140, %v621
  %v694 = vadd.f32 %v141, %v623
  %v695 = vadd.f32 %v142, %v626
  %v696 = vadd.f32 %v143, %v628
  %v697 = vadd.f32 %v144, %v631
  %v698 = vadd.f32 %v145, %v633
  %699 = vst [vmem:[#allocation2] sm:$0xff] %v635
  %700 = vst [vmem:[#allocation2 + $0x8] sm:$0xff] %v636
  %701 = vst [vmem:[#allocation2 + $0x10] sm:$0xff] %v637
  %702 = vst [vmem:[#allocation2 + $0x18] sm:$0xff] %v638
  %703 = vst [vmem:[#allocation2 + $0x20] sm:$0xff] %v639
  %704 = vst [vmem:[#allocation2 + $0x28] sm:$0xff] %v640
  %705 = vst [vmem:[#allocation2 + $0x30] sm:$0xff] %v641
  %706 = vst [vmem:[#allocation2 + $0x38] sm:$0xff] %v642
  %707 = vst [vmem:[#allocation2 + $0x40] sm:$0xff] %v643
  %708 = vst [vmem:[#allocation2 + $0x48] sm:$0xff] %v644
  %709 = vst [vmem:[#allocation2 + $0x50] sm:$0xff] %v645
  %710 = vst [vmem:[#allocation2 + $0x58] sm:$0xff] %v646
  %711 = vst [vmem:[#allocation2 + $0x60] sm:$0xff] %v647
  %712 = vst [vmem:[#allocation2 + $0x68] sm:$0xff] %v648
  %713 = vst [vmem:[#allocation2 + $0x70] sm:$0xff] %v649
  %714 = vst [vmem:[#allocation2 + $0x78] sm:$0xff] %v650
  %715 = vst [vmem:[#allocation2 + $0x80] sm:$0xff] %v651
  %716 = vst [vmem:[#allocation2 + $0x88] sm:$0xff] %v652
  %717 = vst [vmem:[#allocation2 + $0x90] sm:$0xff] %v653
  %718 = vst [vmem:[#allocation2 + $0x98] sm:$0xff] %v654
  %719 = vst [vmem:[#allocation2 + $0xa0] sm:$0xff] %v655
  %720 = vst [vmem:[#allocation2 + $0xa8] sm:$0xff] %v656
  %721 = vst [vmem:[#allocation2 + $0xb0] sm:$0xff] %v657
  %722 = vst [vmem:[#allocation2 + $0xb8] sm:$0xff] %v658
  %723 = vst [vmem:[#allocation2 + $0xc0] sm:$0xff] %v659
  %724 = vst [vmem:[#allocation2 + $0xc8] sm:$0xff] %v660
  %725 = vst [vmem:[#allocation2 + $0xd0] sm:$0xff] %v661
  %726 = vst [vmem:[#allocation2 + $0xd8] sm:$0xff] %v662
  %727 = vst [vmem:[#allocation2 + $0xe0] sm:$0xff] %v663
  %728 = vst [vmem:[#allocation2 + $0xe8] sm:$0xff] %v664
  %729 = vst [vmem:[#allocation2 + $0xf0] sm:$0xff] %v665
  %730 = vst [vmem:[#allocation2 + $0xf8] sm:$0xff] %v666
  %731 = vst [vmem:[#allocation2 + $0x100] sm:$0xff] %v667
  %732 = vst [vmem:[#allocation2 + $0x108] sm:$0xff] %v668
  %733 = vst [vmem:[#allocation2 + $0x110] sm:$0xff] %v669
  %734 = vst [vmem:[#allocation2 + $0x118] sm:$0xff] %v670
  %735 = vst [vmem:[#allocation2 + $0x120] sm:$0xff] %v671
  %736 = vst [vmem:[#allocation2 + $0x128] sm:$0xff] %v672
  %737 = vst [vmem:[#allocation2 + $0x130] sm:$0xff] %v673
  %738 = vst [vmem:[#allocation2 + $0x138] sm:$0xff] %v674
  %739 = vst [vmem:[#allocation2 + $0x140] sm:$0xff] %v675
  %740 = vst [vmem:[#allocation2 + $0x148] sm:$0xff] %v676
  %741 = vst [vmem:[#allocation2 + $0x150] sm:$0xff] %v677
  %742 = vst [vmem:[#allocation2 + $0x158] sm:$0xff] %v678
  %743 = vst [vmem:[#allocation2 + $0x160] sm:$0xff] %v679
  %744 = vst [vmem:[#allocation2 + $0x168] sm:$0xff] %v680
  %745 = vst [vmem:[#allocation2 + $0x170] sm:$0xff] %v681
  %746 = vst [vmem:[#allocation2 + $0x178] sm:$0xff] %v682
  %747 = vst [vmem:[#allocation2 + $0x180] sm:$0xff] %v683
  %748 = vst [vmem:[#allocation2 + $0x188] sm:$0xff] %v684
  %749 = vst [vmem:[#allocation2 + $0x190] sm:$0xff] %v685
  %750 = vst [vmem:[#allocation2 + $0x198] sm:$0xff] %v686
  %751 = vst [vmem:[#allocation2 + $0x1a0] sm:$0xff] %v687
  %752 = vst [vmem:[#allocation2 + $0x1a8] sm:$0xff] %v688
  %753 = vst [vmem:[#allocation2 + $0x1b0] sm:$0xff] %v689
  %754 = vst [vmem:[#allocation2 + $0x1b8] sm:$0xff] %v690
  %755 = vst [vmem:[#allocation2 + $0x1c0] sm:$0xff] %v691
  %756 = vst [vmem:[#allocation2 + $0x1c8] sm:$0xff] %v692
  %757 = vst [vmem:[#allocation2 + $0x1d0] sm:$0xff] %v693
  %758 = vst [vmem:[#allocation2 + $0x1d8] sm:$0xff] %v694
  %759 = vst [vmem:[#allocation2 + $0x1e0] sm:$0xff] %v695
  %760 = vst [vmem:[#allocation2 + $0x1e8] sm:$0xff] %v696
  %761 = vst [vmem:[#allocation2 + $0x1f0] sm:$0xff] %v697
  %762 = vst [vmem:[#allocation2 + $0x1f8] sm:$0xff] %v698
  // Predicated region
  $region18: #{fcn_mt_forward.25} parent=0 // pred_check
    %p763 = pneg %p14
  $region19: #{fcn_mt_forward.25} parent=0 // pred_check_branch
    %765 = sbr.rel (%p763) target = $region21
  $region20: #{fcn_mt_forward.25} parent=0 // pred_region
    %v766 = vld [vmem:[#allocation2] sm:$0xff]
    %v767 = vld [vmem:[#allocation2 + $0x8] sm:$0xff]
    %v768 = vld [vmem:[#allocation2 + $0x10] sm:$0xff]
    %v769 = vld [vmem:[#allocation2 + $0x18] sm:$0xff]
    %v770 = vld [vmem:[#allocation2 + $0x20] sm:$0xff]
    %v771 = vld [vmem:[#allocation2 + $0x28] sm:$0xff]
    %v772 = vld [vmem:[#allocation2 + $0x30] sm:$0xff]
    %v773 = vld [vmem:[#allocation2 + $0x38] sm:$0xff]
    %v774 = vld [vmem:[#allocation2 + $0x40] sm:$0xff]
    %v775 = vld [vmem:[#allocation2 + $0x48] sm:$0xff]
    %v776 = vld [vmem:[#allocation2 + $0x50] sm:$0xff]
    %v777 = vld [vmem:[#allocation2 + $0x58] sm:$0xff]
    %v778 = vld [vmem:[#allocation2 + $0x60] sm:$0xff]
    %v779 = vld [vmem:[#allocation2 + $0x68] sm:$0xff]
    %v780 = vld [vmem:[#allocation2 + $0x70] sm:$0xff]
    %v781 = vld [vmem:[#allocation2 + $0x78] sm:$0xff]
    %v782 = vld [vmem:[#allocation2 + $0x80] sm:$0xff]
    %v783 = vld [vmem:[#allocation2 + $0x88] sm:$0xff]
    %v784 = vld [vmem:[#allocation2 + $0x90] sm:$0xff]
    %v785 = vld [vmem:[#allocation2 + $0x98] sm:$0xff]
    %v786 = vld [vmem:[#allocation2 + $0xa0] sm:$0xff]
    %v787 = vld [vmem:[#allocation2 + $0xa8] sm:$0xff]
    %v788 = vld [vmem:[#allocation2 + $0xb0] sm:$0xff]
    %v789 = vld [vmem:[#allocation2 + $0xb8] sm:$0xff]
    %v790 = vld [vmem:[#allocation2 + $0xc0] sm:$0xff]
    %v791 = vld [vmem:[#allocation2 + $0xc8] sm:$0xff]
    %v792 = vld [vmem:[#allocation2 + $0xd0] sm:$0xff]
    %v793 = vld [vmem:[#allocation2 + $0xd8] sm:$0xff]
    %v794 = vld [vmem:[#allocation2 + $0xe0] sm:$0xff]
    %v795 = vld [vmem:[#allocation2 + $0xe8] sm:$0xff]
    %v796 = vld [vmem:[#allocation2 + $0xf0] sm:$0xff]
    %v797 = vld [vmem:[#allocation2 + $0xf8] sm:$0xff]
    %v798 = vld [vmem:[#allocation2 + $0x100] sm:$0xff]
    %v799 = vld [vmem:[#allocation2 + $0x108] sm:$0xff]
    %v800 = vld [vmem:[#allocation2 + $0x110] sm:$0xff]
    %v801 = vld [vmem:[#allocation2 + $0x118] sm:$0xff]
    %v802 = vld [vmem:[#allocation2 + $0x120] sm:$0xff]
    %v803 = vld [vmem:[#allocation2 + $0x128] sm:$0xff]
    %v804 = vld [vmem:[#allocation2 + $0x130] sm:$0xff]
    %v805 = vld [vmem:[#allocation2 + $0x138] sm:$0xff]
    %v806 = vld [vmem:[#allocation2 + $0x140] sm:$0xff]
    %v807 = vld [vmem:[#allocation2 + $0x148] sm:$0xff]
    %v808 = vld [vmem:[#allocation2 + $0x150] sm:$0xff]
    %v809 = vld [vmem:[#allocation2 + $0x158] sm:$0xff]
    %v810 = vld [vmem:[#allocation2 + $0x160] sm:$0xff]
    %v811 = vld [vmem:[#allocation2 + $0x168] sm:$0xff]
    %v812 = vld [vmem:[#allocation2 + $0x170] sm:$0xff]
    %v813 = vld [vmem:[#allocation2 + $0x178] sm:$0xff]
    %v814 = vld [vmem:[#allocation2 + $0x180] sm:$0xff]
    %v815 = vld [vmem:[#allocation2 + $0x188] sm:$0xff]
    %v816 = vld [vmem:[#allocation2 + $0x190] sm:$0xff]
    %v817 = vld [vmem:[#allocation2 + $0x198] sm:$0xff]
    %v818 = vld [vmem:[#allocation2 + $0x1a0] sm:$0xff]
    %v819 = vld [vmem:[#allocation2 + $0x1a8] sm:$0xff]
    %v820 = vld [vmem:[#allocation2 + $0x1b0] sm:$0xff]
    %v821 = vld [vmem:[#allocation2 + $0x1b8] sm:$0xff]
    %v822 = vld [vmem:[#allocation2 + $0x1c0] sm:$0xff]
    %v823 = vld [vmem:[#allocation2 + $0x1c8] sm:$0xff]
    %v824 = vld [vmem:[#allocation2 + $0x1d0] sm:$0xff]
    %v825 = vld [vmem:[#allocation2 + $0x1d8] sm:$0xff]
    %v826 = vld [vmem:[#allocation2 + $0x1e0] sm:$0xff]
    %v827 = vld [vmem:[#allocation2 + $0x1e8] sm:$0xff]
    %v828 = vld [vmem:[#allocation2 + $0x1f0] sm:$0xff]
    %v829 = vld [vmem:[#allocation2 + $0x1f8] sm:$0xff]
    %v830 = vld [vmem:[%s2] sm:$0x1]
    %v832 = vperm.slane %v830, 0
    %v834 = vadd.f32 %v766, %v832
    %v835 = vadd.f32 %v767, %v832
    %v836 = vadd.f32 %v768, %v832
    %v837 = vadd.f32 %v769, %v832
    %v838 = vadd.f32 %v770, %v832
    %v839 = vadd.f32 %v771, %v832
    %v840 = vadd.f32 %v772, %v832
    %v841 = vadd.f32 %v773, %v832
    %v842 = vadd.f32 %v774, %v832
    %v843 = vadd.f32 %v775, %v832
    %v844 = vadd.f32 %v776, %v832
    %v845 = vadd.f32 %v777, %v832
    %v846 = vadd.f32 %v778, %v832
    %v847 = vadd.f32 %v779, %v832
    %v848 = vadd.f32 %v780, %v832
    %v849 = vadd.f32 %v781, %v832
    %v850 = vadd.f32 %v782, %v832
    %v851 = vadd.f32 %v783, %v832
    %v852 = vadd.f32 %v784, %v832
    %v853 = vadd.f32 %v785, %v832
    %v854 = vadd.f32 %v786, %v832
    %v855 = vadd.f32 %v787, %v832
    %v856 = vadd.f32 %v788, %v832
    %v857 = vadd.f32 %v789, %v832
    %v858 = vadd.f32 %v790, %v832
    %v859 = vadd.f32 %v791, %v832
    %v860 = vadd.f32 %v792, %v832
    %v861 = vadd.f32 %v793, %v832
    %v862 = vadd.f32 %v794, %v832
    %v863 = vadd.f32 %v795, %v832
    %v864 = vadd.f32 %v796, %v832
    %v865 = vadd.f32 %v797, %v832
    %v866 = vadd.f32 %v798, %v832
    %v867 = vadd.f32 %v799, %v832
    %v868 = vadd.f32 %v800, %v832
    %v869 = vadd.f32 %v801, %v832
    %v870 = vadd.f32 %v802, %v832
    %v871 = vadd.f32 %v803, %v832
    %v872 = vadd.f32 %v804, %v832
    %v873 = vadd.f32 %v805, %v832
    %v874 = vadd.f32 %v806, %v832
    %v875 = vadd.f32 %v807, %v832
    %v876 = vadd.f32 %v808, %v832
    %v877 = vadd.f32 %v809, %v832
    %v878 = vadd.f32 %v810, %v832
    %v879 = vadd.f32 %v811, %v832
    %v880 = vadd.f32 %v812, %v832
    %v881 = vadd.f32 %v813, %v832
    %v882 = vadd.f32 %v814, %v832
    %v883 = vadd.f32 %v815, %v832
    %v884 = vadd.f32 %v816, %v832
    %v885 = vadd.f32 %v817, %v832
    %v886 = vadd.f32 %v818, %v832
    %v887 = vadd.f32 %v819, %v832
    %v888 = vadd.f32 %v820, %v832
    %v889 = vadd.f32 %v821, %v832
    %v890 = vadd.f32 %v822, %v832
    %v891 = vadd.f32 %v823, %v832
    %v892 = vadd.f32 %v824, %v832
    %v893 = vadd.f32 %v825, %v832
    %v894 = vadd.f32 %v826, %v832
    %v895 = vadd.f32 %v827, %v832
    %v896 = vadd.f32 %v828, %v832
    %v897 = vadd.f32 %v829, %v832
    %898 = vst [vmem:[%s3] sm:$0xff] %v834
    %899 = vst [vmem:[%s3 + $0x8] sm:$0xff] %v835
    %900 = vst [vmem:[%s3 + $0x10] sm:$0xff] %v836
    %901 = vst [vmem:[%s3 + $0x18] sm:$0xff] %v837
    %902 = vst [vmem:[%s3 + $0x20] sm:$0xff] %v838
    %903 = vst [vmem:[%s3 + $0x28] sm:$0xff] %v839
    %904 = vst [vmem:[%s3 + $0x30] sm:$0xff] %v840
    %905 = vst [vmem:[%s3 + $0x38] sm:$0xff] %v841
    %906 = vst [vmem:[%s3 + $0x40] sm:$0xff] %v842
    %907 = vst [vmem:[%s3 + $0x48] sm:$0xff] %v843
    %908 = vst [vmem:[%s3 + $0x50] sm:$0xff] %v844
    %909 = vst [vmem:[%s3 + $0x58] sm:$0xff] %v845
    %910 = vst [vmem:[%s3 + $0x60] sm:$0xff] %v846
    %911 = vst [vmem:[%s3 + $0x68] sm:$0xff] %v847
    %912 = vst [vmem:[%s3 + $0x70] sm:$0xff] %v848
    %913 = vst [vmem:[%s3 + $0x78] sm:$0xff] %v849
    %914 = vst [vmem:[%s3 + $0x80] sm:$0xff] %v850
    %915 = vst [vmem:[%s3 + $0x88] sm:$0xff] %v851
    %916 = vst [vmem:[%s3 + $0x90] sm:$0xff] %v852
    %917 = vst [vmem:[%s3 + $0x98] sm:$0xff] %v853
    %918 = vst [vmem:[%s3 + $0xa0] sm:$0xff] %v854
    %919 = vst [vmem:[%s3 + $0xa8] sm:$0xff] %v855
    %920 = vst [vmem:[%s3 + $0xb0] sm:$0xff] %v856
    %921 = vst [vmem:[%s3 + $0xb8] sm:$0xff] %v857
    %922 = vst [vmem:[%s3 + $0xc0] sm:$0xff] %v858
    %923 = vst [vmem:[%s3 + $0xc8] sm:$0xff] %v859
    %924 = vst [vmem:[%s3 + $0xd0] sm:$0xff] %v860
    %925 = vst [vmem:[%s3 + $0xd8] sm:$0xff] %v861
    %926 = vst [vmem:[%s3 + $0xe0] sm:$0xff] %v862
    %927 = vst [vmem:[%s3 + $0xe8] sm:$0xff] %v863
    %928 = vst [vmem:[%s3 + $0xf0] sm:$0xff] %v864
    %929 = vst [vmem:[%s3 + $0xf8] sm:$0xff] %v865
    %930 = vst [vmem:[%s3 + $0x100] sm:$0xff] %v866
    %931 = vst [vmem:[%s3 + $0x108] sm:$0xff] %v867
    %932 = vst [vmem:[%s3 + $0x110] sm:$0xff] %v868
    %933 = vst [vmem:[%s3 + $0x118] sm:$0xff] %v869
    %934 = vst [vmem:[%s3 + $0x120] sm:$0xff] %v870
    %935 = vst [vmem:[%s3 + $0x128] sm:$0xff] %v871
    %936 = vst [vmem:[%s3 + $0x130] sm:$0xff] %v872
    %937 = vst [vmem:[%s3 + $0x138] sm:$0xff] %v873
    %938 = vst [vmem:[%s3 + $0x140] sm:$0xff] %v874
    %939 = vst [vmem:[%s3 + $0x148] sm:$0xff] %v875
    %940 = vst [vmem:[%s3 + $0x150] sm:$0xff] %v876
    %941 = vst [vmem:[%s3 + $0x158] sm:$0xff] %v877
    %942 = vst [vmem:[%s3 + $0x160] sm:$0xff] %v878
    %943 = vst [vmem:[%s3 + $0x168] sm:$0xff] %v879
    %944 = vst [vmem:[%s3 + $0x170] sm:$0xff] %v880
    %945 = vst [vmem:[%s3 + $0x178] sm:$0xff] %v881
    %946 = vst [vmem:[%s3 + $0x180] sm:$0xff] %v882
    %947 = vst [vmem:[%s3 + $0x188] sm:$0xff] %v883
    %948 = vst [vmem:[%s3 + $0x190] sm:$0xff] %v884
    %949 = vst [vmem:[%s3 + $0x198] sm:$0xff] %v885
    %950 = vst [vmem:[%s3 + $0x1a0] sm:$0xff] %v886
    %951 = vst [vmem:[%s3 + $0x1a8] sm:$0xff] %v887
    %952 = vst [vmem:[%s3 + $0x1b0] sm:$0xff] %v888
    %953 = vst [vmem:[%s3 + $0x1b8] sm:$0xff] %v889
    %954 = vst [vmem:[%s3 + $0x1c0] sm:$0xff] %v890
    %955 = vst [vmem:[%s3 + $0x1c8] sm:$0xff] %v891
    %956 = vst [vmem:[%s3 + $0x1d0] sm:$0xff] %v892
    %957 = vst [vmem:[%s3 + $0x1d8] sm:$0xff] %v893
    %958 = vst [vmem:[%s3 + $0x1e0] sm:$0xff] %v894
    %959 = vst [vmem:[%s3 + $0x1e8] sm:$0xff] %v895
    %960 = vst [vmem:[%s3 + $0x1f0] sm:$0xff] %v896
    %961 = vst [vmem:[%s3 + $0x1f8] sm:$0xff] %v897
  $region21: #{fcn_mt_forward.25} parent=0 // pred_fallthru
    _
  // Predicated region
  $region22: #{fcn_mt_forward.25} parent=0 // pred_check
    _
  $region23: #{fcn_mt_forward.25} parent=0 // pred_check_branch
    %963 = sbr.rel (0) target = $region25
  $region24: #{fcn_mt_forward.25} parent=0 // pred_region
    _
  $region25: #{fcn_mt_forward.25} parent=0 // pred_fallthru
    _
  // Predicated region
  $region26: #{fcn_mt_forward.25} parent=0 // pred_check
    _
  $region27: #{fcn_mt_forward.25} parent=0 // pred_check_branch
    %965 = sbr.rel (0) target = $region29
  $region28: #{fcn_mt_forward.25} parent=0 // pred_region
    _
  $region29: #{fcn_mt_forward.25} parent=0 // pred_fallthru
    _

</llo_original>
